<compile_context>
chip_gen: v6e
topology: v6e:2x2x1
jax: 0.10.0
libtpu: 0.0.40
codegen_flags: <defaults>
</compile_context>

<pallas_src>
import math

import jax
import jax.numpy as jnp
from jax import lax
from jax.experimental import pallas as pl
from jax.experimental.pallas import tpu as pltpu

_LANES = 128
# (kernel_size, out_channels, padding) of conv1..conv4 in the PyTorch module.
_CONV_SPECS = ((3, 8, 1), (5, 8, 2), (8, 8, 4), (10, 16, 5))
_POOL_BINS = 6            # AdaptiveAvgPool3d((1, 6, 49)): channel mean + 6 H bins
_FC1_IN = 294
_FC1_OUT = 200
_FC2_OUT = 2
_CIN0_PAD = 8             # pad the 1-channel input slab to a full 8-sublane tile


# ----------------------------------------------------------------------------
# Static geometry of the lane-packed activation slabs (uniform per-image stride).
# ----------------------------------------------------------------------------
def _conv_geometry(B, H, W):
    """Slab i (i = 0..4) holds the zero-padded input of conv i+1 (slab 4 is the
    conv4 output).  Image b's padded region starts at lane b*stride + s[i]; the
    offsets s[i] are chosen so conv outputs land on their destination lanes
    with no per-row lane shift (single full-width masked store per row)."""
    assert _LANES % B == 0, "batch must divide 128 for uniform lane packing"
    stride = _LANES // B
    ks = [c[0] for c in _CONV_SPECS]
    couts = [c[1] for c in _CONV_SPECS]
    pads = [c[2] for c in _CONV_SPECS]
    n = len(_CONV_SPECS)

    pad_of_slab = list(pads) + [0]              # border padding stored in slab i
    s = [0] * (n + 1)
    for i in range(n - 1, -1, -1):
        s[i] = s[i + 1] + pad_of_slab[i + 1]

    chans = [_CIN0_PAD] + couts                 # channel count of each slab
    hd, wd = H, W
    slab_shapes = []
    layers = []
    for i in range(n + 1):
        hp = hd + 2 * pad_of_slab[i]
        wp = wd + 2 * pad_of_slab[i]
        assert s[i] + wp <= stride, "lane packing overflows the per-image stride"
        slab_shapes.append((hp, chans[i], _LANES))
        if i < n:
            k = ks[i]
            ho, wo = hp - k + 1, wp - k + 1
            layers.append(dict(k=k, Cin=chans[i], Cout=couts[i], Ho=ho, Wo=wo,
                               s_in=s[i], out_row_off=pad_of_slab[i + 1],
                               in_pad=pad_of_slab[i]))
            hd, wd = ho, wo
    return stride, slab_shapes, layers


# ----------------------------------------------------------------------------
# Fused kernel: 4 convs + adaptive avg pool + fc1/ReLU/fc2 for one branch.
# ----------------------------------------------------------------------------
def _make_fused_kernel(B, H, W, stride, layers):
    def kernel(x_ref,
               wk1, bc1, wk2, bc2, wk3, bc3, wk4, bc4,
               w1r_ref, b1_ref, w2_ref, b2_ref,
               o_ref,
               a0, a1, a2, a3, a4):
        f32 = jnp.float32
        acts = (a0, a1, a2, a3, a4)
        wks = (wk1, wk2, wk3, wk4)
        bcs = (bc1, bc2, bc3, bc4)

        # ---- zero only what must be zero -----------------------------------
        # slab 0 fully (input zero padding + unused channels + dead lanes);
        # slabs 1..3: only the vertical padding border rows (interior rows are
        # fully overwritten below by masked full-width stores).
        a0[...] = jnp.zeros(a0.shape, f32)
        for li, cfg in enumerate(layers):
            op = cfg['out_row_off']
            if op > 0:
                a_out = acts[li + 1]
                rows = a_out.shape[0]
                zrow = jnp.zeros((op,) + a_out.shape[1:], f32)
                a_out[0:op, :, :] = zrow
                a_out[rows - op:rows, :, :] = zrow

        # ---- place the (B, H, W) input into slab 0 --------------------------
        p0 = layers[0]['in_pad']
        s0 = layers[0]['s_in']
        for b in range(B):
            col = b * stride + s0 + p0
            a0[p0:p0 + H, 0, col:col + W] = x_ref[0, b, :, :].astype(f32)

        # ---- conv layer: per output row, KW small matmuls (K = KH*Cin) ------
        # out[:, l] = sum_kw shift_kw( W_kw @ a_in[ho:ho+KH, :, :] )[:, l]
        # The horizontal tap shift is applied to the Cout-wide MXU *output*
        # (cheap) instead of the KH*Cin-wide input patch (expensive).
        def conv_layer(cfg, a_in, a_out, wk_ref, b_ref):
            k, Cin, Cout = cfg['k'], cfg['Cin'], cfg['Cout']
            Ho, Wo = cfg['Ho'], cfg['Wo']
            s_in, op = cfg['s_in'], cfg['out_row_off']
            Kc = k * Cin

            # per-layer constants, hoisted out of the row loop
            lane = lax.broadcasted_iota(jnp.int32, (Cout, _LANES), 1)
            col = lane % stride
            maskC = ((col >= s_in) & (col < s_in + Wo)).astype(f32)
            biasC = jnp.broadcast_to(b_ref[...], (Cout, _LANES)) * maskC

            def row_body(ho, carry):
                blk = a_in[pl.ds(ho, k), :, :].reshape(Kc, _LANES)
                acc = None
                for kw in range(k):
                    part = jnp.dot(wk_ref[kw, :, :], blk,
                                   preferred_element_type=f32)
                    if kw:
                        # shift left by kw; wrapped tail lanes are never used
                        part = jnp.concatenate([part[:, kw:], part[:, :kw]],
                                               axis=1)
                    acc = part if acc is None else acc + part
                a_out[op + ho, :, :] = acc * maskC + biasC
                return carry

            lax.fori_loop(0, Ho, row_body, 0)

        for li, cfg in enumerate(layers):
            conv_layer(cfg, acts[li], acts[li + 1], wks[li], bcs[li])

        # ---- AdaptiveAvgPool3d((1, 6, W4)) + fc1 / ReLU / fc2 ---------------
        # (channel mean -> 1, H -> 6 exact bins, W identity for this geometry)
        H4, C4 = a4.shape[0], a4.shape[1]
        W4 = layers[-1]['Wo']
        bin_h = H4 // _POOL_BINS
        inv = 1.0 / float(C4 * bin_h)

        h1 = jnp.broadcast_to(b1_ref[...], (B, _FC1_OUT))        # (B, 200)
        for hb in range(_POOL_BINS):
            blk = a4[hb * bin_h:(hb + 1) * bin_h, :, :]          # (bin_h, C4, 128)
            srow = (jnp.sum(blk, axis=(0, 1), keepdims=True) * inv
                    ).reshape(1, _LANES)
            q = jnp.concatenate(
                [srow[:, b * stride:b * stride + W4] for b in range(B)],
                axis=0)                                          # (B, W4)
            h1 = h1 + jnp.dot(q, w1r_ref[hb, :, :],
                              preferred_element_type=f32)
        h1 = jnp.maximum(h1, 0.0)
        logits = jnp.dot(h1, w2_ref[...],
                         preferred_element_type=f32) + b2_ref[...]   # (B, 2)
        o_ref[0, :, :] = logits.astype(o_ref.dtype)

    return kernel


# ----------------------------------------------------------------------------
# Wrapper: one fused pallas_call for both siamese branches.
# ----------------------------------------------------------------------------
def net_forward(x, params):
    """x: (2, B, H, W) -> (x1, x2), each (B, 2). Matches Net.forward."""
    n_branches, B, H, W = x.shape
    assert n_branches == 2
    stride, slab_shapes, layers = _conv_geometry(B, H, W)
    # TODO(synk): general ceil/floor adaptive-pool bins for non-divisible sizes;
    # the module's geometry (18, 49) divides exactly and matches fc1's 294 inputs.
    assert layers[-1]['Ho'] % _POOL_BINS == 0
    assert layers[-1]['Wo'] * _POOL_BINS == _FC1_IN

    kernel = _make_fused_kernel(B, H, W, stride, layers)

    def whole(shape):
        zeros = (0,) * len(shape)
        return pl.BlockSpec(shape, lambda i, _z=zeros: _z)

    weight_args = (params['wk1'], params['bc1'], params['wk2'], params['bc2'],
                   params['wk3'], params['bc3'], params['wk4'], params['bc4'],
                   params['w1r'], params['b1'], params['w2t'], params['b2'])

    in_specs = [pl.BlockSpec((1, B, H, W), lambda i: (i, 0, 0, 0))]
    in_specs += [whole(w.shape) for w in weight_args]

    out = pl.pallas_call(
        kernel,
        out_shape=jax.ShapeDtypeStruct((2, B, _FC2_OUT), jnp.float32),
        grid_spec=pltpu.PrefetchScalarGridSpec(
            num_scalar_prefetch=0,
            grid=(2,),                                   # siamese branch axis
            in_specs=in_specs,
            out_specs=pl.BlockSpec((1, B, _FC2_OUT), lambda i: (i, 0, 0)),
            scratch_shapes=[pltpu.VMEM(s, jnp.float32) for s in slab_shapes],
        ),
        compiler_params=pltpu.CompilerParams(
            dimension_semantics=("parallel",)),
    )(x.astype(jnp.float32), *weight_args)
    return out[0], out[1]


# ----------------------------------------------------------------------------
# One-time parameter layout conversion (hoisted out of the hot path).
# ----------------------------------------------------------------------------
def prepare_params(raw):
    p = {}
    for i, (k, cout, _) in enumerate(_CONV_SPECS, start=1):
        w = jnp.asarray(raw[f'conv{i}_w'], jnp.float32)      # (O, I, KH, KW)
        o, ci, kh, kw = w.shape
        wt = jnp.transpose(w, (3, 0, 2, 1))                  # (KW, O, KH, I)
        cin_pad = _CIN0_PAD if i == 1 else ci
        if cin_pad != ci:
            wt = jnp.pad(wt, ((0, 0), (0, 0), (0, 0), (0, cin_pad - ci)))
        p[f'wk{i}'] = wt.reshape(kw, o, kh * cin_pad)         # (KW, Cout, KH*Cin)
        p[f'bc{i}'] = jnp.asarray(raw[f'conv{i}_b'], jnp.float32).reshape(o, 1)
    fc1_w = jnp.asarray(raw['fc1_w'], jnp.float32)            # (200, 294)
    p['w1r'] = fc1_w.T.reshape(_POOL_BINS, _FC1_IN // _POOL_BINS, _FC1_OUT)
    p['b1'] = jnp.asarray(raw['fc1_b'], jnp.float32).reshape(1, _FC1_OUT)
    p['w2t'] = jnp.asarray(raw['fc2_w'], jnp.float32).T       # (200, 2)
    p['b2'] = jnp.asarray(raw['fc2_b'], jnp.float32).reshape(1, _FC2_OUT)
    return p


# ----------------------------------------------------------------------------
# Deterministic parameter init (PyTorch-default-style uniform bounds).
# ----------------------------------------------------------------------------
def _uniform(key, shape, fan_in):
    bound = 1.0 / math.sqrt(fan_in)
    return jax.random.uniform(key, shape, jnp.float32, -bound, bound)


def init_params(key):
    ks = jax.random.split(key, 12)
    p = {}
    p['conv1_w'] = _uniform(ks[0], (8, 1, 3, 3), 1 * 3 * 3)
    p['conv1_b'] = _uniform(ks[1], (8,), 1 * 3 * 3)
    p['conv2_w'] = _uniform(ks[2], (8, 8, 5, 5), 8 * 5 * 5)
    p['conv2_b'] = _uniform(ks[3], (8,), 8 * 5 * 5)
    p['conv3_w'] = _uniform(ks[4], (8, 8, 8, 8), 8 * 8 * 8)
    p['conv3_b'] = _uniform(ks[5], (8,), 8 * 8 * 8)
    p['conv4_w'] = _uniform(ks[6], (16, 8, 10, 10), 8 * 10 * 10)
    p['conv4_b'] = _uniform(ks[7], (16,), 8 * 10 * 10)
    p['fc1_w'] = _uniform(ks[8], (200, 294), 294)
    p['fc1_b'] = _uniform(ks[9], (200,), 294)
    p['fc2_w'] = _uniform(ks[10], (2, 200), 200)
    p['fc2_b'] = _uniform(ks[11], (2,), 200)
    return p


# ----------------------------------------------------------------------------
# Pure-XLA reference of Net.forward_once (for validation only).  Uses the same
# default TPU matmul precision as the kernel so they differ only in summation
# order.
# ----------------------------------------------------------------------------
def ref_forward_once(xb, raw):
    x = xb[:, None, :, :].astype(jnp.float32)
    for i, (_, _, pad) in enumerate(_CONV_SPECS, start=1):
        w = raw[f'conv{i}_w']
        b = raw[f'conv{i}_b']
        x = lax.conv_general_dilated(
            x, w, window_strides=(1, 1), padding=[(pad, pad), (pad, pad)],
            dimension_numbers=('NCHW', 'OIHW', 'NCHW')) + b[None, :, None, None]
    n, c, h, w_ = x.shape
    x = jnp.mean(x, axis=1)                                              # C -> 1
    x = jnp.mean(x.reshape(n, _POOL_BINS, h // _POOL_BINS, w_), axis=2)  # H -> 6
    flat = x.reshape(n, _POOL_BINS * w_)
    h1 = jnp.maximum(flat @ raw['fc1_w'].T + raw['fc1_b'], 0.0)
    return h1 @ raw['fc2_w'].T + raw['fc2_b']


if __name__ == "__main__":
    key = jax.random.PRNGKey(0)
    k_x, k_p = jax.random.split(key)

    # Input: (2 siamese branches, batch=2, H=16, W=47). The conv stack maps the
    # spatial size to (18, 49), as required by AdaptiveAvgPool3d((1, 6, 49)).
    x = jax.random.normal(k_x, (2, 2, 16, 47), jnp.float32)
    raw = init_params(k_p)
    params = prepare_params(raw)

    fwd = jax.jit(net_forward)
    x1, x2 = fwd(x, params)
    jax.block_until_ready((x1, x2))

    assert x1.shape == (2, 2) and x2.shape == (2, 2)
    assert bool(jnp.isfinite(x1).all()) and bool(jnp.isfinite(x2).all())

    # Numerical check against the plain-XLA reference of the PyTorch forward.
    # Both use the TPU default (bf16-input) matmul path, so only accumulation
    # order differs; 2e-3 gives comfortable margin while still catching bugs.
    r1 = ref_forward_once(x[0], raw)
    r2 = ref_forward_once(x[1], raw)
    assert bool(jnp.allclose(x1, r1, atol=2e-3, rtol=2e-3)), (x1, r1)
    assert bool(jnp.allclose(x2, r2, atol=2e-3, rtol=2e-3)), (x2, r2)
    print("KERNEL_OK")
</pallas_src>

<mosaic_0001>
module attributes {stable_mosaic.version = 11 : i64} {
  func.func @kernel(%arg0: i32, %arg1: memref<1x2x16x47xf32, #tpu.memory_space<vmem>>, %arg2: memref<3x8x24xf32, #tpu.memory_space<vmem>>, %arg3: memref<8x1xf32, #tpu.memory_space<vmem>>, %arg4: memref<5x8x40xf32, #tpu.memory_space<vmem>>, %arg5: memref<8x1xf32, #tpu.memory_space<vmem>>, %arg6: memref<8x8x64xf32, #tpu.memory_space<vmem>>, %arg7: memref<8x1xf32, #tpu.memory_space<vmem>>, %arg8: memref<10x16x80xf32, #tpu.memory_space<vmem>>, %arg9: memref<16x1xf32, #tpu.memory_space<vmem>>, %arg10: memref<6x49x200xf32, #tpu.memory_space<vmem>>, %arg11: memref<1x200xf32, #tpu.memory_space<vmem>>, %arg12: memref<200x2xf32, #tpu.memory_space<vmem>>, %arg13: memref<1x2xf32, #tpu.memory_space<vmem>>, %arg14: memref<1x2x2xf32, #tpu.memory_space<vmem>>, %arg15: memref<18x8x128xf32, #tpu.memory_space<vmem>>, %arg16: memref<20x8x128xf32, #tpu.memory_space<vmem>>, %arg17: memref<24x8x128xf32, #tpu.memory_space<vmem>>, %arg18: memref<27x8x128xf32, #tpu.memory_space<vmem>>, %arg19: memref<18x16x128xf32, #tpu.memory_space<vmem>>) attributes {dimension_semantics = [#tpu.dimension_semantics<parallel>], iteration_bounds = array<i64: 2>, scalar_prefetch = 0 : i64, scratch_operands = 5 : i64, tpu.core_type = #tpu.core_type<tc>, window_params = [{transform_indices = @transform_0, window_bounds = array<i64: 1, 2, 16, 47>}, {pipeline_mode = #tpu.pipeline_mode<synchronous>, transform_indices = @transform_1, window_bounds = array<i64: 3, 8, 24>}, {pipeline_mode = #tpu.pipeline_mode<synchronous>, transform_indices = @transform_2, window_bounds = array<i64: 8, 1>}, {pipeline_mode = #tpu.pipeline_mode<synchronous>, transform_indices = @transform_3, window_bounds = array<i64: 5, 8, 40>}, {pipeline_mode = #tpu.pipeline_mode<synchronous>, transform_indices = @transform_4, window_bounds = array<i64: 8, 1>}, {pipeline_mode = #tpu.pipeline_mode<synchronous>, transform_indices = @transform_5, window_bounds = array<i64: 8, 8, 64>}, {pipeline_mode = #tpu.pipeline_mode<synchronous>, transform_indices = @transform_6, window_bounds = array<i64: 8, 1>}, {pipeline_mode = #tpu.pipeline_mode<synchronous>, transform_indices = @transform_7, window_bounds = array<i64: 10, 16, 80>}, {pipeline_mode = #tpu.pipeline_mode<synchronous>, transform_indices = @transform_8, window_bounds = array<i64: 16, 1>}, {pipeline_mode = #tpu.pipeline_mode<synchronous>, transform_indices = @transform_9, window_bounds = array<i64: 6, 49, 200>}, {pipeline_mode = #tpu.pipeline_mode<synchronous>, transform_indices = @transform_10, window_bounds = array<i64: 1, 200>}, {pipeline_mode = #tpu.pipeline_mode<synchronous>, transform_indices = @transform_11, window_bounds = array<i64: 200, 2>}, {pipeline_mode = #tpu.pipeline_mode<synchronous>, transform_indices = @transform_12, window_bounds = array<i64: 1, 2>}, {transform_indices = @transform_13, window_bounds = array<i64: 1, 2, 2>}]} {
    %cst = arith.constant 0.000000e+00 : f32
    %0 = vector.broadcast %cst : f32 to vector<18x8x128xf32>
    %c0 = arith.constant 0 : index
    %c0_0 = arith.constant 0 : index
    %c0_1 = arith.constant 0 : index
    %1 = vector.load %arg15[%c0, %c0_0, %c0_1] : memref<18x8x128xf32, #tpu.memory_space<vmem>>, vector<18x8x128xf32>
    tpu.vector_store %arg15[%c0, %c0_0, %c0_1], %0 {strides = array<i32>} : memref<18x8x128xf32, #tpu.memory_space<vmem>>, vector<18x8x128xf32>,
    %cst_2 = arith.constant 0.000000e+00 : f32
    %2 = vector.broadcast %cst_2 : f32 to vector<2x8x128xf32>
    %c0_3 = arith.constant 0 : index
    %c0_4 = arith.constant 0 : index
    %c0_5 = arith.constant 0 : index
    %3 = vector.load %arg16[%c0_3, %c0_4, %c0_5] : memref<20x8x128xf32, #tpu.memory_space<vmem>>, vector<2x8x128xf32>
    tpu.vector_store %arg16[%c0_3, %c0_4, %c0_5], %2 {strides = array<i32>} : memref<20x8x128xf32, #tpu.memory_space<vmem>>, vector<2x8x128xf32>,
    %c18 = arith.constant 18 : index
    %c0_6 = arith.constant 0 : index
    %c0_7 = arith.constant 0 : index
    %4 = vector.load %arg16[%c18, %c0_6, %c0_7] : memref<20x8x128xf32, #tpu.memory_space<vmem>>, vector<2x8x128xf32>
    tpu.vector_store %arg16[%c18, %c0_6, %c0_7], %2 {strides = array<i32>} : memref<20x8x128xf32, #tpu.memory_space<vmem>>, vector<2x8x128xf32>,
    %cst_8 = arith.constant 0.000000e+00 : f32
    %5 = vector.broadcast %cst_8 : f32 to vector<4x8x128xf32>
    %c0_9 = arith.constant 0 : index
    %c0_10 = arith.constant 0 : index
    %c0_11 = arith.constant 0 : index
    %6 = vector.load %arg17[%c0_9, %c0_10, %c0_11] : memref<24x8x128xf32, #tpu.memory_space<vmem>>, vector<4x8x128xf32>
    tpu.vector_store %arg17[%c0_9, %c0_10, %c0_11], %5 {strides = array<i32>} : memref<24x8x128xf32, #tpu.memory_space<vmem>>, vector<4x8x128xf32>,
    %c20 = arith.constant 20 : index
    %c0_12 = arith.constant 0 : index
    %c0_13 = arith.constant 0 : index
    %7 = vector.load %arg17[%c20, %c0_12, %c0_13] : memref<24x8x128xf32, #tpu.memory_space<vmem>>, vector<4x8x128xf32>
    tpu.vector_store %arg17[%c20, %c0_12, %c0_13], %5 {strides = array<i32>} : memref<24x8x128xf32, #tpu.memory_space<vmem>>, vector<4x8x128xf32>,
    %cst_14 = arith.constant 0.000000e+00 : f32
    %8 = vector.broadcast %cst_14 : f32 to vector<5x8x128xf32>
    %c0_15 = arith.constant 0 : index
    %c0_16 = arith.constant 0 : index
    %c0_17 = arith.constant 0 : index
    %9 = vector.load %arg18[%c0_15, %c0_16, %c0_17] : memref<27x8x128xf32, #tpu.memory_space<vmem>>, vector<5x8x128xf32>
    tpu.vector_store %arg18[%c0_15, %c0_16, %c0_17], %8 {strides = array<i32>} : memref<27x8x128xf32, #tpu.memory_space<vmem>>, vector<5x8x128xf32>,
    %c22 = arith.constant 22 : index
    %c0_18 = arith.constant 0 : index
    %c0_19 = arith.constant 0 : index
    %10 = vector.load %arg18[%c22, %c0_18, %c0_19] : memref<27x8x128xf32, #tpu.memory_space<vmem>>, vector<5x8x128xf32>
    tpu.vector_store %arg18[%c22, %c0_18, %c0_19], %8 {strides = array<i32>} : memref<27x8x128xf32, #tpu.memory_space<vmem>>, vector<5x8x128xf32>,
    %c0_20 = arith.constant 0 : index
    %c0_21 = arith.constant 0 : index
    %c0_22 = arith.constant 0 : index
    %c0_23 = arith.constant 0 : index
    %11 = vector.load %arg1[%c0_20, %c0_21, %c0_22, %c0_23] : memref<1x2x16x47xf32, #tpu.memory_space<vmem>>, vector<1x1x16x47xf32>
    %12 = vector.shape_cast %11 : vector<1x1x16x47xf32> to vector<16x47xf32>
    %c1 = arith.constant 1 : index
    %c0_24 = arith.constant 0 : index
    %c12 = arith.constant 12 : index
    %13 = vector.load %arg15[%c1, %c0_24, %c12] : memref<18x8x128xf32, #tpu.memory_space<vmem>>, vector<16x1x47xf32>
    %14 = vector.shape_cast %13 : vector<16x1x47xf32> to vector<16x47xf32>
    %15 = vector.shape_cast %12 : vector<16x47xf32> to vector<16x1x47xf32>
    tpu.vector_store %arg15[%c1, %c0_24, %c12], %15 {strides = array<i32>} : memref<18x8x128xf32, #tpu.memory_space<vmem>>, vector<16x1x47xf32>,
    %c0_25 = arith.constant 0 : index
    %c1_26 = arith.constant 1 : index
    %c0_27 = arith.constant 0 : index
    %c0_28 = arith.constant 0 : index
    %16 = vector.load %arg1[%c0_25, %c1_26, %c0_27, %c0_28] : memref<1x2x16x47xf32, #tpu.memory_space<vmem>>, vector<1x1x16x47xf32>
    %17 = vector.shape_cast %16 : vector<1x1x16x47xf32> to vector<16x47xf32>
    %c1_29 = arith.constant 1 : index
    %c0_30 = arith.constant 0 : index
    %c76 = arith.constant 76 : index
    %18 = vector.load %arg15[%c1_29, %c0_30, %c76] : memref<18x8x128xf32, #tpu.memory_space<vmem>>, vector<16x1x47xf32>
    %19 = vector.shape_cast %18 : vector<16x1x47xf32> to vector<16x47xf32>
    %20 = vector.shape_cast %17 : vector<16x47xf32> to vector<16x1x47xf32>
    tpu.vector_store %arg15[%c1_29, %c0_30, %c76], %20 {strides = array<i32>} : memref<18x8x128xf32, #tpu.memory_space<vmem>>, vector<16x1x47xf32>,
    %21 = tpu.iota {dimensions = array<i32: 1>} : vector<8x128xi32>
    %c64_i32 = arith.constant 64 : i32
    %c0_i32 = arith.constant 0 : i32
    %22 = arith.cmpi eq, %c64_i32, %c0_i32 : i32
    %c1_i32 = arith.constant 1 : i32
    %23 = arith.select %22, %c1_i32, %c64_i32 : i32
    %24 = vector.broadcast %23 : i32 to vector<8x128xi32>
    %25 = arith.remsi %21, %24 : vector<8x128xi32>
    %c0_i32_31 = arith.constant 0 : i32
    %26 = vector.broadcast %c0_i32_31 : i32 to vector<8x128xi32>
    %27 = arith.cmpi ne, %25, %26 : vector<8x128xi32>
    %c0_i32_32 = arith.constant 0 : i32
    %28 = vector.broadcast %c0_i32_32 : i32 to vector<8x128xi32>
    %29 = arith.cmpi slt, %25, %28 : vector<8x128xi32>
    %c0_i32_33 = arith.constant 0 : i32
    %30 = arith.cmpi slt, %23, %c0_i32_33 : i32
    %31 = vector.broadcast %30 : i1 to vector<8x128xi1>
    %32 = vector.broadcast %31 : vector<8x128xi1> to vector<8x128xi1>
    %33 = arith.xori %29, %32 : vector<8x128xi1>
    %34 = arith.andi %33, %27 : vector<8x128xi1>
    %35 = vector.broadcast %23 : i32 to vector<8x128xi32>
    %36 = arith.addi %25, %35 : vector<8x128xi32>
    %37 = arith.select %34, %36, %25 : vector<8x128xi1>, vector<8x128xi32>
    %c11_i32 = arith.constant 11 : i32
    %38 = vector.broadcast %c11_i32 : i32 to vector<8x128xi32>
    %39 = arith.cmpi sge, %37, %38 : vector<8x128xi32>
    %c58_i32 = arith.constant 58 : i32
    %40 = vector.broadcast %c58_i32 : i32 to vector<8x128xi32>
    %41 = arith.cmpi slt, %37, %40 : vector<8x128xi32>
    %42 = arith.andi %39, %41 : vector<8x128xi1>
    %43 = arith.extui %42 : vector<8x128xi1> to vector<8x128xi32>
    %44 = arith.sitofp %43 : vector<8x128xi32> to vector<8x128xf32>
    %c0_34 = arith.constant 0 : index
    %c0_35 = arith.constant 0 : index
    %45 = vector.load %arg3[%c0_34, %c0_35] : memref<8x1xf32, #tpu.memory_space<vmem>>, vector<8x1xf32>
    %46 = vector.shape_cast %45 : vector<8x1xf32> to vector<8x1xf32>
    %47 = vector.broadcast %46 : vector<8x1xf32> to vector<8x128xf32>
    %48 = arith.mulf %47, %44 : vector<8x128xf32>
    %c0_i32_36 = arith.constant 0 : i32
    %c16_i32 = arith.constant 16 : i32
    %49 = arith.addi %c0_i32_36, %c16_i32 : i32
    %c1_i32_37 = arith.constant 1 : i32
    scf.for %arg20 = %c0_i32_36 to %49 step %c1_i32_37  : i32 {
      %228 = arith.index_cast %arg20 : i32 to index
      %c0_132 = arith.constant 0 : index
      %c0_133 = arith.constant 0 : index
      %229 = vector.load %arg15[%228, %c0_132, %c0_133] : memref<18x8x128xf32, #tpu.memory_space<vmem>>, vector<3x8x128xf32>
      %230 = vector.shape_cast %229 : vector<3x8x128xf32> to vector<24x128xf32>
      %c0_134 = arith.constant 0 : index
      %c0_135 = arith.constant 0 : index
      %c0_136 = arith.constant 0 : index
      %231 = vector.load %arg2[%c0_134, %c0_135, %c0_136] : memref<3x8x24xf32, #tpu.memory_space<vmem>>, vector<1x8x24xf32>
      %232 = vector.shape_cast %231 : vector<1x8x24xf32> to vector<8x24xf32>
      %cst_137 = arith.constant dense<0.000000e+00> : vector<8x128xf32>
      %233 = tpu.matmul %232, %230, %cst_137 {dimension_numbers = #tpu.dot_dimension_numbers<[1], [0], [0], [1], [0, 0, 1, 1], [], []>} : vector<8x24xf32>, vector<24x128xf32>, vector<8x128xf32> -> vector<8x128xf32>
      %c1_138 = arith.constant 1 : index
      %c0_139 = arith.constant 0 : index
      %c0_140 = arith.constant 0 : index
      %234 = vector.load %arg2[%c1_138, %c0_139, %c0_140] : memref<3x8x24xf32, #tpu.memory_space<vmem>>, vector<1x8x24xf32>
      %235 = vector.shape_cast %234 : vector<1x8x24xf32> to vector<8x24xf32>
      %cst_141 = arith.constant dense<0.000000e+00> : vector<8x128xf32>
      %236 = tpu.matmul %235, %230, %cst_141 {dimension_numbers = #tpu.dot_dimension_numbers<[1], [0], [0], [1], [0, 0, 1, 1], [], []>} : vector<8x24xf32>, vector<24x128xf32>, vector<8x128xf32> -> vector<8x128xf32>
      %237 = vector.extract_strided_slice %236 {offsets = [0, 1], sizes = [8, 127], strides = [1, 1]} : vector<8x128xf32> to vector<8x127xf32>
      %238 = vector.extract_strided_slice %236 {offsets = [0, 0], sizes = [8, 1], strides = [1, 1]} : vector<8x128xf32> to vector<8x1xf32>
      %239 = tpu.concatenate %237, %238 in 1 : vector<8x127xf32>, vector<8x1xf32> -> vector<8x128xf32>
      %240 = arith.addf %233, %239 : vector<8x128xf32>
      %c2_142 = arith.constant 2 : index
      %c0_143 = arith.constant 0 : index
      %c0_144 = arith.constant 0 : index
      %241 = vector.load %arg2[%c2_142, %c0_143, %c0_144] : memref<3x8x24xf32, #tpu.memory_space<vmem>>, vector<1x8x24xf32>
      %242 = vector.shape_cast %241 : vector<1x8x24xf32> to vector<8x24xf32>
      %cst_145 = arith.constant dense<0.000000e+00> : vector<8x128xf32>
      %243 = tpu.matmul %242, %230, %cst_145 {dimension_numbers = #tpu.dot_dimension_numbers<[1], [0], [0], [1], [0, 0, 1, 1], [], []>} : vector<8x24xf32>, vector<24x128xf32>, vector<8x128xf32> -> vector<8x128xf32>
      %244 = vector.extract_strided_slice %243 {offsets = [0, 2], sizes = [8, 126], strides = [1, 1]} : vector<8x128xf32> to vector<8x126xf32>
      %245 = vector.extract_strided_slice %243 {offsets = [0, 0], sizes = [8, 2], strides = [1, 1]} : vector<8x128xf32> to vector<8x2xf32>
      %246 = tpu.concatenate %244, %245 in 1 : vector<8x126xf32>, vector<8x2xf32> -> vector<8x128xf32>
      %247 = arith.addf %240, %246 : vector<8x128xf32>
      %248 = arith.mulf %247, %44 : vector<8x128xf32>
      %249 = arith.addf %248, %48 : vector<8x128xf32>
      %c2_i32 = arith.constant 2 : i32
      %250 = arith.addi %c2_i32, %arg20 : i32
      %251 = arith.index_cast %250 : i32 to index
      %c0_146 = arith.constant 0 : index
      %c0_147 = arith.constant 0 : index
      %252 = vector.load %arg16[%251, %c0_146, %c0_147] : memref<20x8x128xf32, #tpu.memory_space<vmem>>, vector<1x8x128xf32>
      %253 = vector.shape_cast %252 : vector<1x8x128xf32> to vector<8x128xf32>
      %254 = vector.shape_cast %249 : vector<8x128xf32> to vector<1x8x128xf32>
      tpu.vector_store %arg16[%251, %c0_146, %c0_147], %254 {strides = array<i32>} : memref<20x8x128xf32, #tpu.memory_space<vmem>>, vector<1x8x128xf32>,
    }
    %c16_i32_38 = arith.constant 16 : i32
    %50 = tpu.iota {dimensions = array<i32: 1>} : vector<8x128xi32>
    %c64_i32_39 = arith.constant 64 : i32
    %c0_i32_40 = arith.constant 0 : i32
    %51 = arith.cmpi eq, %c64_i32_39, %c0_i32_40 : i32
    %c1_i32_41 = arith.constant 1 : i32
    %52 = arith.select %51, %c1_i32_41, %c64_i32_39 : i32
    %53 = vector.broadcast %52 : i32 to vector<8x128xi32>
    %54 = arith.remsi %50, %53 : vector<8x128xi32>
    %c0_i32_42 = arith.constant 0 : i32
    %55 = vector.broadcast %c0_i32_42 : i32 to vector<8x128xi32>
    %56 = arith.cmpi ne, %54, %55 : vector<8x128xi32>
    %c0_i32_43 = arith.constant 0 : i32
    %57 = vector.broadcast %c0_i32_43 : i32 to vector<8x128xi32>
    %58 = arith.cmpi slt, %54, %57 : vector<8x128xi32>
    %c0_i32_44 = arith.constant 0 : i32
    %59 = arith.cmpi slt, %52, %c0_i32_44 : i32
    %60 = vector.broadcast %59 : i1 to vector<8x128xi1>
    %61 = vector.broadcast %60 : vector<8x128xi1> to vector<8x128xi1>
    %62 = arith.xori %58, %61 : vector<8x128xi1>
    %63 = arith.andi %62, %56 : vector<8x128xi1>
    %64 = vector.broadcast %52 : i32 to vector<8x128xi32>
    %65 = arith.addi %54, %64 : vector<8x128xi32>
    %66 = arith.select %63, %65, %54 : vector<8x128xi1>, vector<8x128xi32>
    %c9_i32 = arith.constant 9 : i32
    %67 = vector.broadcast %c9_i32 : i32 to vector<8x128xi32>
    %68 = arith.cmpi sge, %66, %67 : vector<8x128xi32>
    %c56_i32 = arith.constant 56 : i32
    %69 = vector.broadcast %c56_i32 : i32 to vector<8x128xi32>
    %70 = arith.cmpi slt, %66, %69 : vector<8x128xi32>
    %71 = arith.andi %68, %70 : vector<8x128xi1>
    %72 = arith.extui %71 : vector<8x128xi1> to vector<8x128xi32>
    %73 = arith.sitofp %72 : vector<8x128xi32> to vector<8x128xf32>
    %c0_45 = arith.constant 0 : index
    %c0_46 = arith.constant 0 : index
    %74 = vector.load %arg5[%c0_45, %c0_46] : memref<8x1xf32, #tpu.memory_space<vmem>>, vector<8x1xf32>
    %75 = vector.shape_cast %74 : vector<8x1xf32> to vector<8x1xf32>
    %76 = vector.broadcast %75 : vector<8x1xf32> to vector<8x128xf32>
    %77 = arith.mulf %76, %73 : vector<8x128xf32>
    %c0_i32_47 = arith.constant 0 : i32
    %c16_i32_48 = arith.constant 16 : i32
    %78 = arith.addi %c0_i32_47, %c16_i32_48 : i32
    %c1_i32_49 = arith.constant 1 : i32
    scf.for %arg20 = %c0_i32_47 to %78 step %c1_i32_49  : i32 {
      %228 = arith.index_cast %arg20 : i32 to index
      %c0_132 = arith.constant 0 : index
      %c0_133 = arith.constant 0 : index
      %229 = vector.load %arg16[%228, %c0_132, %c0_133] : memref<20x8x128xf32, #tpu.memory_space<vmem>>, vector<5x8x128xf32>
      %230 = vector.shape_cast %229 : vector<5x8x128xf32> to vector<40x128xf32>
      %c0_134 = arith.constant 0 : index
      %c0_135 = arith.constant 0 : index
      %c0_136 = arith.constant 0 : index
      %231 = vector.load %arg4[%c0_134, %c0_135, %c0_136] : memref<5x8x40xf32, #tpu.memory_space<vmem>>, vector<1x8x40xf32>
      %232 = vector.shape_cast %231 : vector<1x8x40xf32> to vector<8x40xf32>
      %cst_137 = arith.constant dense<0.000000e+00> : vector<8x128xf32>
      %233 = tpu.matmul %232, %230, %cst_137 {dimension_numbers = #tpu.dot_dimension_numbers<[1], [0], [0], [1], [0, 0, 1, 1], [], []>} : vector<8x40xf32>, vector<40x128xf32>, vector<8x128xf32> -> vector<8x128xf32>
      %c1_138 = arith.constant 1 : index
      %c0_139 = arith.constant 0 : index
      %c0_140 = arith.constant 0 : index
      %234 = vector.load %arg4[%c1_138, %c0_139, %c0_140] : memref<5x8x40xf32, #tpu.memory_space<vmem>>, vector<1x8x40xf32>
      %235 = vector.shape_cast %234 : vector<1x8x40xf32> to vector<8x40xf32>
      %cst_141 = arith.constant dense<0.000000e+00> : vector<8x128xf32>
      %236 = tpu.matmul %235, %230, %cst_141 {dimension_numbers = #tpu.dot_dimension_numbers<[1], [0], [0], [1], [0, 0, 1, 1], [], []>} : vector<8x40xf32>, vector<40x128xf32>, vector<8x128xf32> -> vector<8x128xf32>
      %237 = vector.extract_strided_slice %236 {offsets = [0, 1], sizes = [8, 127], strides = [1, 1]} : vector<8x128xf32> to vector<8x127xf32>
      %238 = vector.extract_strided_slice %236 {offsets = [0, 0], sizes = [8, 1], strides = [1, 1]} : vector<8x128xf32> to vector<8x1xf32>
      %239 = tpu.concatenate %237, %238 in 1 : vector<8x127xf32>, vector<8x1xf32> -> vector<8x128xf32>
      %240 = arith.addf %233, %239 : vector<8x128xf32>
      %c2_142 = arith.constant 2 : index
      %c0_143 = arith.constant 0 : index
      %c0_144 = arith.constant 0 : index
      %241 = vector.load %arg4[%c2_142, %c0_143, %c0_144] : memref<5x8x40xf32, #tpu.memory_space<vmem>>, vector<1x8x40xf32>
      %242 = vector.shape_cast %241 : vector<1x8x40xf32> to vector<8x40xf32>
      %cst_145 = arith.constant dense<0.000000e+00> : vector<8x128xf32>
      %243 = tpu.matmul %242, %230, %cst_145 {dimension_numbers = #tpu.dot_dimension_numbers<[1], [0], [0], [1], [0, 0, 1, 1], [], []>} : vector<8x40xf32>, vector<40x128xf32>, vector<8x128xf32> -> vector<8x128xf32>
      %244 = vector.extract_strided_slice %243 {offsets = [0, 2], sizes = [8, 126], strides = [1, 1]} : vector<8x128xf32> to vector<8x126xf32>
      %245 = vector.extract_strided_slice %243 {offsets = [0, 0], sizes = [8, 2], strides = [1, 1]} : vector<8x128xf32> to vector<8x2xf32>
      %246 = tpu.concatenate %244, %245 in 1 : vector<8x126xf32>, vector<8x2xf32> -> vector<8x128xf32>
      %247 = arith.addf %240, %246 : vector<8x128xf32>
      %c3_146 = arith.constant 3 : index
      %c0_147 = arith.constant 0 : index
      %c0_148 = arith.constant 0 : index
      %248 = vector.load %arg4[%c3_146, %c0_147, %c0_148] : memref<5x8x40xf32, #tpu.memory_space<vmem>>, vector<1x8x40xf32>
      %249 = vector.shape_cast %248 : vector<1x8x40xf32> to vector<8x40xf32>
      %cst_149 = arith.constant dense<0.000000e+00> : vector<8x128xf32>
      %250 = tpu.matmul %249, %230, %cst_149 {dimension_numbers = #tpu.dot_dimension_numbers<[1], [0], [0], [1], [0, 0, 1, 1], [], []>} : vector<8x40xf32>, vector<40x128xf32>, vector<8x128xf32> -> vector<8x128xf32>
      %251 = vector.extract_strided_slice %250 {offsets = [0, 3], sizes = [8, 125], strides = [1, 1]} : vector<8x128xf32> to vector<8x125xf32>
      %252 = vector.extract_strided_slice %250 {offsets = [0, 0], sizes = [8, 3], strides = [1, 1]} : vector<8x128xf32> to vector<8x3xf32>
      %253 = tpu.concatenate %251, %252 in 1 : vector<8x125xf32>, vector<8x3xf32> -> vector<8x128xf32>
      %254 = arith.addf %247, %253 : vector<8x128xf32>
      %c4_150 = arith.constant 4 : index
      %c0_151 = arith.constant 0 : index
      %c0_152 = arith.constant 0 : index
      %255 = vector.load %arg4[%c4_150, %c0_151, %c0_152] : memref<5x8x40xf32, #tpu.memory_space<vmem>>, vector<1x8x40xf32>
      %256 = vector.shape_cast %255 : vector<1x8x40xf32> to vector<8x40xf32>
      %cst_153 = arith.constant dense<0.000000e+00> : vector<8x128xf32>
      %257 = tpu.matmul %256, %230, %cst_153 {dimension_numbers = #tpu.dot_dimension_numbers<[1], [0], [0], [1], [0, 0, 1, 1], [], []>} : vector<8x40xf32>, vector<40x128xf32>, vector<8x128xf32> -> vector<8x128xf32>
      %258 = vector.extract_strided_slice %257 {offsets = [0, 4], sizes = [8, 124], strides = [1, 1]} : vector<8x128xf32> to vector<8x124xf32>
      %259 = vector.extract_strided_slice %257 {offsets = [0, 0], sizes = [8, 4], strides = [1, 1]} : vector<8x128xf32> to vector<8x4xf32>
      %260 = tpu.concatenate %258, %259 in 1 : vector<8x124xf32>, vector<8x4xf32> -> vector<8x128xf32>
      %261 = arith.addf %254, %260 : vector<8x128xf32>
      %262 = arith.mulf %261, %73 : vector<8x128xf32>
      %263 = arith.addf %262, %77 : vector<8x128xf32>
      %c4_i32 = arith.constant 4 : i32
      %264 = arith.addi %c4_i32, %arg20 : i32
      %265 = arith.index_cast %264 : i32 to index
      %c0_154 = arith.constant 0 : index
      %c0_155 = arith.constant 0 : index
      %266 = vector.load %arg17[%265, %c0_154, %c0_155] : memref<24x8x128xf32, #tpu.memory_space<vmem>>, vector<1x8x128xf32>
      %267 = vector.shape_cast %266 : vector<1x8x128xf32> to vector<8x128xf32>
      %268 = vector.shape_cast %263 : vector<8x128xf32> to vector<1x8x128xf32>
      tpu.vector_store %arg17[%265, %c0_154, %c0_155], %268 {strides = array<i32>} : memref<24x8x128xf32, #tpu.memory_space<vmem>>, vector<1x8x128xf32>,
    }
    %c16_i32_50 = arith.constant 16 : i32
    %79 = tpu.iota {dimensions = array<i32: 1>} : vector<8x128xi32>
    %c64_i32_51 = arith.constant 64 : i32
    %c0_i32_52 = arith.constant 0 : i32
    %80 = arith.cmpi eq, %c64_i32_51, %c0_i32_52 : i32
    %c1_i32_53 = arith.constant 1 : i32
    %81 = arith.select %80, %c1_i32_53, %c64_i32_51 : i32
    %82 = vector.broadcast %81 : i32 to vector<8x128xi32>
    %83 = arith.remsi %79, %82 : vector<8x128xi32>
    %c0_i32_54 = arith.constant 0 : i32
    %84 = vector.broadcast %c0_i32_54 : i32 to vector<8x128xi32>
    %85 = arith.cmpi ne, %83, %84 : vector<8x128xi32>
    %c0_i32_55 = arith.constant 0 : i32
    %86 = vector.broadcast %c0_i32_55 : i32 to vector<8x128xi32>
    %87 = arith.cmpi slt, %83, %86 : vector<8x128xi32>
    %c0_i32_56 = arith.constant 0 : i32
    %88 = arith.cmpi slt, %81, %c0_i32_56 : i32
    %89 = vector.broadcast %88 : i1 to vector<8x128xi1>
    %90 = vector.broadcast %89 : vector<8x128xi1> to vector<8x128xi1>
    %91 = arith.xori %87, %90 : vector<8x128xi1>
    %92 = arith.andi %91, %85 : vector<8x128xi1>
    %93 = vector.broadcast %81 : i32 to vector<8x128xi32>
    %94 = arith.addi %83, %93 : vector<8x128xi32>
    %95 = arith.select %92, %94, %83 : vector<8x128xi1>, vector<8x128xi32>
    %c5_i32 = arith.constant 5 : i32
    %96 = vector.broadcast %c5_i32 : i32 to vector<8x128xi32>
    %97 = arith.cmpi sge, %95, %96 : vector<8x128xi32>
    %c53_i32 = arith.constant 53 : i32
    %98 = vector.broadcast %c53_i32 : i32 to vector<8x128xi32>
    %99 = arith.cmpi slt, %95, %98 : vector<8x128xi32>
    %100 = arith.andi %97, %99 : vector<8x128xi1>
    %101 = arith.extui %100 : vector<8x128xi1> to vector<8x128xi32>
    %102 = arith.sitofp %101 : vector<8x128xi32> to vector<8x128xf32>
    %c0_57 = arith.constant 0 : index
    %c0_58 = arith.constant 0 : index
    %103 = vector.load %arg7[%c0_57, %c0_58] : memref<8x1xf32, #tpu.memory_space<vmem>>, vector<8x1xf32>
    %104 = vector.shape_cast %103 : vector<8x1xf32> to vector<8x1xf32>
    %105 = vector.broadcast %104 : vector<8x1xf32> to vector<8x128xf32>
    %106 = arith.mulf %105, %102 : vector<8x128xf32>
    %c0_i32_59 = arith.constant 0 : i32
    %c17_i32 = arith.constant 17 : i32
    %107 = arith.addi %c0_i32_59, %c17_i32 : i32
    %c1_i32_60 = arith.constant 1 : i32
    scf.for %arg20 = %c0_i32_59 to %107 step %c1_i32_60  : i32 {
      %228 = arith.index_cast %arg20 : i32 to index
      %c0_132 = arith.constant 0 : index
      %c0_133 = arith.constant 0 : index
      %229 = vector.load %arg17[%228, %c0_132, %c0_133] : memref<24x8x128xf32, #tpu.memory_space<vmem>>, vector<8x8x128xf32>
      %230 = vector.shape_cast %229 : vector<8x8x128xf32> to vector<64x128xf32>
      %c0_134 = arith.constant 0 : index
      %c0_135 = arith.constant 0 : index
      %c0_136 = arith.constant 0 : index
      %231 = vector.load %arg6[%c0_134, %c0_135, %c0_136] : memref<8x8x64xf32, #tpu.memory_space<vmem>>, vector<1x8x64xf32>
      %232 = vector.shape_cast %231 : vector<1x8x64xf32> to vector<8x64xf32>
      %cst_137 = arith.constant dense<0.000000e+00> : vector<8x128xf32>
      %233 = tpu.matmul %232, %230, %cst_137 {dimension_numbers = #tpu.dot_dimension_numbers<[1], [0], [0], [1], [0, 0, 1, 1], [], []>} : vector<8x64xf32>, vector<64x128xf32>, vector<8x128xf32> -> vector<8x128xf32>
      %c1_138 = arith.constant 1 : index
      %c0_139 = arith.constant 0 : index
      %c0_140 = arith.constant 0 : index
      %234 = vector.load %arg6[%c1_138, %c0_139, %c0_140] : memref<8x8x64xf32, #tpu.memory_space<vmem>>, vector<1x8x64xf32>
      %235 = vector.shape_cast %234 : vector<1x8x64xf32> to vector<8x64xf32>
      %cst_141 = arith.constant dense<0.000000e+00> : vector<8x128xf32>
      %236 = tpu.matmul %235, %230, %cst_141 {dimension_numbers = #tpu.dot_dimension_numbers<[1], [0], [0], [1], [0, 0, 1, 1], [], []>} : vector<8x64xf32>, vector<64x128xf32>, vector<8x128xf32> -> vector<8x128xf32>
      %237 = vector.extract_strided_slice %236 {offsets = [0, 1], sizes = [8, 127], strides = [1, 1]} : vector<8x128xf32> to vector<8x127xf32>
      %238 = vector.extract_strided_slice %236 {offsets = [0, 0], sizes = [8, 1], strides = [1, 1]} : vector<8x128xf32> to vector<8x1xf32>
      %239 = tpu.concatenate %237, %238 in 1 : vector<8x127xf32>, vector<8x1xf32> -> vector<8x128xf32>
      %240 = arith.addf %233, %239 : vector<8x128xf32>
      %c2_142 = arith.constant 2 : index
      %c0_143 = arith.constant 0 : index
      %c0_144 = arith.constant 0 : index
      %241 = vector.load %arg6[%c2_142, %c0_143, %c0_144] : memref<8x8x64xf32, #tpu.memory_space<vmem>>, vector<1x8x64xf32>
      %242 = vector.shape_cast %241 : vector<1x8x64xf32> to vector<8x64xf32>
      %cst_145 = arith.constant dense<0.000000e+00> : vector<8x128xf32>
      %243 = tpu.matmul %242, %230, %cst_145 {dimension_numbers = #tpu.dot_dimension_numbers<[1], [0], [0], [1], [0, 0, 1, 1], [], []>} : vector<8x64xf32>, vector<64x128xf32>, vector<8x128xf32> -> vector<8x128xf32>
      %244 = vector.extract_strided_slice %243 {offsets = [0, 2], sizes = [8, 126], strides = [1, 1]} : vector<8x128xf32> to vector<8x126xf32>
      %245 = vector.extract_strided_slice %243 {offsets = [0, 0], sizes = [8, 2], strides = [1, 1]} : vector<8x128xf32> to vector<8x2xf32>
      %246 = tpu.concatenate %244, %245 in 1 : vector<8x126xf32>, vector<8x2xf32> -> vector<8x128xf32>
      %247 = arith.addf %240, %246 : vector<8x128xf32>
      %c3_146 = arith.constant 3 : index
      %c0_147 = arith.constant 0 : index
      %c0_148 = arith.constant 0 : index
      %248 = vector.load %arg6[%c3_146, %c0_147, %c0_148] : memref<8x8x64xf32, #tpu.memory_space<vmem>>, vector<1x8x64xf32>
      %249 = vector.shape_cast %248 : vector<1x8x64xf32> to vector<8x64xf32>
      %cst_149 = arith.constant dense<0.000000e+00> : vector<8x128xf32>
      %250 = tpu.matmul %249, %230, %cst_149 {dimension_numbers = #tpu.dot_dimension_numbers<[1], [0], [0], [1], [0, 0, 1, 1], [], []>} : vector<8x64xf32>, vector<64x128xf32>, vector<8x128xf32> -> vector<8x128xf32>
      %251 = vector.extract_strided_slice %250 {offsets = [0, 3], sizes = [8, 125], strides = [1, 1]} : vector<8x128xf32> to vector<8x125xf32>
      %252 = vector.extract_strided_slice %250 {offsets = [0, 0], sizes = [8, 3], strides = [1, 1]} : vector<8x128xf32> to vector<8x3xf32>
      %253 = tpu.concatenate %251, %252 in 1 : vector<8x125xf32>, vector<8x3xf32> -> vector<8x128xf32>
      %254 = arith.addf %247, %253 : vector<8x128xf32>
      %c4_150 = arith.constant 4 : index
      %c0_151 = arith.constant 0 : index
      %c0_152 = arith.constant 0 : index
      %255 = vector.load %arg6[%c4_150, %c0_151, %c0_152] : memref<8x8x64xf32, #tpu.memory_space<vmem>>, vector<1x8x64xf32>
      %256 = vector.shape_cast %255 : vector<1x8x64xf32> to vector<8x64xf32>
      %cst_153 = arith.constant dense<0.000000e+00> : vector<8x128xf32>
      %257 = tpu.matmul %256, %230, %cst_153 {dimension_numbers = #tpu.dot_dimension_numbers<[1], [0], [0], [1], [0, 0, 1, 1], [], []>} : vector<8x64xf32>, vector<64x128xf32>, vector<8x128xf32> -> vector<8x128xf32>
      %258 = vector.extract_strided_slice %257 {offsets = [0, 4], sizes = [8, 124], strides = [1, 1]} : vector<8x128xf32> to vector<8x124xf32>
      %259 = vector.extract_strided_slice %257 {offsets = [0, 0], sizes = [8, 4], strides = [1, 1]} : vector<8x128xf32> to vector<8x4xf32>
      %260 = tpu.concatenate %258, %259 in 1 : vector<8x124xf32>, vector<8x4xf32> -> vector<8x128xf32>
      %261 = arith.addf %254, %260 : vector<8x128xf32>
      %c5_154 = arith.constant 5 : index
      %c0_155 = arith.constant 0 : index
      %c0_156 = arith.constant 0 : index
      %262 = vector.load %arg6[%c5_154, %c0_155, %c0_156] : memref<8x8x64xf32, #tpu.memory_space<vmem>>, vector<1x8x64xf32>
      %263 = vector.shape_cast %262 : vector<1x8x64xf32> to vector<8x64xf32>
      %cst_157 = arith.constant dense<0.000000e+00> : vector<8x128xf32>
      %264 = tpu.matmul %263, %230, %cst_157 {dimension_numbers = #tpu.dot_dimension_numbers<[1], [0], [0], [1], [0, 0, 1, 1], [], []>} : vector<8x64xf32>, vector<64x128xf32>, vector<8x128xf32> -> vector<8x128xf32>
      %265 = vector.extract_strided_slice %264 {offsets = [0, 5], sizes = [8, 123], strides = [1, 1]} : vector<8x128xf32> to vector<8x123xf32>
      %266 = vector.extract_strided_slice %264 {offsets = [0, 0], sizes = [8, 5], strides = [1, 1]} : vector<8x128xf32> to vector<8x5xf32>
      %267 = tpu.concatenate %265, %266 in 1 : vector<8x123xf32>, vector<8x5xf32> -> vector<8x128xf32>
      %268 = arith.addf %261, %267 : vector<8x128xf32>
      %c6_158 = arith.constant 6 : index
      %c0_159 = arith.constant 0 : index
      %c0_160 = arith.constant 0 : index
      %269 = vector.load %arg6[%c6_158, %c0_159, %c0_160] : memref<8x8x64xf32, #tpu.memory_space<vmem>>, vector<1x8x64xf32>
      %270 = vector.shape_cast %269 : vector<1x8x64xf32> to vector<8x64xf32>
      %cst_161 = arith.constant dense<0.000000e+00> : vector<8x128xf32>
      %271 = tpu.matmul %270, %230, %cst_161 {dimension_numbers = #tpu.dot_dimension_numbers<[1], [0], [0], [1], [0, 0, 1, 1], [], []>} : vector<8x64xf32>, vector<64x128xf32>, vector<8x128xf32> -> vector<8x128xf32>
      %272 = vector.extract_strided_slice %271 {offsets = [0, 6], sizes = [8, 122], strides = [1, 1]} : vector<8x128xf32> to vector<8x122xf32>
      %273 = vector.extract_strided_slice %271 {offsets = [0, 0], sizes = [8, 6], strides = [1, 1]} : vector<8x128xf32> to vector<8x6xf32>
      %274 = tpu.concatenate %272, %273 in 1 : vector<8x122xf32>, vector<8x6xf32> -> vector<8x128xf32>
      %275 = arith.addf %268, %274 : vector<8x128xf32>
      %c7 = arith.constant 7 : index
      %c0_162 = arith.constant 0 : index
      %c0_163 = arith.constant 0 : index
      %276 = vector.load %arg6[%c7, %c0_162, %c0_163] : memref<8x8x64xf32, #tpu.memory_space<vmem>>, vector<1x8x64xf32>
      %277 = vector.shape_cast %276 : vector<1x8x64xf32> to vector<8x64xf32>
      %cst_164 = arith.constant dense<0.000000e+00> : vector<8x128xf32>
      %278 = tpu.matmul %277, %230, %cst_164 {dimension_numbers = #tpu.dot_dimension_numbers<[1], [0], [0], [1], [0, 0, 1, 1], [], []>} : vector<8x64xf32>, vector<64x128xf32>, vector<8x128xf32> -> vector<8x128xf32>
      %279 = vector.extract_strided_slice %278 {offsets = [0, 7], sizes = [8, 121], strides = [1, 1]} : vector<8x128xf32> to vector<8x121xf32>
      %280 = vector.extract_strided_slice %278 {offsets = [0, 0], sizes = [8, 7], strides = [1, 1]} : vector<8x128xf32> to vector<8x7xf32>
      %281 = tpu.concatenate %279, %280 in 1 : vector<8x121xf32>, vector<8x7xf32> -> vector<8x128xf32>
      %282 = arith.addf %275, %281 : vector<8x128xf32>
      %283 = arith.mulf %282, %102 : vector<8x128xf32>
      %284 = arith.addf %283, %106 : vector<8x128xf32>
      %c5_i32_165 = arith.constant 5 : i32
      %285 = arith.addi %c5_i32_165, %arg20 : i32
      %286 = arith.index_cast %285 : i32 to index
      %c0_166 = arith.constant 0 : index
      %c0_167 = arith.constant 0 : index
      %287 = vector.load %arg18[%286, %c0_166, %c0_167] : memref<27x8x128xf32, #tpu.memory_space<vmem>>, vector<1x8x128xf32>
      %288 = vector.shape_cast %287 : vector<1x8x128xf32> to vector<8x128xf32>
      %289 = vector.shape_cast %284 : vector<8x128xf32> to vector<1x8x128xf32>
      tpu.vector_store %arg18[%286, %c0_166, %c0_167], %289 {strides = array<i32>} : memref<27x8x128xf32, #tpu.memory_space<vmem>>, vector<1x8x128xf32>,
    }
    %c17_i32_61 = arith.constant 17 : i32
    %108 = tpu.iota {dimensions = array<i32: 1>} : vector<16x128xi32>
    %c64_i32_62 = arith.constant 64 : i32
    %c0_i32_63 = arith.constant 0 : i32
    %109 = arith.cmpi eq, %c64_i32_62, %c0_i32_63 : i32
    %c1_i32_64 = arith.constant 1 : i32
    %110 = arith.select %109, %c1_i32_64, %c64_i32_62 : i32
    %111 = vector.broadcast %110 : i32 to vector<16x128xi32>
    %112 = arith.remsi %108, %111 : vector<16x128xi32>
    %c0_i32_65 = arith.constant 0 : i32
    %113 = vector.broadcast %c0_i32_65 : i32 to vector<16x128xi32>
    %114 = arith.cmpi ne, %112, %113 : vector<16x128xi32>
    %c0_i32_66 = arith.constant 0 : i32
    %115 = vector.broadcast %c0_i32_66 : i32 to vector<16x128xi32>
    %116 = arith.cmpi slt, %112, %115 : vector<16x128xi32>
    %c0_i32_67 = arith.constant 0 : i32
    %117 = arith.cmpi slt, %110, %c0_i32_67 : i32
    %118 = vector.broadcast %117 : i1 to vector<16x128xi1>
    %119 = vector.broadcast %118 : vector<16x128xi1> to vector<16x128xi1>
    %120 = arith.xori %116, %119 : vector<16x128xi1>
    %121 = arith.andi %120, %114 : vector<16x128xi1>
    %122 = vector.broadcast %110 : i32 to vector<16x128xi32>
    %123 = arith.addi %112, %122 : vector<16x128xi32>
    %124 = arith.select %121, %123, %112 : vector<16x128xi1>, vector<16x128xi32>
    %c0_i32_68 = arith.constant 0 : i32
    %125 = vector.broadcast %c0_i32_68 : i32 to vector<16x128xi32>
    %126 = arith.cmpi sge, %124, %125 : vector<16x128xi32>
    %c49_i32 = arith.constant 49 : i32
    %127 = vector.broadcast %c49_i32 : i32 to vector<16x128xi32>
    %128 = arith.cmpi slt, %124, %127 : vector<16x128xi32>
    %129 = arith.andi %126, %128 : vector<16x128xi1>
    %130 = arith.extui %129 : vector<16x128xi1> to vector<16x128xi32>
    %131 = arith.sitofp %130 : vector<16x128xi32> to vector<16x128xf32>
    %c0_69 = arith.constant 0 : index
    %c0_70 = arith.constant 0 : index
    %132 = vector.load %arg9[%c0_69, %c0_70] : memref<16x1xf32, #tpu.memory_space<vmem>>, vector<16x1xf32>
    %133 = vector.shape_cast %132 : vector<16x1xf32> to vector<16x1xf32>
    %134 = vector.broadcast %133 : vector<16x1xf32> to vector<16x128xf32>
    %135 = arith.mulf %134, %131 : vector<16x128xf32>
    %c0_i32_71 = arith.constant 0 : i32
    %c18_i32 = arith.constant 18 : i32
    %136 = arith.addi %c0_i32_71, %c18_i32 : i32
    %c1_i32_72 = arith.constant 1 : i32
    scf.for %arg20 = %c0_i32_71 to %136 step %c1_i32_72  : i32 {
      %228 = arith.index_cast %arg20 : i32 to index
      %c0_132 = arith.constant 0 : index
      %c0_133 = arith.constant 0 : index
      %229 = vector.load %arg18[%228, %c0_132, %c0_133] : memref<27x8x128xf32, #tpu.memory_space<vmem>>, vector<10x8x128xf32>
      %230 = vector.shape_cast %229 : vector<10x8x128xf32> to vector<80x128xf32>
      %c0_134 = arith.constant 0 : index
      %c0_135 = arith.constant 0 : index
      %c0_136 = arith.constant 0 : index
      %231 = vector.load %arg8[%c0_134, %c0_135, %c0_136] : memref<10x16x80xf32, #tpu.memory_space<vmem>>, vector<1x16x80xf32>
      %232 = vector.shape_cast %231 : vector<1x16x80xf32> to vector<16x80xf32>
      %cst_137 = arith.constant dense<0.000000e+00> : vector<16x128xf32>
      %233 = tpu.matmul %232, %230, %cst_137 {dimension_numbers = #tpu.dot_dimension_numbers<[1], [0], [0], [1], [0, 0, 1, 1], [], []>} : vector<16x80xf32>, vector<80x128xf32>, vector<16x128xf32> -> vector<16x128xf32>
      %c1_138 = arith.constant 1 : index
      %c0_139 = arith.constant 0 : index
      %c0_140 = arith.constant 0 : index
      %234 = vector.load %arg8[%c1_138, %c0_139, %c0_140] : memref<10x16x80xf32, #tpu.memory_space<vmem>>, vector<1x16x80xf32>
      %235 = vector.shape_cast %234 : vector<1x16x80xf32> to vector<16x80xf32>
      %cst_141 = arith.constant dense<0.000000e+00> : vector<16x128xf32>
      %236 = tpu.matmul %235, %230, %cst_141 {dimension_numbers = #tpu.dot_dimension_numbers<[1], [0], [0], [1], [0, 0, 1, 1], [], []>} : vector<16x80xf32>, vector<80x128xf32>, vector<16x128xf32> -> vector<16x128xf32>
      %237 = vector.extract_strided_slice %236 {offsets = [0, 1], sizes = [16, 127], strides = [1, 1]} : vector<16x128xf32> to vector<16x127xf32>
      %238 = vector.extract_strided_slice %236 {offsets = [0, 0], sizes = [16, 1], strides = [1, 1]} : vector<16x128xf32> to vector<16x1xf32>
      %239 = tpu.concatenate %237, %238 in 1 : vector<16x127xf32>, vector<16x1xf32> -> vector<16x128xf32>
      %240 = arith.addf %233, %239 : vector<16x128xf32>
      %c2_142 = arith.constant 2 : index
      %c0_143 = arith.constant 0 : index
      %c0_144 = arith.constant 0 : index
      %241 = vector.load %arg8[%c2_142, %c0_143, %c0_144] : memref<10x16x80xf32, #tpu.memory_space<vmem>>, vector<1x16x80xf32>
      %242 = vector.shape_cast %241 : vector<1x16x80xf32> to vector<16x80xf32>
      %cst_145 = arith.constant dense<0.000000e+00> : vector<16x128xf32>
      %243 = tpu.matmul %242, %230, %cst_145 {dimension_numbers = #tpu.dot_dimension_numbers<[1], [0], [0], [1], [0, 0, 1, 1], [], []>} : vector<16x80xf32>, vector<80x128xf32>, vector<16x128xf32> -> vector<16x128xf32>
      %244 = vector.extract_strided_slice %243 {offsets = [0, 2], sizes = [16, 126], strides = [1, 1]} : vector<16x128xf32> to vector<16x126xf32>
      %245 = vector.extract_strided_slice %243 {offsets = [0, 0], sizes = [16, 2], strides = [1, 1]} : vector<16x128xf32> to vector<16x2xf32>
      %246 = tpu.concatenate %244, %245 in 1 : vector<16x126xf32>, vector<16x2xf32> -> vector<16x128xf32>
      %247 = arith.addf %240, %246 : vector<16x128xf32>
      %c3_146 = arith.constant 3 : index
      %c0_147 = arith.constant 0 : index
      %c0_148 = arith.constant 0 : index
      %248 = vector.load %arg8[%c3_146, %c0_147, %c0_148] : memref<10x16x80xf32, #tpu.memory_space<vmem>>, vector<1x16x80xf32>
      %249 = vector.shape_cast %248 : vector<1x16x80xf32> to vector<16x80xf32>
      %cst_149 = arith.constant dense<0.000000e+00> : vector<16x128xf32>
      %250 = tpu.matmul %249, %230, %cst_149 {dimension_numbers = #tpu.dot_dimension_numbers<[1], [0], [0], [1], [0, 0, 1, 1], [], []>} : vector<16x80xf32>, vector<80x128xf32>, vector<16x128xf32> -> vector<16x128xf32>
      %251 = vector.extract_strided_slice %250 {offsets = [0, 3], sizes = [16, 125], strides = [1, 1]} : vector<16x128xf32> to vector<16x125xf32>
      %252 = vector.extract_strided_slice %250 {offsets = [0, 0], sizes = [16, 3], strides = [1, 1]} : vector<16x128xf32> to vector<16x3xf32>
      %253 = tpu.concatenate %251, %252 in 1 : vector<16x125xf32>, vector<16x3xf32> -> vector<16x128xf32>
      %254 = arith.addf %247, %253 : vector<16x128xf32>
      %c4_150 = arith.constant 4 : index
      %c0_151 = arith.constant 0 : index
      %c0_152 = arith.constant 0 : index
      %255 = vector.load %arg8[%c4_150, %c0_151, %c0_152] : memref<10x16x80xf32, #tpu.memory_space<vmem>>, vector<1x16x80xf32>
      %256 = vector.shape_cast %255 : vector<1x16x80xf32> to vector<16x80xf32>
      %cst_153 = arith.constant dense<0.000000e+00> : vector<16x128xf32>
      %257 = tpu.matmul %256, %230, %cst_153 {dimension_numbers = #tpu.dot_dimension_numbers<[1], [0], [0], [1], [0, 0, 1, 1], [], []>} : vector<16x80xf32>, vector<80x128xf32>, vector<16x128xf32> -> vector<16x128xf32>
      %258 = vector.extract_strided_slice %257 {offsets = [0, 4], sizes = [16, 124], strides = [1, 1]} : vector<16x128xf32> to vector<16x124xf32>
      %259 = vector.extract_strided_slice %257 {offsets = [0, 0], sizes = [16, 4], strides = [1, 1]} : vector<16x128xf32> to vector<16x4xf32>
      %260 = tpu.concatenate %258, %259 in 1 : vector<16x124xf32>, vector<16x4xf32> -> vector<16x128xf32>
      %261 = arith.addf %254, %260 : vector<16x128xf32>
      %c5_154 = arith.constant 5 : index
      %c0_155 = arith.constant 0 : index
      %c0_156 = arith.constant 0 : index
      %262 = vector.load %arg8[%c5_154, %c0_155, %c0_156] : memref<10x16x80xf32, #tpu.memory_space<vmem>>, vector<1x16x80xf32>
      %263 = vector.shape_cast %262 : vector<1x16x80xf32> to vector<16x80xf32>
      %cst_157 = arith.constant dense<0.000000e+00> : vector<16x128xf32>
      %264 = tpu.matmul %263, %230, %cst_157 {dimension_numbers = #tpu.dot_dimension_numbers<[1], [0], [0], [1], [0, 0, 1, 1], [], []>} : vector<16x80xf32>, vector<80x128xf32>, vector<16x128xf32> -> vector<16x128xf32>
      %265 = vector.extract_strided_slice %264 {offsets = [0, 5], sizes = [16, 123], strides = [1, 1]} : vector<16x128xf32> to vector<16x123xf32>
      %266 = vector.extract_strided_slice %264 {offsets = [0, 0], sizes = [16, 5], strides = [1, 1]} : vector<16x128xf32> to vector<16x5xf32>
      %267 = tpu.concatenate %265, %266 in 1 : vector<16x123xf32>, vector<16x5xf32> -> vector<16x128xf32>
      %268 = arith.addf %261, %267 : vector<16x128xf32>
      %c6_158 = arith.constant 6 : index
      %c0_159 = arith.constant 0 : index
      %c0_160 = arith.constant 0 : index
      %269 = vector.load %arg8[%c6_158, %c0_159, %c0_160] : memref<10x16x80xf32, #tpu.memory_space<vmem>>, vector<1x16x80xf32>
      %270 = vector.shape_cast %269 : vector<1x16x80xf32> to vector<16x80xf32>
      %cst_161 = arith.constant dense<0.000000e+00> : vector<16x128xf32>
      %271 = tpu.matmul %270, %230, %cst_161 {dimension_numbers = #tpu.dot_dimension_numbers<[1], [0], [0], [1], [0, 0, 1, 1], [], []>} : vector<16x80xf32>, vector<80x128xf32>, vector<16x128xf32> -> vector<16x128xf32>
      %272 = vector.extract_strided_slice %271 {offsets = [0, 6], sizes = [16, 122], strides = [1, 1]} : vector<16x128xf32> to vector<16x122xf32>
      %273 = vector.extract_strided_slice %271 {offsets = [0, 0], sizes = [16, 6], strides = [1, 1]} : vector<16x128xf32> to vector<16x6xf32>
      %274 = tpu.concatenate %272, %273 in 1 : vector<16x122xf32>, vector<16x6xf32> -> vector<16x128xf32>
      %275 = arith.addf %268, %274 : vector<16x128xf32>
      %c7 = arith.constant 7 : index
      %c0_162 = arith.constant 0 : index
      %c0_163 = arith.constant 0 : index
      %276 = vector.load %arg8[%c7, %c0_162, %c0_163] : memref<10x16x80xf32, #tpu.memory_space<vmem>>, vector<1x16x80xf32>
      %277 = vector.shape_cast %276 : vector<1x16x80xf32> to vector<16x80xf32>
      %cst_164 = arith.constant dense<0.000000e+00> : vector<16x128xf32>
      %278 = tpu.matmul %277, %230, %cst_164 {dimension_numbers = #tpu.dot_dimension_numbers<[1], [0], [0], [1], [0, 0, 1, 1], [], []>} : vector<16x80xf32>, vector<80x128xf32>, vector<16x128xf32> -> vector<16x128xf32>
      %279 = vector.extract_strided_slice %278 {offsets = [0, 7], sizes = [16, 121], strides = [1, 1]} : vector<16x128xf32> to vector<16x121xf32>
      %280 = vector.extract_strided_slice %278 {offsets = [0, 0], sizes = [16, 7], strides = [1, 1]} : vector<16x128xf32> to vector<16x7xf32>
      %281 = tpu.concatenate %279, %280 in 1 : vector<16x121xf32>, vector<16x7xf32> -> vector<16x128xf32>
      %282 = arith.addf %275, %281 : vector<16x128xf32>
      %c8 = arith.constant 8 : index
      %c0_165 = arith.constant 0 : index
      %c0_166 = arith.constant 0 : index
      %283 = vector.load %arg8[%c8, %c0_165, %c0_166] : memref<10x16x80xf32, #tpu.memory_space<vmem>>, vector<1x16x80xf32>
      %284 = vector.shape_cast %283 : vector<1x16x80xf32> to vector<16x80xf32>
      %cst_167 = arith.constant dense<0.000000e+00> : vector<16x128xf32>
      %285 = tpu.matmul %284, %230, %cst_167 {dimension_numbers = #tpu.dot_dimension_numbers<[1], [0], [0], [1], [0, 0, 1, 1], [], []>} : vector<16x80xf32>, vector<80x128xf32>, vector<16x128xf32> -> vector<16x128xf32>
      %286 = vector.extract_strided_slice %285 {offsets = [0, 8], sizes = [16, 120], strides = [1, 1]} : vector<16x128xf32> to vector<16x120xf32>
      %287 = vector.extract_strided_slice %285 {offsets = [0, 0], sizes = [16, 8], strides = [1, 1]} : vector<16x128xf32> to vector<16x8xf32>
      %288 = tpu.concatenate %286, %287 in 1 : vector<16x120xf32>, vector<16x8xf32> -> vector<16x128xf32>
      %289 = arith.addf %282, %288 : vector<16x128xf32>
      %c9_168 = arith.constant 9 : index
      %c0_169 = arith.constant 0 : index
      %c0_170 = arith.constant 0 : index
      %290 = vector.load %arg8[%c9_168, %c0_169, %c0_170] : memref<10x16x80xf32, #tpu.memory_space<vmem>>, vector<1x16x80xf32>
      %291 = vector.shape_cast %290 : vector<1x16x80xf32> to vector<16x80xf32>
      %cst_171 = arith.constant dense<0.000000e+00> : vector<16x128xf32>
      %292 = tpu.matmul %291, %230, %cst_171 {dimension_numbers = #tpu.dot_dimension_numbers<[1], [0], [0], [1], [0, 0, 1, 1], [], []>} : vector<16x80xf32>, vector<80x128xf32>, vector<16x128xf32> -> vector<16x128xf32>
      %293 = vector.extract_strided_slice %292 {offsets = [0, 9], sizes = [16, 119], strides = [1, 1]} : vector<16x128xf32> to vector<16x119xf32>
      %294 = vector.extract_strided_slice %292 {offsets = [0, 0], sizes = [16, 9], strides = [1, 1]} : vector<16x128xf32> to vector<16x9xf32>
      %295 = tpu.concatenate %293, %294 in 1 : vector<16x119xf32>, vector<16x9xf32> -> vector<16x128xf32>
      %296 = arith.addf %289, %295 : vector<16x128xf32>
      %297 = arith.mulf %296, %131 : vector<16x128xf32>
      %298 = arith.addf %297, %135 : vector<16x128xf32>
      %c0_i32_172 = arith.constant 0 : i32
      %299 = arith.addi %c0_i32_172, %arg20 : i32
      %300 = arith.index_cast %299 : i32 to index
      %c0_173 = arith.constant 0 : index
      %c0_174 = arith.constant 0 : index
      %301 = vector.load %arg19[%300, %c0_173, %c0_174] : memref<18x16x128xf32, #tpu.memory_space<vmem>>, vector<1x16x128xf32>
      %302 = vector.shape_cast %301 : vector<1x16x128xf32> to vector<16x128xf32>
      %303 = vector.shape_cast %298 : vector<16x128xf32> to vector<1x16x128xf32>
      tpu.vector_store %arg19[%300, %c0_173, %c0_174], %303 {strides = array<i32>} : memref<18x16x128xf32, #tpu.memory_space<vmem>>, vector<1x16x128xf32>,
    }
    %c18_i32_73 = arith.constant 18 : i32
    %c0_74 = arith.constant 0 : index
    %c0_75 = arith.constant 0 : index
    %137 = vector.load %arg11[%c0_74, %c0_75] : memref<1x200xf32, #tpu.memory_space<vmem>>, vector<1x200xf32>
    %138 = vector.shape_cast %137 : vector<1x200xf32> to vector<1x200xf32>
    %139 = vector.broadcast %138 : vector<1x200xf32> to vector<2x200xf32>
    %c0_76 = arith.constant 0 : index
    %c0_77 = arith.constant 0 : index
    %c0_78 = arith.constant 0 : index
    %140 = vector.load %arg19[%c0_76, %c0_77, %c0_78] : memref<18x16x128xf32, #tpu.memory_space<vmem>>, vector<3x16x128xf32>
    %cst_79 = arith.constant dense<0.000000e+00> : vector<128xf32>
    %141 = vector.multi_reduction <add>, %140, %cst_79 [0, 1] : vector<3x16x128xf32> to vector<128xf32>
    %142 = vector.shape_cast %141 : vector<128xf32> to vector<1x1x128xf32>
    %cst_80 = arith.constant 0.020833334 : f32
    %143 = vector.broadcast %cst_80 : f32 to vector<1x1x128xf32>
    %144 = arith.mulf %142, %143 : vector<1x1x128xf32>
    %145 = vector.shape_cast %144 : vector<1x1x128xf32> to vector<1x128xf32>
    %146 = vector.extract_strided_slice %145 {offsets = [0, 0], sizes = [1, 49], strides = [1, 1]} : vector<1x128xf32> to vector<1x49xf32>
    %147 = vector.extract_strided_slice %145 {offsets = [0, 64], sizes = [1, 49], strides = [1, 1]} : vector<1x128xf32> to vector<1x49xf32>
    %148 = tpu.concatenate %146, %147 in 0 : vector<1x49xf32>, vector<1x49xf32> -> vector<2x49xf32>
    %c0_81 = arith.constant 0 : index
    %c0_82 = arith.constant 0 : index
    %c0_83 = arith.constant 0 : index
    %149 = vector.load %arg10[%c0_81, %c0_82, %c0_83] : memref<6x49x200xf32, #tpu.memory_space<vmem>>, vector<1x49x200xf32>
    %150 = vector.shape_cast %149 : vector<1x49x200xf32> to vector<49x200xf32>
    %cst_84 = arith.constant dense<0.000000e+00> : vector<2x200xf32>
    %151 = tpu.matmul %148, %150, %cst_84 {dimension_numbers = #tpu.dot_dimension_numbers<[1], [0], [0], [1], [0, 0, 1, 1], [], []>} : vector<2x49xf32>, vector<49x200xf32>, vector<2x200xf32> -> vector<2x200xf32>
    %152 = arith.addf %139, %151 : vector<2x200xf32>
    %c3 = arith.constant 3 : index
    %c0_85 = arith.constant 0 : index
    %c0_86 = arith.constant 0 : index
    %153 = vector.load %arg19[%c3, %c0_85, %c0_86] : memref<18x16x128xf32, #tpu.memory_space<vmem>>, vector<3x16x128xf32>
    %cst_87 = arith.constant dense<0.000000e+00> : vector<128xf32>
    %154 = vector.multi_reduction <add>, %153, %cst_87 [0, 1] : vector<3x16x128xf32> to vector<128xf32>
    %155 = vector.shape_cast %154 : vector<128xf32> to vector<1x1x128xf32>
    %cst_88 = arith.constant 0.020833334 : f32
    %156 = vector.broadcast %cst_88 : f32 to vector<1x1x128xf32>
    %157 = arith.mulf %155, %156 : vector<1x1x128xf32>
    %158 = vector.shape_cast %157 : vector<1x1x128xf32> to vector<1x128xf32>
    %159 = vector.extract_strided_slice %158 {offsets = [0, 0], sizes = [1, 49], strides = [1, 1]} : vector<1x128xf32> to vector<1x49xf32>
    %160 = vector.extract_strided_slice %158 {offsets = [0, 64], sizes = [1, 49], strides = [1, 1]} : vector<1x128xf32> to vector<1x49xf32>
    %161 = tpu.concatenate %159, %160 in 0 : vector<1x49xf32>, vector<1x49xf32> -> vector<2x49xf32>
    %c1_89 = arith.constant 1 : index
    %c0_90 = arith.constant 0 : index
    %c0_91 = arith.constant 0 : index
    %162 = vector.load %arg10[%c1_89, %c0_90, %c0_91] : memref<6x49x200xf32, #tpu.memory_space<vmem>>, vector<1x49x200xf32>
    %163 = vector.shape_cast %162 : vector<1x49x200xf32> to vector<49x200xf32>
    %cst_92 = arith.constant dense<0.000000e+00> : vector<2x200xf32>
    %164 = tpu.matmul %161, %163, %cst_92 {dimension_numbers = #tpu.dot_dimension_numbers<[1], [0], [0], [1], [0, 0, 1, 1], [], []>} : vector<2x49xf32>, vector<49x200xf32>, vector<2x200xf32> -> vector<2x200xf32>
    %165 = arith.addf %152, %164 : vector<2x200xf32>
    %c6 = arith.constant 6 : index
    %c0_93 = arith.constant 0 : index
    %c0_94 = arith.constant 0 : index
    %166 = vector.load %arg19[%c6, %c0_93, %c0_94] : memref<18x16x128xf32, #tpu.memory_space<vmem>>, vector<3x16x128xf32>
    %cst_95 = arith.constant dense<0.000000e+00> : vector<128xf32>
    %167 = vector.multi_reduction <add>, %166, %cst_95 [0, 1] : vector<3x16x128xf32> to vector<128xf32>
    %168 = vector.shape_cast %167 : vector<128xf32> to vector<1x1x128xf32>
    %cst_96 = arith.constant 0.020833334 : f32
    %169 = vector.broadcast %cst_96 : f32 to vector<1x1x128xf32>
    %170 = arith.mulf %168, %169 : vector<1x1x128xf32>
    %171 = vector.shape_cast %170 : vector<1x1x128xf32> to vector<1x128xf32>
    %172 = vector.extract_strided_slice %171 {offsets = [0, 0], sizes = [1, 49], strides = [1, 1]} : vector<1x128xf32> to vector<1x49xf32>
    %173 = vector.extract_strided_slice %171 {offsets = [0, 64], sizes = [1, 49], strides = [1, 1]} : vector<1x128xf32> to vector<1x49xf32>
    %174 = tpu.concatenate %172, %173 in 0 : vector<1x49xf32>, vector<1x49xf32> -> vector<2x49xf32>
    %c2 = arith.constant 2 : index
    %c0_97 = arith.constant 0 : index
    %c0_98 = arith.constant 0 : index
    %175 = vector.load %arg10[%c2, %c0_97, %c0_98] : memref<6x49x200xf32, #tpu.memory_space<vmem>>, vector<1x49x200xf32>
    %176 = vector.shape_cast %175 : vector<1x49x200xf32> to vector<49x200xf32>
    %cst_99 = arith.constant dense<0.000000e+00> : vector<2x200xf32>
    %177 = tpu.matmul %174, %176, %cst_99 {dimension_numbers = #tpu.dot_dimension_numbers<[1], [0], [0], [1], [0, 0, 1, 1], [], []>} : vector<2x49xf32>, vector<49x200xf32>, vector<2x200xf32> -> vector<2x200xf32>
    %178 = arith.addf %165, %177 : vector<2x200xf32>
    %c9 = arith.constant 9 : index
    %c0_100 = arith.constant 0 : index
    %c0_101 = arith.constant 0 : index
    %179 = vector.load %arg19[%c9, %c0_100, %c0_101] : memref<18x16x128xf32, #tpu.memory_space<vmem>>, vector<3x16x128xf32>
    %cst_102 = arith.constant dense<0.000000e+00> : vector<128xf32>
    %180 = vector.multi_reduction <add>, %179, %cst_102 [0, 1] : vector<3x16x128xf32> to vector<128xf32>
    %181 = vector.shape_cast %180 : vector<128xf32> to vector<1x1x128xf32>
    %cst_103 = arith.constant 0.020833334 : f32
    %182 = vector.broadcast %cst_103 : f32 to vector<1x1x128xf32>
    %183 = arith.mulf %181, %182 : vector<1x1x128xf32>
    %184 = vector.shape_cast %183 : vector<1x1x128xf32> to vector<1x128xf32>
    %185 = vector.extract_strided_slice %184 {offsets = [0, 0], sizes = [1, 49], strides = [1, 1]} : vector<1x128xf32> to vector<1x49xf32>
    %186 = vector.extract_strided_slice %184 {offsets = [0, 64], sizes = [1, 49], strides = [1, 1]} : vector<1x128xf32> to vector<1x49xf32>
    %187 = tpu.concatenate %185, %186 in 0 : vector<1x49xf32>, vector<1x49xf32> -> vector<2x49xf32>
    %c3_104 = arith.constant 3 : index
    %c0_105 = arith.constant 0 : index
    %c0_106 = arith.constant 0 : index
    %188 = vector.load %arg10[%c3_104, %c0_105, %c0_106] : memref<6x49x200xf32, #tpu.memory_space<vmem>>, vector<1x49x200xf32>
    %189 = vector.shape_cast %188 : vector<1x49x200xf32> to vector<49x200xf32>
    %cst_107 = arith.constant dense<0.000000e+00> : vector<2x200xf32>
    %190 = tpu.matmul %187, %189, %cst_107 {dimension_numbers = #tpu.dot_dimension_numbers<[1], [0], [0], [1], [0, 0, 1, 1], [], []>} : vector<2x49xf32>, vector<49x200xf32>, vector<2x200xf32> -> vector<2x200xf32>
    %191 = arith.addf %178, %190 : vector<2x200xf32>
    %c12_108 = arith.constant 12 : index
    %c0_109 = arith.constant 0 : index
    %c0_110 = arith.constant 0 : index
    %192 = vector.load %arg19[%c12_108, %c0_109, %c0_110] : memref<18x16x128xf32, #tpu.memory_space<vmem>>, vector<3x16x128xf32>
    %cst_111 = arith.constant dense<0.000000e+00> : vector<128xf32>
    %193 = vector.multi_reduction <add>, %192, %cst_111 [0, 1] : vector<3x16x128xf32> to vector<128xf32>
    %194 = vector.shape_cast %193 : vector<128xf32> to vector<1x1x128xf32>
    %cst_112 = arith.constant 0.020833334 : f32
    %195 = vector.broadcast %cst_112 : f32 to vector<1x1x128xf32>
    %196 = arith.mulf %194, %195 : vector<1x1x128xf32>
    %197 = vector.shape_cast %196 : vector<1x1x128xf32> to vector<1x128xf32>
    %198 = vector.extract_strided_slice %197 {offsets = [0, 0], sizes = [1, 49], strides = [1, 1]} : vector<1x128xf32> to vector<1x49xf32>
    %199 = vector.extract_strided_slice %197 {offsets = [0, 64], sizes = [1, 49], strides = [1, 1]} : vector<1x128xf32> to vector<1x49xf32>
    %200 = tpu.concatenate %198, %199 in 0 : vector<1x49xf32>, vector<1x49xf32> -> vector<2x49xf32>
    %c4 = arith.constant 4 : index
    %c0_113 = arith.constant 0 : index
    %c0_114 = arith.constant 0 : index
    %201 = vector.load %arg10[%c4, %c0_113, %c0_114] : memref<6x49x200xf32, #tpu.memory_space<vmem>>, vector<1x49x200xf32>
    %202 = vector.shape_cast %201 : vector<1x49x200xf32> to vector<49x200xf32>
    %cst_115 = arith.constant dense<0.000000e+00> : vector<2x200xf32>
    %203 = tpu.matmul %200, %202, %cst_115 {dimension_numbers = #tpu.dot_dimension_numbers<[1], [0], [0], [1], [0, 0, 1, 1], [], []>} : vector<2x49xf32>, vector<49x200xf32>, vector<2x200xf32> -> vector<2x200xf32>
    %204 = arith.addf %191, %203 : vector<2x200xf32>
    %c15 = arith.constant 15 : index
    %c0_116 = arith.constant 0 : index
    %c0_117 = arith.constant 0 : index
    %205 = vector.load %arg19[%c15, %c0_116, %c0_117] : memref<18x16x128xf32, #tpu.memory_space<vmem>>, vector<3x16x128xf32>
    %cst_118 = arith.constant dense<0.000000e+00> : vector<128xf32>
    %206 = vector.multi_reduction <add>, %205, %cst_118 [0, 1] : vector<3x16x128xf32> to vector<128xf32>
    %207 = vector.shape_cast %206 : vector<128xf32> to vector<1x1x128xf32>
    %cst_119 = arith.constant 0.020833334 : f32
    %208 = vector.broadcast %cst_119 : f32 to vector<1x1x128xf32>
    %209 = arith.mulf %207, %208 : vector<1x1x128xf32>
    %210 = vector.shape_cast %209 : vector<1x1x128xf32> to vector<1x128xf32>
    %211 = vector.extract_strided_slice %210 {offsets = [0, 0], sizes = [1, 49], strides = [1, 1]} : vector<1x128xf32> to vector<1x49xf32>
    %212 = vector.extract_strided_slice %210 {offsets = [0, 64], sizes = [1, 49], strides = [1, 1]} : vector<1x128xf32> to vector<1x49xf32>
    %213 = tpu.concatenate %211, %212 in 0 : vector<1x49xf32>, vector<1x49xf32> -> vector<2x49xf32>
    %c5 = arith.constant 5 : index
    %c0_120 = arith.constant 0 : index
    %c0_121 = arith.constant 0 : index
    %214 = vector.load %arg10[%c5, %c0_120, %c0_121] : memref<6x49x200xf32, #tpu.memory_space<vmem>>, vector<1x49x200xf32>
    %215 = vector.shape_cast %214 : vector<1x49x200xf32> to vector<49x200xf32>
    %cst_122 = arith.constant dense<0.000000e+00> : vector<2x200xf32>
    %216 = tpu.matmul %213, %215, %cst_122 {dimension_numbers = #tpu.dot_dimension_numbers<[1], [0], [0], [1], [0, 0, 1, 1], [], []>} : vector<2x49xf32>, vector<49x200xf32>, vector<2x200xf32> -> vector<2x200xf32>
    %217 = arith.addf %204, %216 : vector<2x200xf32>
    %cst_123 = arith.constant 0.000000e+00 : f32
    %218 = vector.broadcast %cst_123 : f32 to vector<2x200xf32>
    %219 = arith.maximumf %217, %218 : vector<2x200xf32>
    %c0_124 = arith.constant 0 : index
    %c0_125 = arith.constant 0 : index
    %220 = vector.load %arg12[%c0_124, %c0_125] : memref<200x2xf32, #tpu.memory_space<vmem>>, vector<200x2xf32>
    %cst_126 = arith.constant dense<0.000000e+00> : vector<2x2xf32>
    %221 = tpu.matmul %219, %220, %cst_126 {dimension_numbers = #tpu.dot_dimension_numbers<[1], [0], [0], [1], [0, 0, 1, 1], [], []>} : vector<2x200xf32>, vector<200x2xf32>, vector<2x2xf32> -> vector<2x2xf32>
    %c0_127 = arith.constant 0 : index
    %c0_128 = arith.constant 0 : index
    %222 = vector.load %arg13[%c0_127, %c0_128] : memref<1x2xf32, #tpu.memory_space<vmem>>, vector<1x2xf32>
    %223 = vector.broadcast %222 : vector<1x2xf32> to vector<2x2xf32>
    %224 = arith.addf %221, %223 : vector<2x2xf32>
    %c0_129 = arith.constant 0 : index
    %c0_130 = arith.constant 0 : index
    %c0_131 = arith.constant 0 : index
    %225 = vector.load %arg14[%c0_129, %c0_130, %c0_131] : memref<1x2x2xf32, #tpu.memory_space<vmem>>, vector<1x2x2xf32>
    %226 = vector.shape_cast %225 : vector<1x2x2xf32> to vector<2x2xf32>
    %227 = vector.shape_cast %224 : vector<2x2xf32> to vector<1x2x2xf32>
    tpu.vector_store %arg14[%c0_129, %c0_130, %c0_131], %227 {strides = array<i32>} : memref<1x2x2xf32, #tpu.memory_space<vmem>>, vector<1x2x2xf32>,
    return
  }
  func.func @transform_0(%arg0: i32) -> (i32, i32, i32, i32) {
    %c0_i32 = arith.constant 0 : i32
    %c0_i32_0 = arith.constant 0 : i32
    %c0_i32_1 = arith.constant 0 : i32
    %c0_i32_2 = arith.constant 0 : i32
    return %arg0, %c0_i32, %c0_i32_0, %c0_i32_1 : i32, i32, i32, i32
  }
  func.func @transform_1(%arg0: i32) -> (i32, i32, i32) {
    %c0_i32 = arith.constant 0 : i32
    %c0_i32_0 = arith.constant 0 : i32
    %c0_i32_1 = arith.constant 0 : i32
    %c0_i32_2 = arith.constant 0 : i32
    return %c0_i32, %c0_i32_0, %c0_i32_1 : i32, i32, i32
  }
  func.func @transform_2(%arg0: i32) -> (i32, i32) {
    %c0_i32 = arith.constant 0 : i32
    %c0_i32_0 = arith.constant 0 : i32
    %c0_i32_1 = arith.constant 0 : i32
    return %c0_i32, %c0_i32_0 : i32, i32
  }
  func.func @transform_3(%arg0: i32) -> (i32, i32, i32) {
    %c0_i32 = arith.constant 0 : i32
    %c0_i32_0 = arith.constant 0 : i32
    %c0_i32_1 = arith.constant 0 : i32
    %c0_i32_2 = arith.constant 0 : i32
    return %c0_i32, %c0_i32_0, %c0_i32_1 : i32, i32, i32
  }
  func.func @transform_4(%arg0: i32) -> (i32, i32) {
    %c0_i32 = arith.constant 0 : i32
    %c0_i32_0 = arith.constant 0 : i32
    %c0_i32_1 = arith.constant 0 : i32
    return %c0_i32, %c0_i32_0 : i32, i32
  }
  func.func @transform_5(%arg0: i32) -> (i32, i32, i32) {
    %c0_i32 = arith.constant 0 : i32
    %c0_i32_0 = arith.constant 0 : i32
    %c0_i32_1 = arith.constant 0 : i32
    %c0_i32_2 = arith.constant 0 : i32
    return %c0_i32, %c0_i32_0, %c0_i32_1 : i32, i32, i32
  }
  func.func @transform_6(%arg0: i32) -> (i32, i32) {
    %c0_i32 = arith.constant 0 : i32
    %c0_i32_0 = arith.constant 0 : i32
    %c0_i32_1 = arith.constant 0 : i32
    return %c0_i32, %c0_i32_0 : i32, i32
  }
  func.func @transform_7(%arg0: i32) -> (i32, i32, i32) {
    %c0_i32 = arith.constant 0 : i32
    %c0_i32_0 = arith.constant 0 : i32
    %c0_i32_1 = arith.constant 0 : i32
    %c0_i32_2 = arith.constant 0 : i32
    return %c0_i32, %c0_i32_0, %c0_i32_1 : i32, i32, i32
  }
  func.func @transform_8(%arg0: i32) -> (i32, i32) {
    %c0_i32 = arith.constant 0 : i32
    %c0_i32_0 = arith.constant 0 : i32
    %c0_i32_1 = arith.constant 0 : i32
    return %c0_i32, %c0_i32_0 : i32, i32
  }
  func.func @transform_9(%arg0: i32) -> (i32, i32, i32) {
    %c0_i32 = arith.constant 0 : i32
    %c0_i32_0 = arith.constant 0 : i32
    %c0_i32_1 = arith.constant 0 : i32
    %c0_i32_2 = arith.constant 0 : i32
    return %c0_i32, %c0_i32_0, %c0_i32_1 : i32, i32, i32
  }
  func.func @transform_10(%arg0: i32) -> (i32, i32) {
    %c0_i32 = arith.constant 0 : i32
    %c0_i32_0 = arith.constant 0 : i32
    %c0_i32_1 = arith.constant 0 : i32
    return %c0_i32, %c0_i32_0 : i32, i32
  }
  func.func @transform_11(%arg0: i32) -> (i32, i32) {
    %c0_i32 = arith.constant 0 : i32
    %c0_i32_0 = arith.constant 0 : i32
    %c0_i32_1 = arith.constant 0 : i32
    return %c0_i32, %c0_i32_0 : i32, i32
  }
  func.func @transform_12(%arg0: i32) -> (i32, i32) {
    %c0_i32 = arith.constant 0 : i32
    %c0_i32_0 = arith.constant 0 : i32
    %c0_i32_1 = arith.constant 0 : i32
    return %c0_i32, %c0_i32_0 : i32, i32
  }
  func.func @transform_13(%arg0: i32) -> (i32, i32, i32) {
    %c0_i32 = arith.constant 0 : i32
    %c0_i32_0 = arith.constant 0 : i32
    %c0_i32_1 = arith.constant 0 : i32
    return %arg0, %c0_i32, %c0_i32_0 : i32, i32, i32
  }
}

</mosaic_0001>

<llo_original>
// kernel: net_forward.1
$region0: #{net_forward.1}
  #allocation0 [shape = 'u32[]', space=smem, size = 0x4, offset = 0x4, fixed_abs, tag = 'smem constant byte address 0x4 - core index']
  #allocation1 [shape = 'u32[144,128]{1,0:T(1,128)}', space=vmem, size = 0x12000, scoped, tag = 'internal scratch']
  #allocation2 [shape = 'f32[18,8,128]{2,1,0:T(8,128)}', space=vmem, size = 0x12000, scoped, tag = 'scratch operand']
  #allocation3 [shape = 'f32[20,8,128]{2,1,0:T(8,128)}', space=vmem, size = 0x14000, scoped, tag = 'scratch operand']
  #allocation4 [shape = 'f32[24,8,128]{2,1,0:T(8,128)}', space=vmem, size = 0x18000, scoped, tag = 'scratch operand']
  #allocation5 [shape = 'f32[27,8,128]{2,1,0:T(8,128)}', space=vmem, size = 0x1b000, scoped, tag = 'scratch operand']
  #allocation6 [shape = 'f32[18,16,128]{2,1,0:T(8,128)}', space=vmem, size = 0x24000, scoped, tag = 'scratch operand']
  %s0 = inlined_call_operand.vmem [shape: f32[2,2,16,47], index: 0, kind: input, shape index: {}]
  %s1 = inlined_call_operand.hbm [shape: f32[3,8,24], index: 1, kind: input, shape index: {}]
  %s2 = inlined_call_operand.vmem [shape: f32[8,1], index: 2, kind: input, shape index: {}]
  %s3 = inlined_call_operand.vmem [shape: f32[5,8,40], index: 3, kind: input, shape index: {}]
  %s4 = inlined_call_operand.vmem [shape: f32[8,1], index: 4, kind: input, shape index: {}]
  %s5 = inlined_call_operand.hbm [shape: f32[8,8,64], index: 5, kind: input, shape index: {}]
  %s6 = inlined_call_operand.vmem [shape: f32[8,1], index: 6, kind: input, shape index: {}]
  %s7 = inlined_call_operand.vmem [shape: f32[10,16,80], index: 7, kind: input, shape index: {}]
  %s8 = inlined_call_operand.vmem [shape: f32[16,1], index: 8, kind: input, shape index: {}]
  %s9 = inlined_call_operand.hbm [shape: f32[6,49,200], index: 9, kind: input, shape index: {}]
  %s10 = inlined_call_operand.vmem [shape: f32[1,200], index: 10, kind: input, shape index: {}]
  %s11 = inlined_call_operand.vmem [shape: f32[200,2], index: 11, kind: input, shape index: {}]
  %s12 = inlined_call_operand.vmem [shape: f32[1,2], index: 12, kind: input, shape index: {}]
  %s13 = inlined_call_operand.vmem [shape: f32[2,2,2], index: 13, kind: output, shape index: {}]
  %s14 = sld [smem:[#allocation0]]
  $region125: #{net_forward.1} parent=0
    _
  %s16 = ssub.s32 1, %s14
  %s17 = scalar_select 0, %s16, %s14
  $region1: #{net_forward.1} parent=0
    #allocation7 [shape = 'u8[12288]{0}', space=vmem, size = 0x3000, scoped, tag = 'input window, operand 1, single buffered']
    #allocation8 [shape = 's32[2]{0}', space=sflag, size = 0x8, scoped, tag = 'scoped memory for net_forward.1']
    #allocation9 [shape = 'u8[32768]{0}', space=vmem, size = 0x8000, scoped, tag = 'input window, operand 5, single buffered']
    #allocation10 [shape = 's32[1]{0}', space=sflag, size = 0x4, scoped, tag = 'scoped memory for net_forward.1']
    #allocation11 [shape = 'u8[344064]{0}', space=vmem, size = 0x54000, scoped, tag = 'input window, operand 9, single buffered']
    %18 = vsyncpa [#allocation8], 0
    %19 = vsyncpa [#allocation10], 0
    loop: start=0, step=1, limit=4
    $region2: #{net_forward.1} parent=1 // loop_pre_header
      _
    $region3: #{net_forward.1} parent=1 // loop_header
      %s21 = sphi 0, %s25
      %p22 = scmp.ge.s32.totalorder %s21, 4
      %s31 = sphi 0, %s33
      %s34 = sphi 0, %s31
      %s35 = sphi 0, %s34
      %s51 = sphi 0, %s35
      %s55 = sphi 0, %s55
      %s57 = sphi 0, %s55
      %s58 = sphi 0, %s57
      %s72 = sphi 0, %s58
      %s76 = sphi 0, %s76
      %s78 = sphi 0, %s76
      %s79 = sphi 0, %s78
      %s93 = sphi 0, %s79
      %s97 = sphi 0, %s97
      %s99 = sphi 0, %s97
      %s100 = sphi 0, %s99
      %s114 = sphi 0, %s100
      %s118 = sphi 0, %s118
      %s120 = sphi 0, %s118
      %s121 = sphi 0, %s120
      %s135 = sphi 0, %s121
      %s139 = sphi 0, %s139
      %s141 = sphi 0, %s139
      %s142 = sphi 0, %s141
      %s156 = sphi 0, %s142
      %s160 = sphi 0, %s160
      %s162 = sphi 0, %s160
      %s163 = sphi 0, %s162
      %s177 = sphi 0, %s163
      %s181 = sphi 0, %s181
      %s183 = sphi 0, %s181
      %s184 = sphi 0, %s183
      %s198 = sphi 0, %s184
      %s202 = sphi 0, %s202
      %s204 = sphi 0, %s202
      %s205 = sphi 0, %s204
      %s219 = sphi 0, %s205
      %s223 = sphi 0, %s223
      %s225 = sphi 0, %s223
      %s226 = sphi 0, %s225
      %s240 = sphi 0, %s226
      %s244 = sphi 0, %s244
      %s246 = sphi 0, %s244
      %s247 = sphi 0, %s246
      %s261 = sphi 0, %s247
      %s265 = sphi 0, %s265
      %s267 = sphi 0, %s265
      %s268 = sphi 0, %s267
      %s282 = sphi 0, %s268
      %s286 = sphi 0, %s286
      %s288 = sphi 0, %s286
      %s289 = sphi 0, %s288
      %s303 = sphi 0, %s289
      %s309 = sphi 0, %s311
      %s312 = sphi 0, %s309
      %s313 = sphi 0, %s312
      %s329 = sphi 0, %s313
    $region4: #{net_forward.1} parent=1 // loop_header_branch
      %24 = sbr.rel (%p22) target = $region8
    $region5: #{net_forward.1} parent=1 // loop_body
      %s26 = ssub.s32 %s21, 1
      %s27 = ssub.s32 %s21, 2
      %s28 = sadd.s32 %s21, 1
      %s29 = ssub.s32 %s21, %s28
      %p30 = scmp.eq.s32.totalorder %s29, 0
      %s32 = sadd.s32 %s31, 1
      %s33 = scalar_select %p30, %s31, %s32
      %p36 = pneg %p30
      %p37 = scmp.eq.s32.totalorder %s21, 1
      %p38 = por %p36, %p37
      %p39 = scmp.ne.s32.totalorder %s31, %s34
      %p40 = scmp.eq.s32.totalorder %s21, 0
      %p41 = por %p39, %p40
      %p42 = scmp.ne.s32.totalorder %s31, %s34
      %p43 = scmp.eq.s32.totalorder %s26, 1
      %p44 = por %p42, %p43
      %p45 = scmp.ne.s32.totalorder %s34, %s35
      %p46 = scmp.eq.s32.totalorder %s26, 0
      %p47 = por %p45, %p46
      %p48 = scmp.ne.s32.totalorder %s34, %s35
      %p49 = scmp.eq.s32.totalorder %s27, 1
      %p50 = por %p48, %p49
      %p52 = scmp.ne.s32.totalorder %s35, %s51
      %p53 = scmp.eq.s32.totalorder %s27, 0
      %p54 = por %p52, %p53
      %s56 = sadd.s32 %s55, 1
      %p59 = scmp.eq.s32.totalorder %s21, 1
      %p60 = scmp.ne.s32.totalorder %s55, %s57
      %p61 = scmp.eq.s32.totalorder %s21, 0
      %p62 = por %p60, %p61
      %p63 = scmp.ne.s32.totalorder %s55, %s57
      %p64 = scmp.eq.s32.totalorder %s26, 1
      %p65 = por %p63, %p64
      %p66 = scmp.ne.s32.totalorder %s57, %s58
      %p67 = scmp.eq.s32.totalorder %s26, 0
      %p68 = por %p66, %p67
      %p69 = scmp.ne.s32.totalorder %s57, %s58
      %p70 = scmp.eq.s32.totalorder %s27, 1
      %p71 = por %p69, %p70
      %p73 = scmp.ne.s32.totalorder %s58, %s72
      %p74 = scmp.eq.s32.totalorder %s27, 0
      %p75 = por %p73, %p74
      %s77 = sadd.s32 %s76, 1
      %p80 = scmp.eq.s32.totalorder %s21, 1
      %p81 = scmp.ne.s32.totalorder %s76, %s78
      %p82 = scmp.eq.s32.totalorder %s21, 0
      %p83 = por %p81, %p82
      %p84 = scmp.ne.s32.totalorder %s76, %s78
      %p85 = scmp.eq.s32.totalorder %s26, 1
      %p86 = por %p84, %p85
      %p87 = scmp.ne.s32.totalorder %s78, %s79
      %p88 = scmp.eq.s32.totalorder %s26, 0
      %p89 = por %p87, %p88
      %p90 = scmp.ne.s32.totalorder %s78, %s79
      %p91 = scmp.eq.s32.totalorder %s27, 1
      %p92 = por %p90, %p91
      %p94 = scmp.ne.s32.totalorder %s79, %s93
      %p95 = scmp.eq.s32.totalorder %s27, 0
      %p96 = por %p94, %p95
      %s98 = sadd.s32 %s97, 1
      %p101 = scmp.eq.s32.totalorder %s21, 1
      %p102 = scmp.ne.s32.totalorder %s97, %s99
      %p103 = scmp.eq.s32.totalorder %s21, 0
      %p104 = por %p102, %p103
      %p105 = scmp.ne.s32.totalorder %s97, %s99
      %p106 = scmp.eq.s32.totalorder %s26, 1
      %p107 = por %p105, %p106
      %p108 = scmp.ne.s32.totalorder %s99, %s100
      %p109 = scmp.eq.s32.totalorder %s26, 0
      %p110 = por %p108, %p109
      %p111 = scmp.ne.s32.totalorder %s99, %s100
      %p112 = scmp.eq.s32.totalorder %s27, 1
      %p113 = por %p111, %p112
      %p115 = scmp.ne.s32.totalorder %s100, %s114
      %p116 = scmp.eq.s32.totalorder %s27, 0
      %p117 = por %p115, %p116
      %s119 = sadd.s32 %s118, 1
      %p122 = scmp.eq.s32.totalorder %s21, 1
      %p123 = scmp.ne.s32.totalorder %s118, %s120
      %p124 = scmp.eq.s32.totalorder %s21, 0
      %p125 = por %p123, %p124
      %p126 = scmp.ne.s32.totalorder %s118, %s120
      %p127 = scmp.eq.s32.totalorder %s26, 1
      %p128 = por %p126, %p127
      %p129 = scmp.ne.s32.totalorder %s120, %s121
      %p130 = scmp.eq.s32.totalorder %s26, 0
      %p131 = por %p129, %p130
      %p132 = scmp.ne.s32.totalorder %s120, %s121
      %p133 = scmp.eq.s32.totalorder %s27, 1
      %p134 = por %p132, %p133
      %p136 = scmp.ne.s32.totalorder %s121, %s135
      %p137 = scmp.eq.s32.totalorder %s27, 0
      %p138 = por %p136, %p137
      %s140 = sadd.s32 %s139, 1
      %p143 = scmp.eq.s32.totalorder %s21, 1
      %p144 = scmp.ne.s32.totalorder %s139, %s141
      %p145 = scmp.eq.s32.totalorder %s21, 0
      %p146 = por %p144, %p145
      %p147 = scmp.ne.s32.totalorder %s139, %s141
      %p148 = scmp.eq.s32.totalorder %s26, 1
      %p149 = por %p147, %p148
      %p150 = scmp.ne.s32.totalorder %s141, %s142
      %p151 = scmp.eq.s32.totalorder %s26, 0
      %p152 = por %p150, %p151
      %p153 = scmp.ne.s32.totalorder %s141, %s142
      %p154 = scmp.eq.s32.totalorder %s27, 1
      %p155 = por %p153, %p154
      %p157 = scmp.ne.s32.totalorder %s142, %s156
      %p158 = scmp.eq.s32.totalorder %s27, 0
      %p159 = por %p157, %p158
      %s161 = sadd.s32 %s160, 1
      %p164 = scmp.eq.s32.totalorder %s21, 1
      %p165 = scmp.ne.s32.totalorder %s160, %s162
      %p166 = scmp.eq.s32.totalorder %s21, 0
      %p167 = por %p165, %p166
      %p168 = scmp.ne.s32.totalorder %s160, %s162
      %p169 = scmp.eq.s32.totalorder %s26, 1
      %p170 = por %p168, %p169
      %p171 = scmp.ne.s32.totalorder %s162, %s163
      %p172 = scmp.eq.s32.totalorder %s26, 0
      %p173 = por %p171, %p172
      %p174 = scmp.ne.s32.totalorder %s162, %s163
      %p175 = scmp.eq.s32.totalorder %s27, 1
      %p176 = por %p174, %p175
      %p178 = scmp.ne.s32.totalorder %s163, %s177
      %p179 = scmp.eq.s32.totalorder %s27, 0
      %p180 = por %p178, %p179
      %s182 = sadd.s32 %s181, 1
      %p185 = scmp.eq.s32.totalorder %s21, 1
      %p186 = scmp.ne.s32.totalorder %s181, %s183
      %p187 = scmp.eq.s32.totalorder %s21, 0
      %p188 = por %p186, %p187
      %p189 = scmp.ne.s32.totalorder %s181, %s183
      %p190 = scmp.eq.s32.totalorder %s26, 1
      %p191 = por %p189, %p190
      %p192 = scmp.ne.s32.totalorder %s183, %s184
      %p193 = scmp.eq.s32.totalorder %s26, 0
      %p194 = por %p192, %p193
      %p195 = scmp.ne.s32.totalorder %s183, %s184
      %p196 = scmp.eq.s32.totalorder %s27, 1
      %p197 = por %p195, %p196
      %p199 = scmp.ne.s32.totalorder %s184, %s198
      %p200 = scmp.eq.s32.totalorder %s27, 0
      %p201 = por %p199, %p200
      %s203 = sadd.s32 %s202, 1
      %p206 = scmp.eq.s32.totalorder %s21, 1
      %p207 = scmp.ne.s32.totalorder %s202, %s204
      %p208 = scmp.eq.s32.totalorder %s21, 0
      %p209 = por %p207, %p208
      %p210 = scmp.ne.s32.totalorder %s202, %s204
      %p211 = scmp.eq.s32.totalorder %s26, 1
      %p212 = por %p210, %p211
      %p213 = scmp.ne.s32.totalorder %s204, %s205
      %p214 = scmp.eq.s32.totalorder %s26, 0
      %p215 = por %p213, %p214
      %p216 = scmp.ne.s32.totalorder %s204, %s205
      %p217 = scmp.eq.s32.totalorder %s27, 1
      %p218 = por %p216, %p217
      %p220 = scmp.ne.s32.totalorder %s205, %s219
      %p221 = scmp.eq.s32.totalorder %s27, 0
      %p222 = por %p220, %p221
      %s224 = sadd.s32 %s223, 1
      %p227 = scmp.eq.s32.totalorder %s21, 1
      %p228 = scmp.ne.s32.totalorder %s223, %s225
      %p229 = scmp.eq.s32.totalorder %s21, 0
      %p230 = por %p228, %p229
      %p231 = scmp.ne.s32.totalorder %s223, %s225
      %p232 = scmp.eq.s32.totalorder %s26, 1
      %p233 = por %p231, %p232
      %p234 = scmp.ne.s32.totalorder %s225, %s226
      %p235 = scmp.eq.s32.totalorder %s26, 0
      %p236 = por %p234, %p235
      %p237 = scmp.ne.s32.totalorder %s225, %s226
      %p238 = scmp.eq.s32.totalorder %s27, 1
      %p239 = por %p237, %p238
      %p241 = scmp.ne.s32.totalorder %s226, %s240
      %p242 = scmp.eq.s32.totalorder %s27, 0
      %p243 = por %p241, %p242
      %s245 = sadd.s32 %s244, 1
      %p248 = scmp.eq.s32.totalorder %s21, 1
      %p249 = scmp.ne.s32.totalorder %s244, %s246
      %p250 = scmp.eq.s32.totalorder %s21, 0
      %p251 = por %p249, %p250
      %p252 = scmp.ne.s32.totalorder %s244, %s246
      %p253 = scmp.eq.s32.totalorder %s26, 1
      %p254 = por %p252, %p253
      %p255 = scmp.ne.s32.totalorder %s246, %s247
      %p256 = scmp.eq.s32.totalorder %s26, 0
      %p257 = por %p255, %p256
      %p258 = scmp.ne.s32.totalorder %s246, %s247
      %p259 = scmp.eq.s32.totalorder %s27, 1
      %p260 = por %p258, %p259
      %p262 = scmp.ne.s32.totalorder %s247, %s261
      %p263 = scmp.eq.s32.totalorder %s27, 0
      %p264 = por %p262, %p263
      %s266 = sadd.s32 %s265, 1
      %p269 = scmp.eq.s32.totalorder %s21, 1
      %p270 = scmp.ne.s32.totalorder %s265, %s267
      %p271 = scmp.eq.s32.totalorder %s21, 0
      %p272 = por %p270, %p271
      %p273 = scmp.ne.s32.totalorder %s265, %s267
      %p274 = scmp.eq.s32.totalorder %s26, 1
      %p275 = por %p273, %p274
      %p276 = scmp.ne.s32.totalorder %s267, %s268
      %p277 = scmp.eq.s32.totalorder %s26, 0
      %p278 = por %p276, %p277
      %p279 = scmp.ne.s32.totalorder %s267, %s268
      %p280 = scmp.eq.s32.totalorder %s27, 1
      %p281 = por %p279, %p280
      %p283 = scmp.ne.s32.totalorder %s268, %s282
      %p284 = scmp.eq.s32.totalorder %s27, 0
      %p285 = por %p283, %p284
      %s287 = sadd.s32 %s286, 1
      %p290 = scmp.eq.s32.totalorder %s21, 1
      %p291 = scmp.ne.s32.totalorder %s286, %s288
      %p292 = scmp.eq.s32.totalorder %s21, 0
      %p293 = por %p291, %p292
      %p294 = scmp.ne.s32.totalorder %s286, %s288
      %p295 = scmp.eq.s32.totalorder %s26, 1
      %p296 = por %p294, %p295
      %p297 = scmp.ne.s32.totalorder %s288, %s289
      %p298 = scmp.eq.s32.totalorder %s26, 0
      %p299 = por %p297, %p298
      %p300 = scmp.ne.s32.totalorder %s288, %s289
      %p301 = scmp.eq.s32.totalorder %s27, 1
      %p302 = por %p300, %p301
      %p304 = scmp.ne.s32.totalorder %s289, %s303
      %p305 = scmp.eq.s32.totalorder %s27, 0
      %p306 = por %p304, %p305
      %s307 = ssub.s32 %s21, %s28
      %p308 = scmp.eq.s32.totalorder %s307, 0
      %s310 = sadd.s32 %s309, 1
      %s311 = scalar_select %p308, %s309, %s310
      %p314 = pneg %p308
      %p315 = scmp.eq.s32.totalorder %s21, 1
      %p316 = por %p314, %p315
      %p317 = scmp.ne.s32.totalorder %s309, %s312
      %p318 = scmp.eq.s32.totalorder %s21, 0
      %p319 = por %p317, %p318
      %p320 = scmp.ne.s32.totalorder %s309, %s312
      %p321 = scmp.eq.s32.totalorder %s26, 1
      %p322 = por %p320, %p321
      %p323 = scmp.ne.s32.totalorder %s312, %s313
      %p324 = scmp.eq.s32.totalorder %s26, 0
      %p325 = por %p323, %p324
      %p326 = scmp.ne.s32.totalorder %s312, %s313
      %p327 = scmp.eq.s32.totalorder %s27, 1
      %p328 = por %p326, %p327
      %p330 = scmp.ne.s32.totalorder %s313, %s329
      %p331 = scmp.eq.s32.totalorder %s27, 0
      %p332 = por %p330, %p331
      %p333 = scmp.le.s32.totalorder 1, %s21
      %p334 = scmp.lt.s32.totalorder %s21, 3
      %p335 = pnand %p333, %p334
      %p336 = pneg %p335
      // Predicated region
      $region9: #{net_forward.1} parent=5 // pred_check
        _
      $region10: #{net_forward.1} parent=5 // pred_check_branch
        %338 = sbr.rel (%p335) target = $region12
      $region11: #{net_forward.1} parent=5 // pred_region
        %s339 = ssub.s32 %s21, 1
        // Predicated region
        $region13: #{net_forward.1} parent=11 // pred_check
          %p340 = pneg %p68
        $region14: #{net_forward.1} parent=11 // pred_check_branch
          %342 = sbr.rel (%p340) target = $region16
        $region15: #{net_forward.1} parent=11 // pred_region
          %s344 = ssub.s32 384, 384
          %345 = vsyncadd [#allocation8], %s344
          %s346 = sshll.u32 [#allocation7], 4
          %s347 = int_to_ptr.vmem [resolvable:$true] %s346
          %352 = dma.hbm_to_vmem [thread:$0]  %s1, 384, %s347, [#allocation8], 128, 128, 8
        $region16: #{net_forward.1} parent=11 // pred_fallthru
          _
        // Predicated region
        $region17: #{net_forward.1} parent=11 // pred_check
          %p353 = pneg %p89
        $region18: #{net_forward.1} parent=11 // pred_check_branch
          %355 = sbr.rel (%p353) target = $region20
        $region19: #{net_forward.1} parent=11 // pred_region
          _
        $region20: #{net_forward.1} parent=11 // pred_fallthru
          _
        // Predicated region
        $region21: #{net_forward.1} parent=11 // pred_check
          %p356 = pneg %p110
        $region22: #{net_forward.1} parent=11 // pred_check_branch
          %358 = sbr.rel (%p356) target = $region24
        $region23: #{net_forward.1} parent=11 // pred_region
          _
        $region24: #{net_forward.1} parent=11 // pred_fallthru
          _
        // Predicated region
        $region25: #{net_forward.1} parent=11 // pred_check
          %p359 = pneg %p131
        $region26: #{net_forward.1} parent=11 // pred_check_branch
          %361 = sbr.rel (%p359) target = $region28
        $region27: #{net_forward.1} parent=11 // pred_region
          _
        $region28: #{net_forward.1} parent=11 // pred_fallthru
          _
        // Predicated region
        $region29: #{net_forward.1} parent=11 // pred_check
          %p362 = pneg %p152
        $region30: #{net_forward.1} parent=11 // pred_check_branch
          %364 = sbr.rel (%p362) target = $region32
        $region31: #{net_forward.1} parent=11 // pred_region
          %s366 = ssub.s32 1024, 1024
          %367 = vsyncadd [#allocation10], %s366
          %s368 = sshll.u32 [#allocation9], 4
          %s369 = int_to_ptr.vmem [resolvable:$true] %s368
          %374 = dma.hbm_to_vmem [thread:$0]  %s5, 1024, %s369, [#allocation10], 128, 128, 8
        $region32: #{net_forward.1} parent=11 // pred_fallthru
          _
        // Predicated region
        $region33: #{net_forward.1} parent=11 // pred_check
          %p375 = pneg %p173
        $region34: #{net_forward.1} parent=11 // pred_check_branch
          %377 = sbr.rel (%p375) target = $region36
        $region35: #{net_forward.1} parent=11 // pred_region
          _
        $region36: #{net_forward.1} parent=11 // pred_fallthru
          _
        // Predicated region
        $region37: #{net_forward.1} parent=11 // pred_check
          %p378 = pneg %p194
        $region38: #{net_forward.1} parent=11 // pred_check_branch
          %380 = sbr.rel (%p378) target = $region40
        $region39: #{net_forward.1} parent=11 // pred_region
          _
        $region40: #{net_forward.1} parent=11 // pred_fallthru
          _
        // Predicated region
        $region41: #{net_forward.1} parent=11 // pred_check
          %p381 = pneg %p215
        $region42: #{net_forward.1} parent=11 // pred_check_branch
          %383 = sbr.rel (%p381) target = $region44
        $region43: #{net_forward.1} parent=11 // pred_region
          _
        $region44: #{net_forward.1} parent=11 // pred_fallthru
          _
        // Predicated region
        $region45: #{net_forward.1} parent=11 // pred_check
          %p384 = pneg %p236
        $region46: #{net_forward.1} parent=11 // pred_check_branch
          %386 = sbr.rel (%p384) target = $region48
        $region47: #{net_forward.1} parent=11 // pred_region
          %s388 = ssub.s32 10752, 10752
          %389 = vsyncadd [#allocation10], %s388
          %s390 = sshll.u32 [#allocation11], 4
          %s391 = int_to_ptr.vmem [resolvable:$true] %s390
          %396 = dma.hbm_to_vmem [thread:$0]  %s9, 10752, %s391, [#allocation10], 256, 256, 16
        $region48: #{net_forward.1} parent=11 // pred_fallthru
          _
        // Predicated region
        $region49: #{net_forward.1} parent=11 // pred_check
          %p397 = pneg %p257
        $region50: #{net_forward.1} parent=11 // pred_check_branch
          %399 = sbr.rel (%p397) target = $region52
        $region51: #{net_forward.1} parent=11 // pred_region
          _
        $region52: #{net_forward.1} parent=11 // pred_fallthru
          _
        // Predicated region
        $region53: #{net_forward.1} parent=11 // pred_check
          %p400 = pneg %p278
        $region54: #{net_forward.1} parent=11 // pred_check_branch
          %402 = sbr.rel (%p400) target = $region56
        $region55: #{net_forward.1} parent=11 // pred_region
          _
        $region56: #{net_forward.1} parent=11 // pred_fallthru
          _
        // Predicated region
        $region57: #{net_forward.1} parent=11 // pred_check
          %p403 = pneg %p299
        $region58: #{net_forward.1} parent=11 // pred_check_branch
          %405 = sbr.rel (%p403) target = $region60
        $region59: #{net_forward.1} parent=11 // pred_region
          _
        $region60: #{net_forward.1} parent=11 // pred_fallthru
          _
      $region12: #{net_forward.1} parent=5 // pred_fallthru
        _
      %p406 = scmp.lt.s32.totalorder %s21, 2
      // Predicated region
      $region61: #{net_forward.1} parent=5 // pred_check
        %p407 = pneg %p406
      $region62: #{net_forward.1} parent=5 // pred_check_branch
        %409 = sbr.rel (%p407) target = $region64
      $region63: #{net_forward.1} parent=5 // pred_region
        // Predicated region
        $region65: #{net_forward.1} parent=63 // pred_check
          %p410 = pneg %p41
        $region66: #{net_forward.1} parent=63 // pred_check_branch
          %412 = sbr.rel (%p410) target = $region68
        $region67: #{net_forward.1} parent=63 // pred_region
          %p413 = scmp.lt.s32.totalorder %s21, 1
          %s414 = scalar_select %p413, %s21, 1
          %s415 = smul.addr %s414, 4
          %s416 = smul.addr %s415, 8
          %s417 = scalar_lea.vmem %s0, %s416
        $region68: #{net_forward.1} parent=63 // pred_fallthru
          _
      $region64: #{net_forward.1} parent=5 // pred_fallthru
        _
      %p418 = scmp.le.s32.totalorder 1, %s21
      %p419 = scmp.lt.s32.totalorder %s21, 3
      %p420 = pnand %p418, %p419
      %p421 = pneg %p420
      // Predicated region
      $region69: #{net_forward.1} parent=5 // pred_check
        _
      $region70: #{net_forward.1} parent=5 // pred_check_branch
        %423 = sbr.rel (%p420) target = $region72
      $region71: #{net_forward.1} parent=5 // pred_region
        %s424 = ssub.s32 %s21, 1
        // Predicated region
        $region73: #{net_forward.1} parent=71 // pred_check
          %p425 = pneg %p68
        $region74: #{net_forward.1} parent=71 // pred_check_branch
          %427 = sbr.rel (%p425) target = $region76
        $region75: #{net_forward.1} parent=71 // pred_region
          %428 = dma.done [#allocation8], 384
        $region76: #{net_forward.1} parent=71 // pred_fallthru
          _
        // Predicated region
        $region77: #{net_forward.1} parent=71 // pred_check
          %p429 = pneg %p152
        $region78: #{net_forward.1} parent=71 // pred_check_branch
          %431 = sbr.rel (%p429) target = $region80
        $region79: #{net_forward.1} parent=71 // pred_region
          %432 = dma.done [#allocation10], 1024
        $region80: #{net_forward.1} parent=71 // pred_fallthru
          _
        // Predicated region
        $region81: #{net_forward.1} parent=71 // pred_check
          %p433 = pneg %p236
        $region82: #{net_forward.1} parent=71 // pred_check_branch
          %435 = sbr.rel (%p433) target = $region84
        $region83: #{net_forward.1} parent=71 // pred_region
          %436 = dma.done [#allocation10], 10752
        $region84: #{net_forward.1} parent=71 // pred_fallthru
          _
        %p437 = scmp.lt.s32.totalorder %s26, 1
        %s438 = scalar_select %p437, %s26, 1
        %s439 = smul.addr %s438, 4
        %s440 = smul.addr %s439, 8
        %s441 = scalar_lea.vmem %s0, %s440
        %p442 = pneg %p47
        %p443 = pneg %p44
        %p444 = pneg %p68
        %p445 = pneg %p65
        %p446 = pneg %p89
        %p447 = pneg %p86
        %p448 = pneg %p110
        %p449 = pneg %p107
        %p450 = pneg %p131
        %p451 = pneg %p128
        %p452 = pneg %p152
        %p453 = pneg %p149
        %p454 = pneg %p173
        %p455 = pneg %p170
        %p456 = pneg %p194
        %p457 = pneg %p191
        %p458 = pneg %p215
        %p459 = pneg %p212
        %p460 = pneg %p236
        %p461 = pneg %p233
        %p462 = pneg %p257
        %p463 = pneg %p254
        %p464 = pneg %p278
        %p465 = pneg %p275
        %p466 = pneg %p299
        %p467 = pneg %p296
        %p468 = pneg %p325
        %p469 = pneg %p322
        %p470 = scmp.lt.s32.totalorder %s26, 1
        %s471 = scalar_select %p470, %s26, 1
        %s472 = smul.addr %s471, 2
        %s473 = scalar_lea.vmem %s13, %s472
        %p474 = scmp.lt.s32.totalorder %s26, 1
        %s475 = scalar_select %p474, %s26, 1
        %s476 = smul.addr %s475, 4
        %s477 = smul.addr %s476, 8
        %s478 = scalar_lea.vmem %s0, %s477
        %p479 = scmp.lt.s32.totalorder %s26, 1
        %s480 = scalar_select %p479, %s26, 1
        %s481 = smul.addr %s480, 2
        %s482 = scalar_lea.vmem %s13, %s481
        %483 = vst [vmem:[#allocation2] sm:$0xff] 0.0
        %484 = vst [vmem:[#allocation2 + $0x8] sm:$0xff] 0.0
        %485 = vst [vmem:[#allocation2 + $0x10] sm:$0xff] 0.0
        %486 = vst [vmem:[#allocation2 + $0x18] sm:$0xff] 0.0
        %487 = vst [vmem:[#allocation2 + $0x20] sm:$0xff] 0.0
        %488 = vst [vmem:[#allocation2 + $0x28] sm:$0xff] 0.0
        %489 = vst [vmem:[#allocation2 + $0x30] sm:$0xff] 0.0
        %490 = vst [vmem:[#allocation2 + $0x38] sm:$0xff] 0.0
        %491 = vst [vmem:[#allocation2 + $0x40] sm:$0xff] 0.0
        %492 = vst [vmem:[#allocation2 + $0x48] sm:$0xff] 0.0
        %493 = vst [vmem:[#allocation2 + $0x50] sm:$0xff] 0.0
        %494 = vst [vmem:[#allocation2 + $0x58] sm:$0xff] 0.0
        %495 = vst [vmem:[#allocation2 + $0x60] sm:$0xff] 0.0
        %496 = vst [vmem:[#allocation2 + $0x68] sm:$0xff] 0.0
        %497 = vst [vmem:[#allocation2 + $0x70] sm:$0xff] 0.0
        %498 = vst [vmem:[#allocation2 + $0x78] sm:$0xff] 0.0
        %499 = vst [vmem:[#allocation2 + $0x80] sm:$0xff] 0.0
        %500 = vst [vmem:[#allocation2 + $0x88] sm:$0xff] 0.0
        %501 = vst [vmem:[#allocation3] sm:$0xff] 0.0
        %502 = vst [vmem:[#allocation3 + $0x8] sm:$0xff] 0.0
        %s503 = scalar_lea.vmem [#allocation3], 144
        %504 = vst [vmem:[%s503] sm:$0xff] 0.0
        %505 = vst [vmem:[%s503 + $0x8] sm:$0xff] 0.0
        %506 = vst [vmem:[#allocation4] sm:$0xff] 0.0
        %507 = vst [vmem:[#allocation4 + $0x8] sm:$0xff] 0.0
        %508 = vst [vmem:[#allocation4 + $0x10] sm:$0xff] 0.0
        %509 = vst [vmem:[#allocation4 + $0x18] sm:$0xff] 0.0
        %s510 = scalar_lea.vmem [#allocation4], 160
        %511 = vst [vmem:[%s510] sm:$0xff] 0.0
        %512 = vst [vmem:[%s510 + $0x8] sm:$0xff] 0.0
        %513 = vst [vmem:[%s510 + $0x10] sm:$0xff] 0.0
        %514 = vst [vmem:[%s510 + $0x18] sm:$0xff] 0.0
        %515 = vst [vmem:[#allocation5] sm:$0xff] 0.0
        %516 = vst [vmem:[#allocation5 + $0x8] sm:$0xff] 0.0
        %517 = vst [vmem:[#allocation5 + $0x10] sm:$0xff] 0.0
        %518 = vst [vmem:[#allocation5 + $0x18] sm:$0xff] 0.0
        %519 = vst [vmem:[#allocation5 + $0x20] sm:$0xff] 0.0
        %s520 = scalar_lea.vmem [#allocation5], 176
        %521 = vst [vmem:[%s520] sm:$0xff] 0.0
        %522 = vst [vmem:[%s520 + $0x8] sm:$0xff] 0.0
        %523 = vst [vmem:[%s520 + $0x10] sm:$0xff] 0.0
        %524 = vst [vmem:[%s520 + $0x18] sm:$0xff] 0.0
        %525 = vst [vmem:[%s520 + $0x20] sm:$0xff] 0.0
        %v526 = vld [vmem:[%s478] sm:$0xff]
        %v527 = vld [vmem:[%s478 + $0x8] sm:$0xff]
        %v530 = vcombine.high %v526, %v526
        %v532 = vunpack.c.l.s4 1966171168
        %v533 = vunpack.c.0.s8 %v532
        %v534 = vlaneseq
        %v535 = vshrl.u32 %v534, 7
        %v536 = vsub.s32 %v533, %v535
        %v537 = vrot.slane %v526, %v536
        %v539 = vunpack.c.l.s4 1966171168
        %v540 = vunpack.c.0.s8 %v539
        %v541 = vlaneseq
        %v542 = vshrl.u32 %v541, 7
        %v543 = vsub.s32 %v540, %v542
        %v544 = vrot.slane %v530, %v543
        %v545 = vcombine.high %v537, %v537
        %v546 = vcombine.high %v544, %v544
        %v548 = vunpack.c.l.s4 1966171168
        %v549 = vunpack.c.0.s8 %v548
        %v550 = vlaneseq
        %v551 = vshrl.u32 %v550, 7
        %v552 = vsub.s32 %v549, %v551
        %v553 = vrot.slane %v537, %v552
        %v555 = vunpack.c.l.s4 1966171168
        %v556 = vunpack.c.0.s8 %v555
        %v557 = vlaneseq
        %v558 = vshrl.u32 %v557, 7
        %v559 = vsub.s32 %v556, %v558
        %v560 = vrot.slane %v544, %v559
        %v562 = vunpack.c.l.s4 1966171168
        %v563 = vunpack.c.0.s8 %v562
        %v564 = vlaneseq
        %v565 = vshrl.u32 %v564, 7
        %v566 = vsub.s32 %v563, %v565
        %v567 = vrot.slane %v545, %v566
        %v569 = vunpack.c.l.s4 1966171168
        %v570 = vunpack.c.0.s8 %v569
        %v571 = vlaneseq
        %v572 = vshrl.u32 %v571, 7
        %v573 = vsub.s32 %v570, %v572
        %v574 = vrot.slane %v546, %v573
        %v575 = vcombine.high %v553, %v553
        %v576 = vcombine.high %v560, %v560
        %v577 = vcombine.high %v567, %v567
        %v578 = vcombine.high %v574, %v574
        %v579 = vcombine.high %v527, %v527
        %v581 = vunpack.c.l.s4 1966171168
        %v582 = vunpack.c.0.s8 %v581
        %v583 = vlaneseq
        %v584 = vshrl.u32 %v583, 7
        %v585 = vsub.s32 %v582, %v584
        %v586 = vrot.slane %v527, %v585
        %v588 = vunpack.c.l.s4 1966171168
        %v589 = vunpack.c.0.s8 %v588
        %v590 = vlaneseq
        %v591 = vshrl.u32 %v590, 7
        %v592 = vsub.s32 %v589, %v591
        %v593 = vrot.slane %v579, %v592
        %v594 = vcombine.high %v586, %v586
        %v595 = vcombine.high %v593, %v593
        %v597 = vunpack.c.l.s4 1966171168
        %v598 = vunpack.c.0.s8 %v597
        %v599 = vlaneseq
        %v600 = vshrl.u32 %v599, 7
        %v601 = vsub.s32 %v598, %v600
        %v602 = vrot.slane %v586, %v601
        %v604 = vunpack.c.l.s4 1966171168
        %v605 = vunpack.c.0.s8 %v604
        %v606 = vlaneseq
        %v607 = vshrl.u32 %v606, 7
        %v608 = vsub.s32 %v605, %v607
        %v609 = vrot.slane %v593, %v608
        %v611 = vunpack.c.l.s4 1966171168
        %v612 = vunpack.c.0.s8 %v611
        %v613 = vlaneseq
        %v614 = vshrl.u32 %v613, 7
        %v615 = vsub.s32 %v612, %v614
        %v616 = vrot.slane %v594, %v615
        %v618 = vunpack.c.l.s4 1966171168
        %v619 = vunpack.c.0.s8 %v618
        %v620 = vlaneseq
        %v621 = vshrl.u32 %v620, 7
        %v622 = vsub.s32 %v619, %v621
        %v623 = vrot.slane %v595, %v622
        %v624 = vcombine.high %v602, %v602
        %v625 = vcombine.high %v609, %v609
        %v626 = vcombine.high %v616, %v616
        %v627 = vcombine.high %v623, %v623
        %v628 = vlaneseq
        %v629 = vshrl.u32 %v628, 7
        %v630 = vsub.s32 0, %v629
        %v631 = vrot.slane %v553, %v630
        %v632 = vlaneseq
        %v633 = vshrl.u32 %v632, 7
        %v634 = vsub.s32 0, %v633
        %v635 = vrot.slane %v567, %v634
        %v636 = vlaneseq
        %v637 = vshrl.u32 %v636, 7
        %v638 = vsub.s32 0, %v637
        %v639 = vrot.slane %v575, %v638
        %v640 = vlaneseq
        %v641 = vshrl.u32 %v640, 7
        %v642 = vsub.s32 0, %v641
        %v643 = vrot.slane %v577, %v642
        %v644 = vlaneseq
        %v645 = vshrl.u32 %v644, 7
        %v646 = vsub.s32 0, %v645
        %v647 = vrot.slane %v560, %v646
        %v648 = vlaneseq
        %v649 = vshrl.u32 %v648, 7
        %v650 = vsub.s32 0, %v649
        %v651 = vrot.slane %v574, %v650
        %v652 = vlaneseq
        %v653 = vshrl.u32 %v652, 7
        %v654 = vsub.s32 0, %v653
        %v655 = vrot.slane %v576, %v654
        %v656 = vlaneseq
        %v657 = vshrl.u32 %v656, 7
        %v658 = vsub.s32 0, %v657
        %v659 = vrot.slane %v578, %v658
        %v660 = vlaneseq
        %v661 = vshrl.u32 %v660, 7
        %v662 = vsub.s32 0, %v661
        %v663 = vrot.slane %v602, %v662
        %v664 = vlaneseq
        %v665 = vshrl.u32 %v664, 7
        %v666 = vsub.s32 0, %v665
        %v667 = vrot.slane %v616, %v666
        %v668 = vlaneseq
        %v669 = vshrl.u32 %v668, 7
        %v670 = vsub.s32 0, %v669
        %v671 = vrot.slane %v624, %v670
        %v672 = vlaneseq
        %v673 = vshrl.u32 %v672, 7
        %v674 = vsub.s32 0, %v673
        %v675 = vrot.slane %v626, %v674
        %v676 = vlaneseq
        %v677 = vshrl.u32 %v676, 7
        %v678 = vsub.s32 0, %v677
        %v679 = vrot.slane %v609, %v678
        %v680 = vlaneseq
        %v681 = vshrl.u32 %v680, 7
        %v682 = vsub.s32 0, %v681
        %v683 = vrot.slane %v623, %v682
        %v684 = vlaneseq
        %v685 = vshrl.u32 %v684, 7
        %v686 = vsub.s32 0, %v685
        %v687 = vrot.slane %v625, %v686
        %v688 = vlaneseq
        %v689 = vshrl.u32 %v688, 7
        %v690 = vsub.s32 0, %v689
        %v691 = vrot.slane %v627, %v690
        %692 = vrot.lane.b32.xlu0 %v631, 12
        %v693 = vpop.permute.xlu0 %692
        %694 = vrot.lane.b32.xlu0 %v635, 12
        %v695 = vpop.permute.xlu0 %694
        %696 = vrot.lane.b32.xlu0 %v639, 12
        %v697 = vpop.permute.xlu0 %696
        %698 = vrot.lane.b32.xlu0 %v643, 12
        %v699 = vpop.permute.xlu0 %698
        %700 = vrot.lane.b32.xlu0 %v647, 12
        %v701 = vpop.permute.xlu0 %700
        %702 = vrot.lane.b32.xlu0 %v651, 12
        %v703 = vpop.permute.xlu0 %702
        %704 = vrot.lane.b32.xlu0 %v655, 12
        %v705 = vpop.permute.xlu0 %704
        %706 = vrot.lane.b32.xlu0 %v659, 12
        %v707 = vpop.permute.xlu0 %706
        %708 = vrot.lane.b32.xlu0 %v663, 12
        %v709 = vpop.permute.xlu0 %708
        %710 = vrot.lane.b32.xlu0 %v667, 12
        %v711 = vpop.permute.xlu0 %710
        %712 = vrot.lane.b32.xlu0 %v671, 12
        %v713 = vpop.permute.xlu0 %712
        %714 = vrot.lane.b32.xlu0 %v675, 12
        %v715 = vpop.permute.xlu0 %714
        %716 = vrot.lane.b32.xlu0 %v679, 12
        %v717 = vpop.permute.xlu0 %716
        %718 = vrot.lane.b32.xlu0 %v683, 12
        %v719 = vpop.permute.xlu0 %718
        %720 = vrot.lane.b32.xlu0 %v687, 12
        %v721 = vpop.permute.xlu0 %720
        %722 = vrot.lane.b32.xlu0 %v691, 12
        %v723 = vpop.permute.xlu0 %722
        %s740 = scalar_lea.vmem [#allocation2], 8
        %vm741 = vcmask 475232
        %742 = vst.msk [vmem:[%s740] sm:$0x1] %vm741, %v693
        %743 = vst.msk [vmem:[%s740 + $0x8] sm:$0x1] %vm741, %v695
        %744 = vst.msk [vmem:[%s740 + $0x10] sm:$0x1] %vm741, %v697
        %745 = vst.msk [vmem:[%s740 + $0x18] sm:$0x1] %vm741, %v699
        %746 = vst.msk [vmem:[%s740 + $0x20] sm:$0x1] %vm741, %v701
        %747 = vst.msk [vmem:[%s740 + $0x28] sm:$0x1] %vm741, %v703
        %748 = vst.msk [vmem:[%s740 + $0x30] sm:$0x1] %vm741, %v705
        %749 = vst.msk [vmem:[%s740 + $0x38] sm:$0x1] %vm741, %v707
        %750 = vst.msk [vmem:[%s740 + $0x40] sm:$0x1] %vm741, %v709
        %751 = vst.msk [vmem:[%s740 + $0x48] sm:$0x1] %vm741, %v711
        %752 = vst.msk [vmem:[%s740 + $0x50] sm:$0x1] %vm741, %v713
        %753 = vst.msk [vmem:[%s740 + $0x58] sm:$0x1] %vm741, %v715
        %754 = vst.msk [vmem:[%s740 + $0x60] sm:$0x1] %vm741, %v717
        %755 = vst.msk [vmem:[%s740 + $0x68] sm:$0x1] %vm741, %v719
        %756 = vst.msk [vmem:[%s740 + $0x70] sm:$0x1] %vm741, %v721
        %757 = vst.msk [vmem:[%s740 + $0x78] sm:$0x1] %vm741, %v723
        %s758 = scalar_lea.vmem %s478, 16
        %v759 = vld [vmem:[%s758] sm:$0xff]
        %v760 = vld [vmem:[%s758 + $0x8] sm:$0xff]
        %v763 = vcombine.high %v759, %v759
        %v765 = vunpack.c.l.s4 1966171168
        %v766 = vunpack.c.0.s8 %v765
        %v767 = vlaneseq
        %v768 = vshrl.u32 %v767, 7
        %v769 = vsub.s32 %v766, %v768
        %v770 = vrot.slane %v759, %v769
        %v772 = vunpack.c.l.s4 1966171168
        %v773 = vunpack.c.0.s8 %v772
        %v774 = vlaneseq
        %v775 = vshrl.u32 %v774, 7
        %v776 = vsub.s32 %v773, %v775
        %v777 = vrot.slane %v763, %v776
        %v778 = vcombine.high %v770, %v770
        %v779 = vcombine.high %v777, %v777
        %v781 = vunpack.c.l.s4 1966171168
        %v782 = vunpack.c.0.s8 %v781
        %v783 = vlaneseq
        %v784 = vshrl.u32 %v783, 7
        %v785 = vsub.s32 %v782, %v784
        %v786 = vrot.slane %v770, %v785
        %v788 = vunpack.c.l.s4 1966171168
        %v789 = vunpack.c.0.s8 %v788
        %v790 = vlaneseq
        %v791 = vshrl.u32 %v790, 7
        %v792 = vsub.s32 %v789, %v791
        %v793 = vrot.slane %v777, %v792
        %v795 = vunpack.c.l.s4 1966171168
        %v796 = vunpack.c.0.s8 %v795
        %v797 = vlaneseq
        %v798 = vshrl.u32 %v797, 7
        %v799 = vsub.s32 %v796, %v798
        %v800 = vrot.slane %v778, %v799
        %v802 = vunpack.c.l.s4 1966171168
        %v803 = vunpack.c.0.s8 %v802
        %v804 = vlaneseq
        %v805 = vshrl.u32 %v804, 7
        %v806 = vsub.s32 %v803, %v805
        %v807 = vrot.slane %v779, %v806
        %v808 = vcombine.high %v786, %v786
        %v809 = vcombine.high %v793, %v793
        %v810 = vcombine.high %v800, %v800
        %v811 = vcombine.high %v807, %v807
        %v812 = vcombine.high %v760, %v760
        %v814 = vunpack.c.l.s4 1966171168
        %v815 = vunpack.c.0.s8 %v814
        %v816 = vlaneseq
        %v817 = vshrl.u32 %v816, 7
        %v818 = vsub.s32 %v815, %v817
        %v819 = vrot.slane %v760, %v818
        %v821 = vunpack.c.l.s4 1966171168
        %v822 = vunpack.c.0.s8 %v821
        %v823 = vlaneseq
        %v824 = vshrl.u32 %v823, 7
        %v825 = vsub.s32 %v822, %v824
        %v826 = vrot.slane %v812, %v825
        %v827 = vcombine.high %v819, %v819
        %v828 = vcombine.high %v826, %v826
        %v830 = vunpack.c.l.s4 1966171168
        %v831 = vunpack.c.0.s8 %v830
        %v832 = vlaneseq
        %v833 = vshrl.u32 %v832, 7
        %v834 = vsub.s32 %v831, %v833
        %v835 = vrot.slane %v819, %v834
        %v837 = vunpack.c.l.s4 1966171168
        %v838 = vunpack.c.0.s8 %v837
        %v839 = vlaneseq
        %v840 = vshrl.u32 %v839, 7
        %v841 = vsub.s32 %v838, %v840
        %v842 = vrot.slane %v826, %v841
        %v844 = vunpack.c.l.s4 1966171168
        %v845 = vunpack.c.0.s8 %v844
        %v846 = vlaneseq
        %v847 = vshrl.u32 %v846, 7
        %v848 = vsub.s32 %v845, %v847
        %v849 = vrot.slane %v827, %v848
        %v851 = vunpack.c.l.s4 1966171168
        %v852 = vunpack.c.0.s8 %v851
        %v853 = vlaneseq
        %v854 = vshrl.u32 %v853, 7
        %v855 = vsub.s32 %v852, %v854
        %v856 = vrot.slane %v828, %v855
        %v857 = vcombine.high %v835, %v835
        %v858 = vcombine.high %v842, %v842
        %v859 = vcombine.high %v849, %v849
        %v860 = vcombine.high %v856, %v856
        %v861 = vlaneseq
        %v862 = vshrl.u32 %v861, 7
        %v863 = vsub.s32 0, %v862
        %v864 = vrot.slane %v786, %v863
        %v865 = vlaneseq
        %v866 = vshrl.u32 %v865, 7
        %v867 = vsub.s32 0, %v866
        %v868 = vrot.slane %v800, %v867
        %v869 = vlaneseq
        %v870 = vshrl.u32 %v869, 7
        %v871 = vsub.s32 0, %v870
        %v872 = vrot.slane %v808, %v871
        %v873 = vlaneseq
        %v874 = vshrl.u32 %v873, 7
        %v875 = vsub.s32 0, %v874
        %v876 = vrot.slane %v810, %v875
        %v877 = vlaneseq
        %v878 = vshrl.u32 %v877, 7
        %v879 = vsub.s32 0, %v878
        %v880 = vrot.slane %v793, %v879
        %v881 = vlaneseq
        %v882 = vshrl.u32 %v881, 7
        %v883 = vsub.s32 0, %v882
        %v884 = vrot.slane %v807, %v883
        %v885 = vlaneseq
        %v886 = vshrl.u32 %v885, 7
        %v887 = vsub.s32 0, %v886
        %v888 = vrot.slane %v809, %v887
        %v889 = vlaneseq
        %v890 = vshrl.u32 %v889, 7
        %v891 = vsub.s32 0, %v890
        %v892 = vrot.slane %v811, %v891
        %v893 = vlaneseq
        %v894 = vshrl.u32 %v893, 7
        %v895 = vsub.s32 0, %v894
        %v896 = vrot.slane %v835, %v895
        %v897 = vlaneseq
        %v898 = vshrl.u32 %v897, 7
        %v899 = vsub.s32 0, %v898
        %v900 = vrot.slane %v849, %v899
        %v901 = vlaneseq
        %v902 = vshrl.u32 %v901, 7
        %v903 = vsub.s32 0, %v902
        %v904 = vrot.slane %v857, %v903
        %v905 = vlaneseq
        %v906 = vshrl.u32 %v905, 7
        %v907 = vsub.s32 0, %v906
        %v908 = vrot.slane %v859, %v907
        %v909 = vlaneseq
        %v910 = vshrl.u32 %v909, 7
        %v911 = vsub.s32 0, %v910
        %v912 = vrot.slane %v842, %v911
        %v913 = vlaneseq
        %v914 = vshrl.u32 %v913, 7
        %v915 = vsub.s32 0, %v914
        %v916 = vrot.slane %v856, %v915
        %v917 = vlaneseq
        %v918 = vshrl.u32 %v917, 7
        %v919 = vsub.s32 0, %v918
        %v920 = vrot.slane %v858, %v919
        %v921 = vlaneseq
        %v922 = vshrl.u32 %v921, 7
        %v923 = vsub.s32 0, %v922
        %v924 = vrot.slane %v860, %v923
        %925 = vrot.lane.b32.xlu0 %v864, 76
        %v926 = vpop.permute.xlu0 %925
        %927 = vrot.lane.b32.xlu0 %v868, 76
        %v928 = vpop.permute.xlu0 %927
        %929 = vrot.lane.b32.xlu0 %v872, 76
        %v930 = vpop.permute.xlu0 %929
        %931 = vrot.lane.b32.xlu0 %v876, 76
        %v932 = vpop.permute.xlu0 %931
        %933 = vrot.lane.b32.xlu0 %v880, 76
        %v934 = vpop.permute.xlu0 %933
        %935 = vrot.lane.b32.xlu0 %v884, 76
        %v936 = vpop.permute.xlu0 %935
        %937 = vrot.lane.b32.xlu0 %v888, 76
        %v938 = vpop.permute.xlu0 %937
        %939 = vrot.lane.b32.xlu0 %v892, 76
        %v940 = vpop.permute.xlu0 %939
        %941 = vrot.lane.b32.xlu0 %v896, 76
        %v942 = vpop.permute.xlu0 %941
        %943 = vrot.lane.b32.xlu0 %v900, 76
        %v944 = vpop.permute.xlu0 %943
        %945 = vrot.lane.b32.xlu0 %v904, 76
        %v946 = vpop.permute.xlu0 %945
        %947 = vrot.lane.b32.xlu0 %v908, 76
        %v948 = vpop.permute.xlu0 %947
        %949 = vrot.lane.b32.xlu0 %v912, 76
        %v950 = vpop.permute.xlu0 %949
        %951 = vrot.lane.b32.xlu0 %v916, 76
        %v952 = vpop.permute.xlu0 %951
        %953 = vrot.lane.b32.xlu0 %v920, 76
        %v954 = vpop.permute.xlu0 %953
        %955 = vrot.lane.b32.xlu0 %v924, 76
        %v956 = vpop.permute.xlu0 %955
        %vm973 = vcmask 1000032
        %974 = vst.msk [vmem:[%s740] sm:$0x1] %vm973, %v926
        %975 = vst.msk [vmem:[%s740 + $0x8] sm:$0x1] %vm973, %v928
        %976 = vst.msk [vmem:[%s740 + $0x10] sm:$0x1] %vm973, %v930
        %977 = vst.msk [vmem:[%s740 + $0x18] sm:$0x1] %vm973, %v932
        %978 = vst.msk [vmem:[%s740 + $0x20] sm:$0x1] %vm973, %v934
        %979 = vst.msk [vmem:[%s740 + $0x28] sm:$0x1] %vm973, %v936
        %980 = vst.msk [vmem:[%s740 + $0x30] sm:$0x1] %vm973, %v938
        %981 = vst.msk [vmem:[%s740 + $0x38] sm:$0x1] %vm973, %v940
        %982 = vst.msk [vmem:[%s740 + $0x40] sm:$0x1] %vm973, %v942
        %983 = vst.msk [vmem:[%s740 + $0x48] sm:$0x1] %vm973, %v944
        %984 = vst.msk [vmem:[%s740 + $0x50] sm:$0x1] %vm973, %v946
        %985 = vst.msk [vmem:[%s740 + $0x58] sm:$0x1] %vm973, %v948
        %986 = vst.msk [vmem:[%s740 + $0x60] sm:$0x1] %vm973, %v950
        %987 = vst.msk [vmem:[%s740 + $0x68] sm:$0x1] %vm973, %v952
        %988 = vst.msk [vmem:[%s740 + $0x70] sm:$0x1] %vm973, %v954
        %989 = vst.msk [vmem:[%s740 + $0x78] sm:$0x1] %vm973, %v956
        %v990 = vlaneseq
        %v991 = vand.u32 %v990, 127
        %vm992 = vcmp.lt.s32.totalorder %v991, 0
        %v993 = vsub.s32 0, %v991
        %v994 = vsel %vm992, %v993, %v991
        %v995 = vshrl.u32 %v994, 6
        %v996 = vand.u32 %v994, 63
        %v997 = vsub.s32 0, %v996
        %v998 = vsel %vm992, %v997, %v996
        %vm999 = vcmp.ne.s32.totalorder %v998, 0
        %vm1000 = vcmp.lt.s32.totalorder %v998, 0
        %vm1001 = vmand %vm1000, %vm999
        %v1002 = vadd.s32 %v998, 64
        %v1003 = vsel %vm1001, %v1002, %v998
        %vm1004 = vcmp.ge.s32.totalorder %v1003, 11
        %vm1005 = vcmp.lt.s32.totalorder %v1003, 58
        %vm1006 = vmand %vm1004, %vm1005
        %v1007 = vsel %vm1006, 1, 0
        %v1008 = vcvt.s32.f32 %v1007
        %v1009 = vld [vmem:[%s2] sm:$0xff]
        %1011 = vset.pattern.permute.xlu0 0
        %1012 = vperm.xlu0 %1011, %v1009
        %v1013 = vpop.permute.xlu0 %1012
        %v1015 = vmul.f32 %v1013, %v1008
        loop: start=0, step=1, limit=16
        $region85: #{net_forward.1} parent=71 // loop_pre_header
          _
        $region86: #{net_forward.1} parent=71 // loop_header
          %s1017 = sphi 0, %s1021
          %p1018 = scmp.ge.s32.totalorder %s1017, 16
        $region87: #{net_forward.1} parent=71 // loop_header_branch
          %1020 = sbr.rel (%p1018) target = $region91
        $region88: #{net_forward.1} parent=71 // loop_body
          %s1022 = smul.u32 %s1017, 8
          %s1023 = scalar_lea.vmem [#allocation2], %s1022
          %v1024 = vld [vmem:[%s1023] sm:$0xff]
          %v1025 = vld [vmem:[%s1023 + $0x8] sm:$0xff]
          %v1026 = vld [vmem:[%s1023 + $0x10] sm:$0xff]
          %v1027 = vld [vmem:[#allocation7] sm:$0xff]
          %s1028 = scalar_lea.vmem [#allocation7], 8
          %v1029 = vld [vmem:[%s1028] sm:$0xff]
          %vm1030 = vcmask 195584
          %v1032 = vsel %vm1030, %v1029, 0
          %1034 = vmatprep.subr.mxu0 0.0
          %1035 = vmatpush1.msra.mxu0 0.0
          %1036 = vmatprep.subr.mxu0 0.0
          %1037 = vmatpush1.msra.mxu0 0.0
          %1038 = vmatprep.subr.mxu0 0.0
          %1039 = vmatpush1.msra.mxu0 0.0
          %1040 = vmatprep.subr.mxu0 0.0
          %1041 = vmatpush1.msra.mxu0 0.0
          %1042 = vmatprep.subr.mxu0 0.0
          %1043 = vmatpush1.msra.mxu0 0.0
          %1044 = vmatprep.subr.mxu0 0.0
          %1045 = vmatpush1.msra.mxu0 0.0
          %1046 = vmatprep.subr.mxu0 0.0
          %1047 = vmatpush1.msra.mxu0 0.0
          %1048 = vmatprep.subr.mxu0 0.0
          %1049 = vmatpush1.msra.mxu0 0.0
          %1050 = vmatprep.subr.mxu0 0.0
          %1051 = vmatpush1.msra.mxu0 0.0
          %1052 = vmatprep.subr.mxu0 0.0
          %1053 = vmatpush1.msra.mxu0 0.0
          %1054 = vmatprep.subr.mxu0 0.0
          %1055 = vmatpush1.msra.mxu0 0.0
          %1056 = vmatprep.subr.mxu0 0.0
          %1057 = vmatpush1.msra.mxu0 0.0
          %1058 = vmatprep.subr.mxu0 0.0
          %1059 = vmatpush1.msra.mxu0 0.0
          %1060 = vmatprep.subr.mxu0 0.0
          %1061 = vmatpush1.msra.mxu0 %v1026
          %1062 = vmatprep.subr.mxu0 0.0
          %1063 = vmatpush1.msra.mxu0 %v1025
          %1064 = vmatprep.subr.mxu0 0.0
          %1065 = vmatpush1.msra.mxu0 %v1024
          %1066 = vmatprep.subr.mxu0 0.0
          %1067 = vmatpush2.msra.mxu0 0.0
          %1068 = vmatprep.subr.mxu0 0.0
          %1069 = vmatpush2.msra.mxu0 0.0
          %1070 = vmatprep.subr.mxu0 0.0
          %1071 = vmatpush2.msra.mxu0 0.0
          %1072 = vmatprep.subr.mxu0 0.0
          %1073 = vmatpush2.msra.mxu0 0.0
          %1074 = vmatprep.subr.mxu0 0.0
          %1075 = vmatpush2.msra.mxu0 0.0
          %1076 = vmatprep.subr.mxu0 0.0
          %1077 = vmatpush2.msra.mxu0 0.0
          %1078 = vmatprep.subr.mxu0 0.0
          %1079 = vmatpush2.msra.mxu0 0.0
          %1080 = vmatprep.subr.mxu0 0.0
          %1081 = vmatpush2.msra.mxu0 0.0
          %1082 = vmatprep.subr.mxu0 0.0
          %1083 = vmatpush2.msra.mxu0 0.0
          %1084 = vmatprep.subr.mxu0 0.0
          %1085 = vmatpush2.msra.mxu0 0.0
          %1086 = vmatprep.subr.mxu0 0.0
          %1087 = vmatpush2.msra.mxu0 0.0
          %1088 = vmatprep.subr.mxu0 0.0
          %1089 = vmatpush2.msra.mxu0 0.0
          %1090 = vmatprep.subr.mxu0 0.0
          %1091 = vmatpush2.msra.mxu0 0.0
          %1092 = vmatprep.subr.mxu0 0.0
          %1093 = vmatpush2.msra.mxu0 0.0
          %1094 = vmatprep.subr.mxu0 0.0
          %1095 = vmatpush2.msra.mxu0 0.0
          %1096 = vmatprep.subr.mxu0 0.0
          %1097 = vmatpush2.msra.mxu0 0.0
          %1098 = vmatprep.mubr.f32.mxu0 0.0
          %1099 = vmatmul.mubr.f32.gmra.mxu0 %v1032
          %v1100 = vpop.f32.mrf.mxu0
          %v1101 = vadd.f32 0.0, %v1100
          %v1102 = vpop.f32.mrf.mxu0
          %1103 = vdwg.mxu0
          %1105 = vrot.lane.b32.xlu0 %v1101, 127
          %v1106 = vpop.permute.xlu0 %1105
          %v1109 = vsel %vm1030, %v1027, 0
          %1111 = vmatprep.subr.mxu0 0.0
          %1112 = vmatpush1.msra.mxu0 0.0
          %1113 = vmatprep.subr.mxu0 0.0
          %1114 = vmatpush1.msra.mxu0 0.0
          %1115 = vmatprep.subr.mxu0 0.0
          %1116 = vmatpush1.msra.mxu0 0.0
          %1117 = vmatprep.subr.mxu0 0.0
          %1118 = vmatpush1.msra.mxu0 0.0
          %1119 = vmatprep.subr.mxu0 0.0
          %1120 = vmatpush1.msra.mxu0 0.0
          %1121 = vmatprep.subr.mxu0 0.0
          %1122 = vmatpush1.msra.mxu0 0.0
          %1123 = vmatprep.subr.mxu0 0.0
          %1124 = vmatpush1.msra.mxu0 0.0
          %1125 = vmatprep.subr.mxu0 0.0
          %1126 = vmatpush1.msra.mxu0 0.0
          %1127 = vmatprep.subr.mxu0 0.0
          %1128 = vmatpush1.msra.mxu0 0.0
          %1129 = vmatprep.subr.mxu0 0.0
          %1130 = vmatpush1.msra.mxu0 0.0
          %1131 = vmatprep.subr.mxu0 0.0
          %1132 = vmatpush1.msra.mxu0 0.0
          %1133 = vmatprep.subr.mxu0 0.0
          %1134 = vmatpush1.msra.mxu0 0.0
          %1135 = vmatprep.subr.mxu0 0.0
          %1136 = vmatpush1.msra.mxu0 0.0
          %1137 = vmatprep.subr.mxu0 0.0
          %1138 = vmatpush1.msra.mxu0 %v1026
          %1139 = vmatprep.subr.mxu0 0.0
          %1140 = vmatpush1.msra.mxu0 %v1025
          %1141 = vmatprep.subr.mxu0 0.0
          %1142 = vmatpush1.msra.mxu0 %v1024
          %1143 = vmatprep.subr.mxu0 0.0
          %1144 = vmatpush2.msra.mxu0 0.0
          %1145 = vmatprep.subr.mxu0 0.0
          %1146 = vmatpush2.msra.mxu0 0.0
          %1147 = vmatprep.subr.mxu0 0.0
          %1148 = vmatpush2.msra.mxu0 0.0
          %1149 = vmatprep.subr.mxu0 0.0
          %1150 = vmatpush2.msra.mxu0 0.0
          %1151 = vmatprep.subr.mxu0 0.0
          %1152 = vmatpush2.msra.mxu0 0.0
          %1153 = vmatprep.subr.mxu0 0.0
          %1154 = vmatpush2.msra.mxu0 0.0
          %1155 = vmatprep.subr.mxu0 0.0
          %1156 = vmatpush2.msra.mxu0 0.0
          %1157 = vmatprep.subr.mxu0 0.0
          %1158 = vmatpush2.msra.mxu0 0.0
          %1159 = vmatprep.subr.mxu0 0.0
          %1160 = vmatpush2.msra.mxu0 0.0
          %1161 = vmatprep.subr.mxu0 0.0
          %1162 = vmatpush2.msra.mxu0 0.0
          %1163 = vmatprep.subr.mxu0 0.0
          %1164 = vmatpush2.msra.mxu0 0.0
          %1165 = vmatprep.subr.mxu0 0.0
          %1166 = vmatpush2.msra.mxu0 0.0
          %1167 = vmatprep.subr.mxu0 0.0
          %1168 = vmatpush2.msra.mxu0 0.0
          %1169 = vmatprep.subr.mxu0 0.0
          %1170 = vmatpush2.msra.mxu0 0.0
          %1171 = vmatprep.subr.mxu0 0.0
          %1172 = vmatpush2.msra.mxu0 0.0
          %1173 = vmatprep.subr.mxu0 0.0
          %1174 = vmatpush2.msra.mxu0 0.0
          %1175 = vmatprep.mubr.f32.mxu0 0.0
          %1176 = vmatmul.mubr.f32.gmra.mxu0 %v1109
          %v1177 = vpop.f32.mrf.mxu0
          %v1178 = vadd.f32 %v1106, %v1177
          %v1179 = vpop.f32.mrf.mxu0
          %1180 = vdwg.mxu0
          %s1181 = scalar_lea.vmem [#allocation7], 16
          %v1182 = vld [vmem:[%s1181] sm:$0xff]
          %v1184 = vsel %vm1030, %v1182, 0
          %1186 = vmatprep.subr.mxu0 0.0
          %1187 = vmatpush1.msra.mxu0 0.0
          %1188 = vmatprep.subr.mxu0 0.0
          %1189 = vmatpush1.msra.mxu0 0.0
          %1190 = vmatprep.subr.mxu0 0.0
          %1191 = vmatpush1.msra.mxu0 0.0
          %1192 = vmatprep.subr.mxu0 0.0
          %1193 = vmatpush1.msra.mxu0 0.0
          %1194 = vmatprep.subr.mxu0 0.0
          %1195 = vmatpush1.msra.mxu0 0.0
          %1196 = vmatprep.subr.mxu0 0.0
          %1197 = vmatpush1.msra.mxu0 0.0
          %1198 = vmatprep.subr.mxu0 0.0
          %1199 = vmatpush1.msra.mxu0 0.0
          %1200 = vmatprep.subr.mxu0 0.0
          %1201 = vmatpush1.msra.mxu0 0.0
          %1202 = vmatprep.subr.mxu0 0.0
          %1203 = vmatpush1.msra.mxu0 0.0
          %1204 = vmatprep.subr.mxu0 0.0
          %1205 = vmatpush1.msra.mxu0 0.0
          %1206 = vmatprep.subr.mxu0 0.0
          %1207 = vmatpush1.msra.mxu0 0.0
          %1208 = vmatprep.subr.mxu0 0.0
          %1209 = vmatpush1.msra.mxu0 0.0
          %1210 = vmatprep.subr.mxu0 0.0
          %1211 = vmatpush1.msra.mxu0 0.0
          %1212 = vmatprep.subr.mxu0 0.0
          %1213 = vmatpush1.msra.mxu0 %v1026
          %1214 = vmatprep.subr.mxu0 0.0
          %1215 = vmatpush1.msra.mxu0 %v1025
          %1216 = vmatprep.subr.mxu0 0.0
          %1217 = vmatpush1.msra.mxu0 %v1024
          %1218 = vmatprep.subr.mxu0 0.0
          %1219 = vmatpush2.msra.mxu0 0.0
          %1220 = vmatprep.subr.mxu0 0.0
          %1221 = vmatpush2.msra.mxu0 0.0
          %1222 = vmatprep.subr.mxu0 0.0
          %1223 = vmatpush2.msra.mxu0 0.0
          %1224 = vmatprep.subr.mxu0 0.0
          %1225 = vmatpush2.msra.mxu0 0.0
          %1226 = vmatprep.subr.mxu0 0.0
          %1227 = vmatpush2.msra.mxu0 0.0
          %1228 = vmatprep.subr.mxu0 0.0
          %1229 = vmatpush2.msra.mxu0 0.0
          %1230 = vmatprep.subr.mxu0 0.0
          %1231 = vmatpush2.msra.mxu0 0.0
          %1232 = vmatprep.subr.mxu0 0.0
          %1233 = vmatpush2.msra.mxu0 0.0
          %1234 = vmatprep.subr.mxu0 0.0
          %1235 = vmatpush2.msra.mxu0 0.0
          %1236 = vmatprep.subr.mxu0 0.0
          %1237 = vmatpush2.msra.mxu0 0.0
          %1238 = vmatprep.subr.mxu0 0.0
          %1239 = vmatpush2.msra.mxu0 0.0
          %1240 = vmatprep.subr.mxu0 0.0
          %1241 = vmatpush2.msra.mxu0 0.0
          %1242 = vmatprep.subr.mxu0 0.0
          %1243 = vmatpush2.msra.mxu0 0.0
          %1244 = vmatprep.subr.mxu0 0.0
          %1245 = vmatpush2.msra.mxu0 0.0
          %1246 = vmatprep.subr.mxu0 0.0
          %1247 = vmatpush2.msra.mxu0 0.0
          %1248 = vmatprep.subr.mxu0 0.0
          %1249 = vmatpush2.msra.mxu0 0.0
          %1250 = vmatprep.mubr.f32.mxu0 0.0
          %1251 = vmatmul.mubr.f32.gmra.mxu0 %v1184
          %v1252 = vpop.f32.mrf.mxu0
          %v1253 = vadd.f32 0.0, %v1252
          %v1254 = vpop.f32.mrf.mxu0
          %1255 = vdwg.mxu0
          %1257 = vrot.lane.b32.xlu0 %v1253, 126
          %v1258 = vpop.permute.xlu0 %1257
          %v1260 = vadd.f32 %v1178, %v1258
          %v1261 = vmul.f32 %v1260, %v1008
          %v1262 = vadd.f32 %v1261, %v1015
          %s1263 = sadd.s32 %s1017, 2
          %s1264 = smul.u32 %s1263, 8
          %s1265 = scalar_lea.vmem [#allocation3], %s1264
          %1266 = vst [vmem:[%s1265] sm:$0xff] %v1262
        $region89: #{net_forward.1} parent=71 // loop_footer
          %s1021 = sadd.s32 1, %s1017
        $region90: #{net_forward.1} parent=71 // loop_footer_branch
          %1016 = sbr.rel target = $region86
        $region91: #{net_forward.1} parent=71 // loop_exit
          _
        %vm1267 = vcmp.ge.s32.totalorder %v1003, 9
        %vm1268 = vcmp.lt.s32.totalorder %v1003, 56
        %vm1269 = vmand %vm1267, %vm1268
        %v1270 = vsel %vm1269, 1, 0
        %v1271 = vcvt.s32.f32 %v1270
        %v1272 = vld [vmem:[%s4] sm:$0xff]
        %1274 = vset.pattern.permute.xlu0 0
        %1275 = vperm.xlu0 %1274, %v1272
        %v1276 = vpop.permute.xlu0 %1275
        %v1278 = vmul.f32 %v1276, %v1271
        loop: start=0, step=1, limit=16
        $region92: #{net_forward.1} parent=71 // loop_pre_header
          _
        $region93: #{net_forward.1} parent=71 // loop_header
          %s1280 = sphi 0, %s1284
          %p1281 = scmp.ge.s32.totalorder %s1280, 16
        $region94: #{net_forward.1} parent=71 // loop_header_branch
          %1283 = sbr.rel (%p1281) target = $region98
        $region95: #{net_forward.1} parent=71 // loop_body
          %s1285 = smul.u32 %s1280, 8
          %s1286 = scalar_lea.vmem [#allocation3], %s1285
          %v1287 = vld [vmem:[%s1286] sm:$0xff]
          %v1288 = vld [vmem:[%s1286 + $0x8] sm:$0xff]
          %v1289 = vld [vmem:[%s1286 + $0x10] sm:$0xff]
          %v1290 = vld [vmem:[%s1286 + $0x18] sm:$0xff]
          %v1291 = vld [vmem:[%s1286 + $0x20] sm:$0xff]
          %v1292 = vld [vmem:[%s3] sm:$0xff]
          %s1293 = scalar_lea.vmem %s3, 8
          %v1294 = vld [vmem:[%s1293] sm:$0xff]
          %vm1295 = vcmask 326656
          %v1297 = vsel %vm1295, %v1294, 0
          %1299 = vmatprep.subr.mxu0 0.0
          %1300 = vmatpush1.msra.mxu0 0.0
          %1301 = vmatprep.subr.mxu0 0.0
          %1302 = vmatpush1.msra.mxu0 0.0
          %1303 = vmatprep.subr.mxu0 0.0
          %1304 = vmatpush1.msra.mxu0 0.0
          %1305 = vmatprep.subr.mxu0 0.0
          %1306 = vmatpush1.msra.mxu0 0.0
          %1307 = vmatprep.subr.mxu0 0.0
          %1308 = vmatpush1.msra.mxu0 0.0
          %1309 = vmatprep.subr.mxu0 0.0
          %1310 = vmatpush1.msra.mxu0 0.0
          %1311 = vmatprep.subr.mxu0 0.0
          %1312 = vmatpush1.msra.mxu0 0.0
          %1313 = vmatprep.subr.mxu0 0.0
          %1314 = vmatpush1.msra.mxu0 0.0
          %1315 = vmatprep.subr.mxu0 0.0
          %1316 = vmatpush1.msra.mxu0 0.0
          %1317 = vmatprep.subr.mxu0 0.0
          %1318 = vmatpush1.msra.mxu0 0.0
          %1319 = vmatprep.subr.mxu0 0.0
          %1320 = vmatpush1.msra.mxu0 0.0
          %1321 = vmatprep.subr.mxu0 0.0
          %1322 = vmatpush1.msra.mxu0 %v1291
          %1323 = vmatprep.subr.mxu0 0.0
          %1324 = vmatpush1.msra.mxu0 %v1290
          %1325 = vmatprep.subr.mxu0 0.0
          %1326 = vmatpush1.msra.mxu0 %v1289
          %1327 = vmatprep.subr.mxu0 0.0
          %1328 = vmatpush1.msra.mxu0 %v1288
          %1329 = vmatprep.subr.mxu0 0.0
          %1330 = vmatpush1.msra.mxu0 %v1287
          %1331 = vmatprep.subr.mxu0 0.0
          %1332 = vmatpush2.msra.mxu0 0.0
          %1333 = vmatprep.subr.mxu0 0.0
          %1334 = vmatpush2.msra.mxu0 0.0
          %1335 = vmatprep.subr.mxu0 0.0
          %1336 = vmatpush2.msra.mxu0 0.0
          %1337 = vmatprep.subr.mxu0 0.0
          %1338 = vmatpush2.msra.mxu0 0.0
          %1339 = vmatprep.subr.mxu0 0.0
          %1340 = vmatpush2.msra.mxu0 0.0
          %1341 = vmatprep.subr.mxu0 0.0
          %1342 = vmatpush2.msra.mxu0 0.0
          %1343 = vmatprep.subr.mxu0 0.0
          %1344 = vmatpush2.msra.mxu0 0.0
          %1345 = vmatprep.subr.mxu0 0.0
          %1346 = vmatpush2.msra.mxu0 0.0
          %1347 = vmatprep.subr.mxu0 0.0
          %1348 = vmatpush2.msra.mxu0 0.0
          %1349 = vmatprep.subr.mxu0 0.0
          %1350 = vmatpush2.msra.mxu0 0.0
          %1351 = vmatprep.subr.mxu0 0.0
          %1352 = vmatpush2.msra.mxu0 0.0
          %1353 = vmatprep.subr.mxu0 0.0
          %1354 = vmatpush2.msra.mxu0 0.0
          %1355 = vmatprep.subr.mxu0 0.0
          %1356 = vmatpush2.msra.mxu0 0.0
          %1357 = vmatprep.subr.mxu0 0.0
          %1358 = vmatpush2.msra.mxu0 0.0
          %1359 = vmatprep.subr.mxu0 0.0
          %1360 = vmatpush2.msra.mxu0 0.0
          %1361 = vmatprep.subr.mxu0 0.0
          %1362 = vmatpush2.msra.mxu0 0.0
          %1363 = vmatprep.mubr.f32.mxu0 0.0
          %1364 = vmatmul.mubr.f32.gmra.mxu0 %v1297
          %v1365 = vpop.f32.mrf.mxu0
          %v1366 = vadd.f32 0.0, %v1365
          %v1367 = vpop.f32.mrf.mxu0
          %1368 = vdwg.mxu0
          %1370 = vrot.lane.b32.xlu0 %v1366, 127
          %v1371 = vpop.permute.xlu0 %1370
          %v1374 = vsel %vm1295, %v1292, 0
          %1376 = vmatprep.subr.mxu0 0.0
          %1377 = vmatpush1.msra.mxu0 0.0
          %1378 = vmatprep.subr.mxu0 0.0
          %1379 = vmatpush1.msra.mxu0 0.0
          %1380 = vmatprep.subr.mxu0 0.0
          %1381 = vmatpush1.msra.mxu0 0.0
          %1382 = vmatprep.subr.mxu0 0.0
          %1383 = vmatpush1.msra.mxu0 0.0
          %1384 = vmatprep.subr.mxu0 0.0
          %1385 = vmatpush1.msra.mxu0 0.0
          %1386 = vmatprep.subr.mxu0 0.0
          %1387 = vmatpush1.msra.mxu0 0.0
          %1388 = vmatprep.subr.mxu0 0.0
          %1389 = vmatpush1.msra.mxu0 0.0
          %1390 = vmatprep.subr.mxu0 0.0
          %1391 = vmatpush1.msra.mxu0 0.0
          %1392 = vmatprep.subr.mxu0 0.0
          %1393 = vmatpush1.msra.mxu0 0.0
          %1394 = vmatprep.subr.mxu0 0.0
          %1395 = vmatpush1.msra.mxu0 0.0
          %1396 = vmatprep.subr.mxu0 0.0
          %1397 = vmatpush1.msra.mxu0 0.0
          %1398 = vmatprep.subr.mxu0 0.0
          %1399 = vmatpush1.msra.mxu0 %v1291
          %1400 = vmatprep.subr.mxu0 0.0
          %1401 = vmatpush1.msra.mxu0 %v1290
          %1402 = vmatprep.subr.mxu0 0.0
          %1403 = vmatpush1.msra.mxu0 %v1289
          %1404 = vmatprep.subr.mxu0 0.0
          %1405 = vmatpush1.msra.mxu0 %v1288
          %1406 = vmatprep.subr.mxu0 0.0
          %1407 = vmatpush1.msra.mxu0 %v1287
          %1408 = vmatprep.subr.mxu0 0.0
          %1409 = vmatpush2.msra.mxu0 0.0
          %1410 = vmatprep.subr.mxu0 0.0
          %1411 = vmatpush2.msra.mxu0 0.0
          %1412 = vmatprep.subr.mxu0 0.0
          %1413 = vmatpush2.msra.mxu0 0.0
          %1414 = vmatprep.subr.mxu0 0.0
          %1415 = vmatpush2.msra.mxu0 0.0
          %1416 = vmatprep.subr.mxu0 0.0
          %1417 = vmatpush2.msra.mxu0 0.0
          %1418 = vmatprep.subr.mxu0 0.0
          %1419 = vmatpush2.msra.mxu0 0.0
          %1420 = vmatprep.subr.mxu0 0.0
          %1421 = vmatpush2.msra.mxu0 0.0
          %1422 = vmatprep.subr.mxu0 0.0
          %1423 = vmatpush2.msra.mxu0 0.0
          %1424 = vmatprep.subr.mxu0 0.0
          %1425 = vmatpush2.msra.mxu0 0.0
          %1426 = vmatprep.subr.mxu0 0.0
          %1427 = vmatpush2.msra.mxu0 0.0
          %1428 = vmatprep.subr.mxu0 0.0
          %1429 = vmatpush2.msra.mxu0 0.0
          %1430 = vmatprep.subr.mxu0 0.0
          %1431 = vmatpush2.msra.mxu0 0.0
          %1432 = vmatprep.subr.mxu0 0.0
          %1433 = vmatpush2.msra.mxu0 0.0
          %1434 = vmatprep.subr.mxu0 0.0
          %1435 = vmatpush2.msra.mxu0 0.0
          %1436 = vmatprep.subr.mxu0 0.0
          %1437 = vmatpush2.msra.mxu0 0.0
          %1438 = vmatprep.subr.mxu0 0.0
          %1439 = vmatpush2.msra.mxu0 0.0
          %1440 = vmatprep.mubr.f32.mxu0 0.0
          %1441 = vmatmul.mubr.f32.gmra.mxu0 %v1374
          %v1442 = vpop.f32.mrf.mxu0
          %v1443 = vadd.f32 %v1371, %v1442
          %v1444 = vpop.f32.mrf.mxu0
          %1445 = vdwg.mxu0
          %s1446 = scalar_lea.vmem %s3, 16
          %v1447 = vld [vmem:[%s1446] sm:$0xff]
          %v1449 = vsel %vm1295, %v1447, 0
          %1451 = vmatprep.subr.mxu0 0.0
          %1452 = vmatpush1.msra.mxu0 0.0
          %1453 = vmatprep.subr.mxu0 0.0
          %1454 = vmatpush1.msra.mxu0 0.0
          %1455 = vmatprep.subr.mxu0 0.0
          %1456 = vmatpush1.msra.mxu0 0.0
          %1457 = vmatprep.subr.mxu0 0.0
          %1458 = vmatpush1.msra.mxu0 0.0
          %1459 = vmatprep.subr.mxu0 0.0
          %1460 = vmatpush1.msra.mxu0 0.0
          %1461 = vmatprep.subr.mxu0 0.0
          %1462 = vmatpush1.msra.mxu0 0.0
          %1463 = vmatprep.subr.mxu0 0.0
          %1464 = vmatpush1.msra.mxu0 0.0
          %1465 = vmatprep.subr.mxu0 0.0
          %1466 = vmatpush1.msra.mxu0 0.0
          %1467 = vmatprep.subr.mxu0 0.0
          %1468 = vmatpush1.msra.mxu0 0.0
          %1469 = vmatprep.subr.mxu0 0.0
          %1470 = vmatpush1.msra.mxu0 0.0
          %1471 = vmatprep.subr.mxu0 0.0
          %1472 = vmatpush1.msra.mxu0 0.0
          %1473 = vmatprep.subr.mxu0 0.0
          %1474 = vmatpush1.msra.mxu0 %v1291
          %1475 = vmatprep.subr.mxu0 0.0
          %1476 = vmatpush1.msra.mxu0 %v1290
          %1477 = vmatprep.subr.mxu0 0.0
          %1478 = vmatpush1.msra.mxu0 %v1289
          %1479 = vmatprep.subr.mxu0 0.0
          %1480 = vmatpush1.msra.mxu0 %v1288
          %1481 = vmatprep.subr.mxu0 0.0
          %1482 = vmatpush1.msra.mxu0 %v1287
          %1483 = vmatprep.subr.mxu0 0.0
          %1484 = vmatpush2.msra.mxu0 0.0
          %1485 = vmatprep.subr.mxu0 0.0
          %1486 = vmatpush2.msra.mxu0 0.0
          %1487 = vmatprep.subr.mxu0 0.0
          %1488 = vmatpush2.msra.mxu0 0.0
          %1489 = vmatprep.subr.mxu0 0.0
          %1490 = vmatpush2.msra.mxu0 0.0
          %1491 = vmatprep.subr.mxu0 0.0
          %1492 = vmatpush2.msra.mxu0 0.0
          %1493 = vmatprep.subr.mxu0 0.0
          %1494 = vmatpush2.msra.mxu0 0.0
          %1495 = vmatprep.subr.mxu0 0.0
          %1496 = vmatpush2.msra.mxu0 0.0
          %1497 = vmatprep.subr.mxu0 0.0
          %1498 = vmatpush2.msra.mxu0 0.0
          %1499 = vmatprep.subr.mxu0 0.0
          %1500 = vmatpush2.msra.mxu0 0.0
          %1501 = vmatprep.subr.mxu0 0.0
          %1502 = vmatpush2.msra.mxu0 0.0
          %1503 = vmatprep.subr.mxu0 0.0
          %1504 = vmatpush2.msra.mxu0 0.0
          %1505 = vmatprep.subr.mxu0 0.0
          %1506 = vmatpush2.msra.mxu0 0.0
          %1507 = vmatprep.subr.mxu0 0.0
          %1508 = vmatpush2.msra.mxu0 0.0
          %1509 = vmatprep.subr.mxu0 0.0
          %1510 = vmatpush2.msra.mxu0 0.0
          %1511 = vmatprep.subr.mxu0 0.0
          %1512 = vmatpush2.msra.mxu0 0.0
          %1513 = vmatprep.subr.mxu0 0.0
          %1514 = vmatpush2.msra.mxu0 0.0
          %1515 = vmatprep.mubr.f32.mxu0 0.0
          %1516 = vmatmul.mubr.f32.gmra.mxu0 %v1449
          %v1517 = vpop.f32.mrf.mxu0
          %v1518 = vadd.f32 0.0, %v1517
          %v1519 = vpop.f32.mrf.mxu0
          %1520 = vdwg.mxu0
          %1522 = vrot.lane.b32.xlu0 %v1518, 126
          %v1523 = vpop.permute.xlu0 %1522
          %v1525 = vadd.f32 %v1443, %v1523
          %s1526 = scalar_lea.vmem %s3, 24
          %v1527 = vld [vmem:[%s1526] sm:$0xff]
          %v1529 = vsel %vm1295, %v1527, 0
          %1531 = vmatprep.subr.mxu0 0.0
          %1532 = vmatpush1.msra.mxu0 0.0
          %1533 = vmatprep.subr.mxu0 0.0
          %1534 = vmatpush1.msra.mxu0 0.0
          %1535 = vmatprep.subr.mxu0 0.0
          %1536 = vmatpush1.msra.mxu0 0.0
          %1537 = vmatprep.subr.mxu0 0.0
          %1538 = vmatpush1.msra.mxu0 0.0
          %1539 = vmatprep.subr.mxu0 0.0
          %1540 = vmatpush1.msra.mxu0 0.0
          %1541 = vmatprep.subr.mxu0 0.0
          %1542 = vmatpush1.msra.mxu0 0.0
          %1543 = vmatprep.subr.mxu0 0.0
          %1544 = vmatpush1.msra.mxu0 0.0
          %1545 = vmatprep.subr.mxu0 0.0
          %1546 = vmatpush1.msra.mxu0 0.0
          %1547 = vmatprep.subr.mxu0 0.0
          %1548 = vmatpush1.msra.mxu0 0.0
          %1549 = vmatprep.subr.mxu0 0.0
          %1550 = vmatpush1.msra.mxu0 0.0
          %1551 = vmatprep.subr.mxu0 0.0
          %1552 = vmatpush1.msra.mxu0 0.0
          %1553 = vmatprep.subr.mxu0 0.0
          %1554 = vmatpush1.msra.mxu0 %v1291
          %1555 = vmatprep.subr.mxu0 0.0
          %1556 = vmatpush1.msra.mxu0 %v1290
          %1557 = vmatprep.subr.mxu0 0.0
          %1558 = vmatpush1.msra.mxu0 %v1289
          %1559 = vmatprep.subr.mxu0 0.0
          %1560 = vmatpush1.msra.mxu0 %v1288
          %1561 = vmatprep.subr.mxu0 0.0
          %1562 = vmatpush1.msra.mxu0 %v1287
          %1563 = vmatprep.subr.mxu0 0.0
          %1564 = vmatpush2.msra.mxu0 0.0
          %1565 = vmatprep.subr.mxu0 0.0
          %1566 = vmatpush2.msra.mxu0 0.0
          %1567 = vmatprep.subr.mxu0 0.0
          %1568 = vmatpush2.msra.mxu0 0.0
          %1569 = vmatprep.subr.mxu0 0.0
          %1570 = vmatpush2.msra.mxu0 0.0
          %1571 = vmatprep.subr.mxu0 0.0
          %1572 = vmatpush2.msra.mxu0 0.0
          %1573 = vmatprep.subr.mxu0 0.0
          %1574 = vmatpush2.msra.mxu0 0.0
          %1575 = vmatprep.subr.mxu0 0.0
          %1576 = vmatpush2.msra.mxu0 0.0
          %1577 = vmatprep.subr.mxu0 0.0
          %1578 = vmatpush2.msra.mxu0 0.0
          %1579 = vmatprep.subr.mxu0 0.0
          %1580 = vmatpush2.msra.mxu0 0.0
          %1581 = vmatprep.subr.mxu0 0.0
          %1582 = vmatpush2.msra.mxu0 0.0
          %1583 = vmatprep.subr.mxu0 0.0
          %1584 = vmatpush2.msra.mxu0 0.0
          %1585 = vmatprep.subr.mxu0 0.0
          %1586 = vmatpush2.msra.mxu0 0.0
          %1587 = vmatprep.subr.mxu0 0.0
          %1588 = vmatpush2.msra.mxu0 0.0
          %1589 = vmatprep.subr.mxu0 0.0
          %1590 = vmatpush2.msra.mxu0 0.0
          %1591 = vmatprep.subr.mxu0 0.0
          %1592 = vmatpush2.msra.mxu0 0.0
          %1593 = vmatprep.subr.mxu0 0.0
          %1594 = vmatpush2.msra.mxu0 0.0
          %1595 = vmatprep.mubr.f32.mxu0 0.0
          %1596 = vmatmul.mubr.f32.gmra.mxu0 %v1529
          %v1597 = vpop.f32.mrf.mxu0
          %v1598 = vadd.f32 0.0, %v1597
          %v1599 = vpop.f32.mrf.mxu0
          %1600 = vdwg.mxu0
          %1602 = vrot.lane.b32.xlu0 %v1598, 125
          %v1603 = vpop.permute.xlu0 %1602
          %v1605 = vadd.f32 %v1525, %v1603
          %s1606 = scalar_lea.vmem %s3, 32
          %v1607 = vld [vmem:[%s1606] sm:$0xff]
          %v1609 = vsel %vm1295, %v1607, 0
          %1611 = vmatprep.subr.mxu0 0.0
          %1612 = vmatpush1.msra.mxu0 0.0
          %1613 = vmatprep.subr.mxu0 0.0
          %1614 = vmatpush1.msra.mxu0 0.0
          %1615 = vmatprep.subr.mxu0 0.0
          %1616 = vmatpush1.msra.mxu0 0.0
          %1617 = vmatprep.subr.mxu0 0.0
          %1618 = vmatpush1.msra.mxu0 0.0
          %1619 = vmatprep.subr.mxu0 0.0
          %1620 = vmatpush1.msra.mxu0 0.0
          %1621 = vmatprep.subr.mxu0 0.0
          %1622 = vmatpush1.msra.mxu0 0.0
          %1623 = vmatprep.subr.mxu0 0.0
          %1624 = vmatpush1.msra.mxu0 0.0
          %1625 = vmatprep.subr.mxu0 0.0
          %1626 = vmatpush1.msra.mxu0 0.0
          %1627 = vmatprep.subr.mxu0 0.0
          %1628 = vmatpush1.msra.mxu0 0.0
          %1629 = vmatprep.subr.mxu0 0.0
          %1630 = vmatpush1.msra.mxu0 0.0
          %1631 = vmatprep.subr.mxu0 0.0
          %1632 = vmatpush1.msra.mxu0 0.0
          %1633 = vmatprep.subr.mxu0 0.0
          %1634 = vmatpush1.msra.mxu0 %v1291
          %1635 = vmatprep.subr.mxu0 0.0
          %1636 = vmatpush1.msra.mxu0 %v1290
          %1637 = vmatprep.subr.mxu0 0.0
          %1638 = vmatpush1.msra.mxu0 %v1289
          %1639 = vmatprep.subr.mxu0 0.0
          %1640 = vmatpush1.msra.mxu0 %v1288
          %1641 = vmatprep.subr.mxu0 0.0
          %1642 = vmatpush1.msra.mxu0 %v1287
          %1643 = vmatprep.subr.mxu0 0.0
          %1644 = vmatpush2.msra.mxu0 0.0
          %1645 = vmatprep.subr.mxu0 0.0
          %1646 = vmatpush2.msra.mxu0 0.0
          %1647 = vmatprep.subr.mxu0 0.0
          %1648 = vmatpush2.msra.mxu0 0.0
          %1649 = vmatprep.subr.mxu0 0.0
          %1650 = vmatpush2.msra.mxu0 0.0
          %1651 = vmatprep.subr.mxu0 0.0
          %1652 = vmatpush2.msra.mxu0 0.0
          %1653 = vmatprep.subr.mxu0 0.0
          %1654 = vmatpush2.msra.mxu0 0.0
          %1655 = vmatprep.subr.mxu0 0.0
          %1656 = vmatpush2.msra.mxu0 0.0
          %1657 = vmatprep.subr.mxu0 0.0
          %1658 = vmatpush2.msra.mxu0 0.0
          %1659 = vmatprep.subr.mxu0 0.0
          %1660 = vmatpush2.msra.mxu0 0.0
          %1661 = vmatprep.subr.mxu0 0.0
          %1662 = vmatpush2.msra.mxu0 0.0
          %1663 = vmatprep.subr.mxu0 0.0
          %1664 = vmatpush2.msra.mxu0 0.0
          %1665 = vmatprep.subr.mxu0 0.0
          %1666 = vmatpush2.msra.mxu0 0.0
          %1667 = vmatprep.subr.mxu0 0.0
          %1668 = vmatpush2.msra.mxu0 0.0
          %1669 = vmatprep.subr.mxu0 0.0
          %1670 = vmatpush2.msra.mxu0 0.0
          %1671 = vmatprep.subr.mxu0 0.0
          %1672 = vmatpush2.msra.mxu0 0.0
          %1673 = vmatprep.subr.mxu0 0.0
          %1674 = vmatpush2.msra.mxu0 0.0
          %1675 = vmatprep.mubr.f32.mxu0 0.0
          %1676 = vmatmul.mubr.f32.gmra.mxu0 %v1609
          %v1677 = vpop.f32.mrf.mxu0
          %v1678 = vadd.f32 0.0, %v1677
          %v1679 = vpop.f32.mrf.mxu0
          %1680 = vdwg.mxu0
          %1682 = vrot.lane.b32.xlu0 %v1678, 124
          %v1683 = vpop.permute.xlu0 %1682
          %v1685 = vadd.f32 %v1605, %v1683
          %v1686 = vmul.f32 %v1685, %v1271
          %v1687 = vadd.f32 %v1686, %v1278
          %s1688 = sadd.s32 %s1280, 4
          %s1689 = smul.u32 %s1688, 8
          %s1690 = scalar_lea.vmem [#allocation4], %s1689
          %1691 = vst [vmem:[%s1690] sm:$0xff] %v1687
        $region96: #{net_forward.1} parent=71 // loop_footer
          %s1284 = sadd.s32 1, %s1280
        $region97: #{net_forward.1} parent=71 // loop_footer_branch
          %1279 = sbr.rel target = $region93
        $region98: #{net_forward.1} parent=71 // loop_exit
          _
        %vm1692 = vcmp.ge.s32.totalorder %v1003, 5
        %vm1693 = vcmp.lt.s32.totalorder %v1003, 53
        %vm1694 = vmand %vm1692, %vm1693
        %v1695 = vsel %vm1694, 1, 0
        %v1696 = vcvt.s32.f32 %v1695
        %v1697 = vld [vmem:[%s6] sm:$0xff]
        %1699 = vset.pattern.permute.xlu0 0
        %1700 = vperm.xlu0 %1699, %v1697
        %v1701 = vpop.permute.xlu0 %1700
        %v1703 = vmul.f32 %v1701, %v1696
        loop: start=0, step=1, limit=17
        $region99: #{net_forward.1} parent=71 // loop_pre_header
          _
        $region100: #{net_forward.1} parent=71 // loop_header
          %s1705 = sphi 0, %s1709
          %p1706 = scmp.ge.s32.totalorder %s1705, 17
        $region101: #{net_forward.1} parent=71 // loop_header_branch
          %1708 = sbr.rel (%p1706) target = $region105
        $region102: #{net_forward.1} parent=71 // loop_body
          %s1710 = smul.u32 %s1705, 8
          %s1711 = scalar_lea.vmem [#allocation4], %s1710
          %v1712 = vld [vmem:[%s1711] sm:$0xff]
          %v1713 = vld [vmem:[%s1711 + $0x8] sm:$0xff]
          %v1714 = vld [vmem:[%s1711 + $0x10] sm:$0xff]
          %v1715 = vld [vmem:[%s1711 + $0x18] sm:$0xff]
          %v1716 = vld [vmem:[%s1711 + $0x20] sm:$0xff]
          %v1717 = vld [vmem:[%s1711 + $0x28] sm:$0xff]
          %v1718 = vld [vmem:[%s1711 + $0x30] sm:$0xff]
          %v1719 = vld [vmem:[%s1711 + $0x38] sm:$0xff]
          %v1720 = vld [vmem:[#allocation9] sm:$0xff]
          %s1721 = scalar_lea.vmem [#allocation9], 8
          %v1722 = vld [vmem:[%s1721] sm:$0xff]
          %vm1723 = vcmask 523264
          %v1725 = vsel %vm1723, %v1722, 0
          %1727 = vmatprep.subr.mxu0 0.0
          %1728 = vmatpush1.msra.mxu0 0.0
          %1729 = vmatprep.subr.mxu0 0.0
          %1730 = vmatpush1.msra.mxu0 0.0
          %1731 = vmatprep.subr.mxu0 0.0
          %1732 = vmatpush1.msra.mxu0 0.0
          %1733 = vmatprep.subr.mxu0 0.0
          %1734 = vmatpush1.msra.mxu0 0.0
          %1735 = vmatprep.subr.mxu0 0.0
          %1736 = vmatpush1.msra.mxu0 0.0
          %1737 = vmatprep.subr.mxu0 0.0
          %1738 = vmatpush1.msra.mxu0 0.0
          %1739 = vmatprep.subr.mxu0 0.0
          %1740 = vmatpush1.msra.mxu0 0.0
          %1741 = vmatprep.subr.mxu0 0.0
          %1742 = vmatpush1.msra.mxu0 0.0
          %1743 = vmatprep.subr.mxu0 0.0
          %1744 = vmatpush1.msra.mxu0 %v1719
          %1745 = vmatprep.subr.mxu0 0.0
          %1746 = vmatpush1.msra.mxu0 %v1718
          %1747 = vmatprep.subr.mxu0 0.0
          %1748 = vmatpush1.msra.mxu0 %v1717
          %1749 = vmatprep.subr.mxu0 0.0
          %1750 = vmatpush1.msra.mxu0 %v1716
          %1751 = vmatprep.subr.mxu0 0.0
          %1752 = vmatpush1.msra.mxu0 %v1715
          %1753 = vmatprep.subr.mxu0 0.0
          %1754 = vmatpush1.msra.mxu0 %v1714
          %1755 = vmatprep.subr.mxu0 0.0
          %1756 = vmatpush1.msra.mxu0 %v1713
          %1757 = vmatprep.subr.mxu0 0.0
          %1758 = vmatpush1.msra.mxu0 %v1712
          %1759 = vmatprep.subr.mxu0 0.0
          %1760 = vmatpush2.msra.mxu0 0.0
          %1761 = vmatprep.subr.mxu0 0.0
          %1762 = vmatpush2.msra.mxu0 0.0
          %1763 = vmatprep.subr.mxu0 0.0
          %1764 = vmatpush2.msra.mxu0 0.0
          %1765 = vmatprep.subr.mxu0 0.0
          %1766 = vmatpush2.msra.mxu0 0.0
          %1767 = vmatprep.subr.mxu0 0.0
          %1768 = vmatpush2.msra.mxu0 0.0
          %1769 = vmatprep.subr.mxu0 0.0
          %1770 = vmatpush2.msra.mxu0 0.0
          %1771 = vmatprep.subr.mxu0 0.0
          %1772 = vmatpush2.msra.mxu0 0.0
          %1773 = vmatprep.subr.mxu0 0.0
          %1774 = vmatpush2.msra.mxu0 0.0
          %1775 = vmatprep.subr.mxu0 0.0
          %1776 = vmatpush2.msra.mxu0 0.0
          %1777 = vmatprep.subr.mxu0 0.0
          %1778 = vmatpush2.msra.mxu0 0.0
          %1779 = vmatprep.subr.mxu0 0.0
          %1780 = vmatpush2.msra.mxu0 0.0
          %1781 = vmatprep.subr.mxu0 0.0
          %1782 = vmatpush2.msra.mxu0 0.0
          %1783 = vmatprep.subr.mxu0 0.0
          %1784 = vmatpush2.msra.mxu0 0.0
          %1785 = vmatprep.subr.mxu0 0.0
          %1786 = vmatpush2.msra.mxu0 0.0
          %1787 = vmatprep.subr.mxu0 0.0
          %1788 = vmatpush2.msra.mxu0 0.0
          %1789 = vmatprep.subr.mxu0 0.0
          %1790 = vmatpush2.msra.mxu0 0.0
          %1791 = vmatprep.mubr.f32.mxu0 0.0
          %1792 = vmatmul.mubr.f32.gmra.mxu0 %v1725
          %v1793 = vpop.f32.mrf.mxu0
          %v1794 = vadd.f32 0.0, %v1793
          %v1795 = vpop.f32.mrf.mxu0
          %1796 = vdwg.mxu0
          %1798 = vrot.lane.b32.xlu0 %v1794, 127
          %v1799 = vpop.permute.xlu0 %1798
          %v1802 = vsel %vm1723, %v1720, 0
          %1804 = vmatprep.subr.mxu0 0.0
          %1805 = vmatpush1.msra.mxu0 0.0
          %1806 = vmatprep.subr.mxu0 0.0
          %1807 = vmatpush1.msra.mxu0 0.0
          %1808 = vmatprep.subr.mxu0 0.0
          %1809 = vmatpush1.msra.mxu0 0.0
          %1810 = vmatprep.subr.mxu0 0.0
          %1811 = vmatpush1.msra.mxu0 0.0
          %1812 = vmatprep.subr.mxu0 0.0
          %1813 = vmatpush1.msra.mxu0 0.0
          %1814 = vmatprep.subr.mxu0 0.0
          %1815 = vmatpush1.msra.mxu0 0.0
          %1816 = vmatprep.subr.mxu0 0.0
          %1817 = vmatpush1.msra.mxu0 0.0
          %1818 = vmatprep.subr.mxu0 0.0
          %1819 = vmatpush1.msra.mxu0 0.0
          %1820 = vmatprep.subr.mxu0 0.0
          %1821 = vmatpush1.msra.mxu0 %v1719
          %1822 = vmatprep.subr.mxu0 0.0
          %1823 = vmatpush1.msra.mxu0 %v1718
          %1824 = vmatprep.subr.mxu0 0.0
          %1825 = vmatpush1.msra.mxu0 %v1717
          %1826 = vmatprep.subr.mxu0 0.0
          %1827 = vmatpush1.msra.mxu0 %v1716
          %1828 = vmatprep.subr.mxu0 0.0
          %1829 = vmatpush1.msra.mxu0 %v1715
          %1830 = vmatprep.subr.mxu0 0.0
          %1831 = vmatpush1.msra.mxu0 %v1714
          %1832 = vmatprep.subr.mxu0 0.0
          %1833 = vmatpush1.msra.mxu0 %v1713
          %1834 = vmatprep.subr.mxu0 0.0
          %1835 = vmatpush1.msra.mxu0 %v1712
          %1836 = vmatprep.subr.mxu0 0.0
          %1837 = vmatpush2.msra.mxu0 0.0
          %1838 = vmatprep.subr.mxu0 0.0
          %1839 = vmatpush2.msra.mxu0 0.0
          %1840 = vmatprep.subr.mxu0 0.0
          %1841 = vmatpush2.msra.mxu0 0.0
          %1842 = vmatprep.subr.mxu0 0.0
          %1843 = vmatpush2.msra.mxu0 0.0
          %1844 = vmatprep.subr.mxu0 0.0
          %1845 = vmatpush2.msra.mxu0 0.0
          %1846 = vmatprep.subr.mxu0 0.0
          %1847 = vmatpush2.msra.mxu0 0.0
          %1848 = vmatprep.subr.mxu0 0.0
          %1849 = vmatpush2.msra.mxu0 0.0
          %1850 = vmatprep.subr.mxu0 0.0
          %1851 = vmatpush2.msra.mxu0 0.0
          %1852 = vmatprep.subr.mxu0 0.0
          %1853 = vmatpush2.msra.mxu0 0.0
          %1854 = vmatprep.subr.mxu0 0.0
          %1855 = vmatpush2.msra.mxu0 0.0
          %1856 = vmatprep.subr.mxu0 0.0
          %1857 = vmatpush2.msra.mxu0 0.0
          %1858 = vmatprep.subr.mxu0 0.0
          %1859 = vmatpush2.msra.mxu0 0.0
          %1860 = vmatprep.subr.mxu0 0.0
          %1861 = vmatpush2.msra.mxu0 0.0
          %1862 = vmatprep.subr.mxu0 0.0
          %1863 = vmatpush2.msra.mxu0 0.0
          %1864 = vmatprep.subr.mxu0 0.0
          %1865 = vmatpush2.msra.mxu0 0.0
          %1866 = vmatprep.subr.mxu0 0.0
          %1867 = vmatpush2.msra.mxu0 0.0
          %1868 = vmatprep.mubr.f32.mxu0 0.0
          %1869 = vmatmul.mubr.f32.gmra.mxu0 %v1802
          %v1870 = vpop.f32.mrf.mxu0
          %v1871 = vadd.f32 %v1799, %v1870
          %v1872 = vpop.f32.mrf.mxu0
          %1873 = vdwg.mxu0
          %s1874 = scalar_lea.vmem [#allocation9], 16
          %v1875 = vld [vmem:[%s1874] sm:$0xff]
          %v1877 = vsel %vm1723, %v1875, 0
          %1879 = vmatprep.subr.mxu0 0.0
          %1880 = vmatpush1.msra.mxu0 0.0
          %1881 = vmatprep.subr.mxu0 0.0
          %1882 = vmatpush1.msra.mxu0 0.0
          %1883 = vmatprep.subr.mxu0 0.0
          %1884 = vmatpush1.msra.mxu0 0.0
          %1885 = vmatprep.subr.mxu0 0.0
          %1886 = vmatpush1.msra.mxu0 0.0
          %1887 = vmatprep.subr.mxu0 0.0
          %1888 = vmatpush1.msra.mxu0 0.0
          %1889 = vmatprep.subr.mxu0 0.0
          %1890 = vmatpush1.msra.mxu0 0.0
          %1891 = vmatprep.subr.mxu0 0.0
          %1892 = vmatpush1.msra.mxu0 0.0
          %1893 = vmatprep.subr.mxu0 0.0
          %1894 = vmatpush1.msra.mxu0 0.0
          %1895 = vmatprep.subr.mxu0 0.0
          %1896 = vmatpush1.msra.mxu0 %v1719
          %1897 = vmatprep.subr.mxu0 0.0
          %1898 = vmatpush1.msra.mxu0 %v1718
          %1899 = vmatprep.subr.mxu0 0.0
          %1900 = vmatpush1.msra.mxu0 %v1717
          %1901 = vmatprep.subr.mxu0 0.0
          %1902 = vmatpush1.msra.mxu0 %v1716
          %1903 = vmatprep.subr.mxu0 0.0
          %1904 = vmatpush1.msra.mxu0 %v1715
          %1905 = vmatprep.subr.mxu0 0.0
          %1906 = vmatpush1.msra.mxu0 %v1714
          %1907 = vmatprep.subr.mxu0 0.0
          %1908 = vmatpush1.msra.mxu0 %v1713
          %1909 = vmatprep.subr.mxu0 0.0
          %1910 = vmatpush1.msra.mxu0 %v1712
          %1911 = vmatprep.subr.mxu0 0.0
          %1912 = vmatpush2.msra.mxu0 0.0
          %1913 = vmatprep.subr.mxu0 0.0
          %1914 = vmatpush2.msra.mxu0 0.0
          %1915 = vmatprep.subr.mxu0 0.0
          %1916 = vmatpush2.msra.mxu0 0.0
          %1917 = vmatprep.subr.mxu0 0.0
          %1918 = vmatpush2.msra.mxu0 0.0
          %1919 = vmatprep.subr.mxu0 0.0
          %1920 = vmatpush2.msra.mxu0 0.0
          %1921 = vmatprep.subr.mxu0 0.0
          %1922 = vmatpush2.msra.mxu0 0.0
          %1923 = vmatprep.subr.mxu0 0.0
          %1924 = vmatpush2.msra.mxu0 0.0
          %1925 = vmatprep.subr.mxu0 0.0
          %1926 = vmatpush2.msra.mxu0 0.0
          %1927 = vmatprep.subr.mxu0 0.0
          %1928 = vmatpush2.msra.mxu0 0.0
          %1929 = vmatprep.subr.mxu0 0.0
          %1930 = vmatpush2.msra.mxu0 0.0
          %1931 = vmatprep.subr.mxu0 0.0
          %1932 = vmatpush2.msra.mxu0 0.0
          %1933 = vmatprep.subr.mxu0 0.0
          %1934 = vmatpush2.msra.mxu0 0.0
          %1935 = vmatprep.subr.mxu0 0.0
          %1936 = vmatpush2.msra.mxu0 0.0
          %1937 = vmatprep.subr.mxu0 0.0
          %1938 = vmatpush2.msra.mxu0 0.0
          %1939 = vmatprep.subr.mxu0 0.0
          %1940 = vmatpush2.msra.mxu0 0.0
          %1941 = vmatprep.subr.mxu0 0.0
          %1942 = vmatpush2.msra.mxu0 0.0
          %1943 = vmatprep.mubr.f32.mxu0 0.0
          %1944 = vmatmul.mubr.f32.gmra.mxu0 %v1877
          %v1945 = vpop.f32.mrf.mxu0
          %v1946 = vadd.f32 0.0, %v1945
          %v1947 = vpop.f32.mrf.mxu0
          %1948 = vdwg.mxu0
          %1950 = vrot.lane.b32.xlu0 %v1946, 126
          %v1951 = vpop.permute.xlu0 %1950
          %v1953 = vadd.f32 %v1871, %v1951
          %s1954 = scalar_lea.vmem [#allocation9], 24
          %v1955 = vld [vmem:[%s1954] sm:$0xff]
          %v1957 = vsel %vm1723, %v1955, 0
          %1959 = vmatprep.subr.mxu0 0.0
          %1960 = vmatpush1.msra.mxu0 0.0
          %1961 = vmatprep.subr.mxu0 0.0
          %1962 = vmatpush1.msra.mxu0 0.0
          %1963 = vmatprep.subr.mxu0 0.0
          %1964 = vmatpush1.msra.mxu0 0.0
          %1965 = vmatprep.subr.mxu0 0.0
          %1966 = vmatpush1.msra.mxu0 0.0
          %1967 = vmatprep.subr.mxu0 0.0
          %1968 = vmatpush1.msra.mxu0 0.0
          %1969 = vmatprep.subr.mxu0 0.0
          %1970 = vmatpush1.msra.mxu0 0.0
          %1971 = vmatprep.subr.mxu0 0.0
          %1972 = vmatpush1.msra.mxu0 0.0
          %1973 = vmatprep.subr.mxu0 0.0
          %1974 = vmatpush1.msra.mxu0 0.0
          %1975 = vmatprep.subr.mxu0 0.0
          %1976 = vmatpush1.msra.mxu0 %v1719
          %1977 = vmatprep.subr.mxu0 0.0
          %1978 = vmatpush1.msra.mxu0 %v1718
          %1979 = vmatprep.subr.mxu0 0.0
          %1980 = vmatpush1.msra.mxu0 %v1717
          %1981 = vmatprep.subr.mxu0 0.0
          %1982 = vmatpush1.msra.mxu0 %v1716
          %1983 = vmatprep.subr.mxu0 0.0
          %1984 = vmatpush1.msra.mxu0 %v1715
          %1985 = vmatprep.subr.mxu0 0.0
          %1986 = vmatpush1.msra.mxu0 %v1714
          %1987 = vmatprep.subr.mxu0 0.0
          %1988 = vmatpush1.msra.mxu0 %v1713
          %1989 = vmatprep.subr.mxu0 0.0
          %1990 = vmatpush1.msra.mxu0 %v1712
          %1991 = vmatprep.subr.mxu0 0.0
          %1992 = vmatpush2.msra.mxu0 0.0
          %1993 = vmatprep.subr.mxu0 0.0
          %1994 = vmatpush2.msra.mxu0 0.0
          %1995 = vmatprep.subr.mxu0 0.0
          %1996 = vmatpush2.msra.mxu0 0.0
          %1997 = vmatprep.subr.mxu0 0.0
          %1998 = vmatpush2.msra.mxu0 0.0
          %1999 = vmatprep.subr.mxu0 0.0
          %2000 = vmatpush2.msra.mxu0 0.0
          %2001 = vmatprep.subr.mxu0 0.0
          %2002 = vmatpush2.msra.mxu0 0.0
          %2003 = vmatprep.subr.mxu0 0.0
          %2004 = vmatpush2.msra.mxu0 0.0
          %2005 = vmatprep.subr.mxu0 0.0
          %2006 = vmatpush2.msra.mxu0 0.0
          %2007 = vmatprep.subr.mxu0 0.0
          %2008 = vmatpush2.msra.mxu0 0.0
          %2009 = vmatprep.subr.mxu0 0.0
          %2010 = vmatpush2.msra.mxu0 0.0
          %2011 = vmatprep.subr.mxu0 0.0
          %2012 = vmatpush2.msra.mxu0 0.0
          %2013 = vmatprep.subr.mxu0 0.0
          %2014 = vmatpush2.msra.mxu0 0.0
          %2015 = vmatprep.subr.mxu0 0.0
          %2016 = vmatpush2.msra.mxu0 0.0
          %2017 = vmatprep.subr.mxu0 0.0
          %2018 = vmatpush2.msra.mxu0 0.0
          %2019 = vmatprep.subr.mxu0 0.0
          %2020 = vmatpush2.msra.mxu0 0.0
          %2021 = vmatprep.subr.mxu0 0.0
          %2022 = vmatpush2.msra.mxu0 0.0
          %2023 = vmatprep.mubr.f32.mxu0 0.0
          %2024 = vmatmul.mubr.f32.gmra.mxu0 %v1957
          %v2025 = vpop.f32.mrf.mxu0
          %v2026 = vadd.f32 0.0, %v2025
          %v2027 = vpop.f32.mrf.mxu0
          %2028 = vdwg.mxu0
          %2030 = vrot.lane.b32.xlu0 %v2026, 125
          %v2031 = vpop.permute.xlu0 %2030
          %v2033 = vadd.f32 %v1953, %v2031
          %s2034 = scalar_lea.vmem [#allocation9], 32
          %v2035 = vld [vmem:[%s2034] sm:$0xff]
          %v2037 = vsel %vm1723, %v2035, 0
          %2039 = vmatprep.subr.mxu0 0.0
          %2040 = vmatpush1.msra.mxu0 0.0
          %2041 = vmatprep.subr.mxu0 0.0
          %2042 = vmatpush1.msra.mxu0 0.0
          %2043 = vmatprep.subr.mxu0 0.0
          %2044 = vmatpush1.msra.mxu0 0.0
          %2045 = vmatprep.subr.mxu0 0.0
          %2046 = vmatpush1.msra.mxu0 0.0
          %2047 = vmatprep.subr.mxu0 0.0
          %2048 = vmatpush1.msra.mxu0 0.0
          %2049 = vmatprep.subr.mxu0 0.0
          %2050 = vmatpush1.msra.mxu0 0.0
          %2051 = vmatprep.subr.mxu0 0.0
          %2052 = vmatpush1.msra.mxu0 0.0
          %2053 = vmatprep.subr.mxu0 0.0
          %2054 = vmatpush1.msra.mxu0 0.0
          %2055 = vmatprep.subr.mxu0 0.0
          %2056 = vmatpush1.msra.mxu0 %v1719
          %2057 = vmatprep.subr.mxu0 0.0
          %2058 = vmatpush1.msra.mxu0 %v1718
          %2059 = vmatprep.subr.mxu0 0.0
          %2060 = vmatpush1.msra.mxu0 %v1717
          %2061 = vmatprep.subr.mxu0 0.0
          %2062 = vmatpush1.msra.mxu0 %v1716
          %2063 = vmatprep.subr.mxu0 0.0
          %2064 = vmatpush1.msra.mxu0 %v1715
          %2065 = vmatprep.subr.mxu0 0.0
          %2066 = vmatpush1.msra.mxu0 %v1714
          %2067 = vmatprep.subr.mxu0 0.0
          %2068 = vmatpush1.msra.mxu0 %v1713
          %2069 = vmatprep.subr.mxu0 0.0
          %2070 = vmatpush1.msra.mxu0 %v1712
          %2071 = vmatprep.subr.mxu0 0.0
          %2072 = vmatpush2.msra.mxu0 0.0
          %2073 = vmatprep.subr.mxu0 0.0
          %2074 = vmatpush2.msra.mxu0 0.0
          %2075 = vmatprep.subr.mxu0 0.0
          %2076 = vmatpush2.msra.mxu0 0.0
          %2077 = vmatprep.subr.mxu0 0.0
          %2078 = vmatpush2.msra.mxu0 0.0
          %2079 = vmatprep.subr.mxu0 0.0
          %2080 = vmatpush2.msra.mxu0 0.0
          %2081 = vmatprep.subr.mxu0 0.0
          %2082 = vmatpush2.msra.mxu0 0.0
          %2083 = vmatprep.subr.mxu0 0.0
          %2084 = vmatpush2.msra.mxu0 0.0
          %2085 = vmatprep.subr.mxu0 0.0
          %2086 = vmatpush2.msra.mxu0 0.0
          %2087 = vmatprep.subr.mxu0 0.0
          %2088 = vmatpush2.msra.mxu0 0.0
          %2089 = vmatprep.subr.mxu0 0.0
          %2090 = vmatpush2.msra.mxu0 0.0
          %2091 = vmatprep.subr.mxu0 0.0
          %2092 = vmatpush2.msra.mxu0 0.0
          %2093 = vmatprep.subr.mxu0 0.0
          %2094 = vmatpush2.msra.mxu0 0.0
          %2095 = vmatprep.subr.mxu0 0.0
          %2096 = vmatpush2.msra.mxu0 0.0
          %2097 = vmatprep.subr.mxu0 0.0
          %2098 = vmatpush2.msra.mxu0 0.0
          %2099 = vmatprep.subr.mxu0 0.0
          %2100 = vmatpush2.msra.mxu0 0.0
          %2101 = vmatprep.subr.mxu0 0.0
          %2102 = vmatpush2.msra.mxu0 0.0
          %2103 = vmatprep.mubr.f32.mxu0 0.0
          %2104 = vmatmul.mubr.f32.gmra.mxu0 %v2037
          %v2105 = vpop.f32.mrf.mxu0
          %v2106 = vadd.f32 0.0, %v2105
          %v2107 = vpop.f32.mrf.mxu0
          %2108 = vdwg.mxu0
          %2110 = vrot.lane.b32.xlu0 %v2106, 124
          %v2111 = vpop.permute.xlu0 %2110
          %v2113 = vadd.f32 %v2033, %v2111
          %s2114 = scalar_lea.vmem [#allocation9], 40
          %v2115 = vld [vmem:[%s2114] sm:$0xff]
          %v2117 = vsel %vm1723, %v2115, 0
          %2119 = vmatprep.subr.mxu0 0.0
          %2120 = vmatpush1.msra.mxu0 0.0
          %2121 = vmatprep.subr.mxu0 0.0
          %2122 = vmatpush1.msra.mxu0 0.0
          %2123 = vmatprep.subr.mxu0 0.0
          %2124 = vmatpush1.msra.mxu0 0.0
          %2125 = vmatprep.subr.mxu0 0.0
          %2126 = vmatpush1.msra.mxu0 0.0
          %2127 = vmatprep.subr.mxu0 0.0
          %2128 = vmatpush1.msra.mxu0 0.0
          %2129 = vmatprep.subr.mxu0 0.0
          %2130 = vmatpush1.msra.mxu0 0.0
          %2131 = vmatprep.subr.mxu0 0.0
          %2132 = vmatpush1.msra.mxu0 0.0
          %2133 = vmatprep.subr.mxu0 0.0
          %2134 = vmatpush1.msra.mxu0 0.0
          %2135 = vmatprep.subr.mxu0 0.0
          %2136 = vmatpush1.msra.mxu0 %v1719
          %2137 = vmatprep.subr.mxu0 0.0
          %2138 = vmatpush1.msra.mxu0 %v1718
          %2139 = vmatprep.subr.mxu0 0.0
          %2140 = vmatpush1.msra.mxu0 %v1717
          %2141 = vmatprep.subr.mxu0 0.0
          %2142 = vmatpush1.msra.mxu0 %v1716
          %2143 = vmatprep.subr.mxu0 0.0
          %2144 = vmatpush1.msra.mxu0 %v1715
          %2145 = vmatprep.subr.mxu0 0.0
          %2146 = vmatpush1.msra.mxu0 %v1714
          %2147 = vmatprep.subr.mxu0 0.0
          %2148 = vmatpush1.msra.mxu0 %v1713
          %2149 = vmatprep.subr.mxu0 0.0
          %2150 = vmatpush1.msra.mxu0 %v1712
          %2151 = vmatprep.subr.mxu0 0.0
          %2152 = vmatpush2.msra.mxu0 0.0
          %2153 = vmatprep.subr.mxu0 0.0
          %2154 = vmatpush2.msra.mxu0 0.0
          %2155 = vmatprep.subr.mxu0 0.0
          %2156 = vmatpush2.msra.mxu0 0.0
          %2157 = vmatprep.subr.mxu0 0.0
          %2158 = vmatpush2.msra.mxu0 0.0
          %2159 = vmatprep.subr.mxu0 0.0
          %2160 = vmatpush2.msra.mxu0 0.0
          %2161 = vmatprep.subr.mxu0 0.0
          %2162 = vmatpush2.msra.mxu0 0.0
          %2163 = vmatprep.subr.mxu0 0.0
          %2164 = vmatpush2.msra.mxu0 0.0
          %2165 = vmatprep.subr.mxu0 0.0
          %2166 = vmatpush2.msra.mxu0 0.0
          %2167 = vmatprep.subr.mxu0 0.0
          %2168 = vmatpush2.msra.mxu0 0.0
          %2169 = vmatprep.subr.mxu0 0.0
          %2170 = vmatpush2.msra.mxu0 0.0
          %2171 = vmatprep.subr.mxu0 0.0
          %2172 = vmatpush2.msra.mxu0 0.0
          %2173 = vmatprep.subr.mxu0 0.0
          %2174 = vmatpush2.msra.mxu0 0.0
          %2175 = vmatprep.subr.mxu0 0.0
          %2176 = vmatpush2.msra.mxu0 0.0
          %2177 = vmatprep.subr.mxu0 0.0
          %2178 = vmatpush2.msra.mxu0 0.0
          %2179 = vmatprep.subr.mxu0 0.0
          %2180 = vmatpush2.msra.mxu0 0.0
          %2181 = vmatprep.subr.mxu0 0.0
          %2182 = vmatpush2.msra.mxu0 0.0
          %2183 = vmatprep.mubr.f32.mxu0 0.0
          %2184 = vmatmul.mubr.f32.gmra.mxu0 %v2117
          %v2185 = vpop.f32.mrf.mxu0
          %v2186 = vadd.f32 0.0, %v2185
          %v2187 = vpop.f32.mrf.mxu0
          %2188 = vdwg.mxu0
          %2190 = vrot.lane.b32.xlu0 %v2186, 123
          %v2191 = vpop.permute.xlu0 %2190
          %v2193 = vadd.f32 %v2113, %v2191
          %s2194 = scalar_lea.vmem [#allocation9], 48
          %v2195 = vld [vmem:[%s2194] sm:$0xff]
          %v2197 = vsel %vm1723, %v2195, 0
          %2199 = vmatprep.subr.mxu0 0.0
          %2200 = vmatpush1.msra.mxu0 0.0
          %2201 = vmatprep.subr.mxu0 0.0
          %2202 = vmatpush1.msra.mxu0 0.0
          %2203 = vmatprep.subr.mxu0 0.0
          %2204 = vmatpush1.msra.mxu0 0.0
          %2205 = vmatprep.subr.mxu0 0.0
          %2206 = vmatpush1.msra.mxu0 0.0
          %2207 = vmatprep.subr.mxu0 0.0
          %2208 = vmatpush1.msra.mxu0 0.0
          %2209 = vmatprep.subr.mxu0 0.0
          %2210 = vmatpush1.msra.mxu0 0.0
          %2211 = vmatprep.subr.mxu0 0.0
          %2212 = vmatpush1.msra.mxu0 0.0
          %2213 = vmatprep.subr.mxu0 0.0
          %2214 = vmatpush1.msra.mxu0 0.0
          %2215 = vmatprep.subr.mxu0 0.0
          %2216 = vmatpush1.msra.mxu0 %v1719
          %2217 = vmatprep.subr.mxu0 0.0
          %2218 = vmatpush1.msra.mxu0 %v1718
          %2219 = vmatprep.subr.mxu0 0.0
          %2220 = vmatpush1.msra.mxu0 %v1717
          %2221 = vmatprep.subr.mxu0 0.0
          %2222 = vmatpush1.msra.mxu0 %v1716
          %2223 = vmatprep.subr.mxu0 0.0
          %2224 = vmatpush1.msra.mxu0 %v1715
          %2225 = vmatprep.subr.mxu0 0.0
          %2226 = vmatpush1.msra.mxu0 %v1714
          %2227 = vmatprep.subr.mxu0 0.0
          %2228 = vmatpush1.msra.mxu0 %v1713
          %2229 = vmatprep.subr.mxu0 0.0
          %2230 = vmatpush1.msra.mxu0 %v1712
          %2231 = vmatprep.subr.mxu0 0.0
          %2232 = vmatpush2.msra.mxu0 0.0
          %2233 = vmatprep.subr.mxu0 0.0
          %2234 = vmatpush2.msra.mxu0 0.0
          %2235 = vmatprep.subr.mxu0 0.0
          %2236 = vmatpush2.msra.mxu0 0.0
          %2237 = vmatprep.subr.mxu0 0.0
          %2238 = vmatpush2.msra.mxu0 0.0
          %2239 = vmatprep.subr.mxu0 0.0
          %2240 = vmatpush2.msra.mxu0 0.0
          %2241 = vmatprep.subr.mxu0 0.0
          %2242 = vmatpush2.msra.mxu0 0.0
          %2243 = vmatprep.subr.mxu0 0.0
          %2244 = vmatpush2.msra.mxu0 0.0
          %2245 = vmatprep.subr.mxu0 0.0
          %2246 = vmatpush2.msra.mxu0 0.0
          %2247 = vmatprep.subr.mxu0 0.0
          %2248 = vmatpush2.msra.mxu0 0.0
          %2249 = vmatprep.subr.mxu0 0.0
          %2250 = vmatpush2.msra.mxu0 0.0
          %2251 = vmatprep.subr.mxu0 0.0
          %2252 = vmatpush2.msra.mxu0 0.0
          %2253 = vmatprep.subr.mxu0 0.0
          %2254 = vmatpush2.msra.mxu0 0.0
          %2255 = vmatprep.subr.mxu0 0.0
          %2256 = vmatpush2.msra.mxu0 0.0
          %2257 = vmatprep.subr.mxu0 0.0
          %2258 = vmatpush2.msra.mxu0 0.0
          %2259 = vmatprep.subr.mxu0 0.0
          %2260 = vmatpush2.msra.mxu0 0.0
          %2261 = vmatprep.subr.mxu0 0.0
          %2262 = vmatpush2.msra.mxu0 0.0
          %2263 = vmatprep.mubr.f32.mxu0 0.0
          %2264 = vmatmul.mubr.f32.gmra.mxu0 %v2197
          %v2265 = vpop.f32.mrf.mxu0
          %v2266 = vadd.f32 0.0, %v2265
          %v2267 = vpop.f32.mrf.mxu0
          %2268 = vdwg.mxu0
          %2270 = vrot.lane.b32.xlu0 %v2266, 122
          %v2271 = vpop.permute.xlu0 %2270
          %v2273 = vadd.f32 %v2193, %v2271
          %s2274 = scalar_lea.vmem [#allocation9], 56
          %v2275 = vld [vmem:[%s2274] sm:$0xff]
          %v2277 = vsel %vm1723, %v2275, 0
          %2279 = vmatprep.subr.mxu0 0.0
          %2280 = vmatpush1.msra.mxu0 0.0
          %2281 = vmatprep.subr.mxu0 0.0
          %2282 = vmatpush1.msra.mxu0 0.0
          %2283 = vmatprep.subr.mxu0 0.0
          %2284 = vmatpush1.msra.mxu0 0.0
          %2285 = vmatprep.subr.mxu0 0.0
          %2286 = vmatpush1.msra.mxu0 0.0
          %2287 = vmatprep.subr.mxu0 0.0
          %2288 = vmatpush1.msra.mxu0 0.0
          %2289 = vmatprep.subr.mxu0 0.0
          %2290 = vmatpush1.msra.mxu0 0.0
          %2291 = vmatprep.subr.mxu0 0.0
          %2292 = vmatpush1.msra.mxu0 0.0
          %2293 = vmatprep.subr.mxu0 0.0
          %2294 = vmatpush1.msra.mxu0 0.0
          %2295 = vmatprep.subr.mxu0 0.0
          %2296 = vmatpush1.msra.mxu0 %v1719
          %2297 = vmatprep.subr.mxu0 0.0
          %2298 = vmatpush1.msra.mxu0 %v1718
          %2299 = vmatprep.subr.mxu0 0.0
          %2300 = vmatpush1.msra.mxu0 %v1717
          %2301 = vmatprep.subr.mxu0 0.0
          %2302 = vmatpush1.msra.mxu0 %v1716
          %2303 = vmatprep.subr.mxu0 0.0
          %2304 = vmatpush1.msra.mxu0 %v1715
          %2305 = vmatprep.subr.mxu0 0.0
          %2306 = vmatpush1.msra.mxu0 %v1714
          %2307 = vmatprep.subr.mxu0 0.0
          %2308 = vmatpush1.msra.mxu0 %v1713
          %2309 = vmatprep.subr.mxu0 0.0
          %2310 = vmatpush1.msra.mxu0 %v1712
          %2311 = vmatprep.subr.mxu0 0.0
          %2312 = vmatpush2.msra.mxu0 0.0
          %2313 = vmatprep.subr.mxu0 0.0
          %2314 = vmatpush2.msra.mxu0 0.0
          %2315 = vmatprep.subr.mxu0 0.0
          %2316 = vmatpush2.msra.mxu0 0.0
          %2317 = vmatprep.subr.mxu0 0.0
          %2318 = vmatpush2.msra.mxu0 0.0
          %2319 = vmatprep.subr.mxu0 0.0
          %2320 = vmatpush2.msra.mxu0 0.0
          %2321 = vmatprep.subr.mxu0 0.0
          %2322 = vmatpush2.msra.mxu0 0.0
          %2323 = vmatprep.subr.mxu0 0.0
          %2324 = vmatpush2.msra.mxu0 0.0
          %2325 = vmatprep.subr.mxu0 0.0
          %2326 = vmatpush2.msra.mxu0 0.0
          %2327 = vmatprep.subr.mxu0 0.0
          %2328 = vmatpush2.msra.mxu0 0.0
          %2329 = vmatprep.subr.mxu0 0.0
          %2330 = vmatpush2.msra.mxu0 0.0
          %2331 = vmatprep.subr.mxu0 0.0
          %2332 = vmatpush2.msra.mxu0 0.0
          %2333 = vmatprep.subr.mxu0 0.0
          %2334 = vmatpush2.msra.mxu0 0.0
          %2335 = vmatprep.subr.mxu0 0.0
          %2336 = vmatpush2.msra.mxu0 0.0
          %2337 = vmatprep.subr.mxu0 0.0
          %2338 = vmatpush2.msra.mxu0 0.0
          %2339 = vmatprep.subr.mxu0 0.0
          %2340 = vmatpush2.msra.mxu0 0.0
          %2341 = vmatprep.subr.mxu0 0.0
          %2342 = vmatpush2.msra.mxu0 0.0
          %2343 = vmatprep.mubr.f32.mxu0 0.0
          %2344 = vmatmul.mubr.f32.gmra.mxu0 %v2277
          %v2345 = vpop.f32.mrf.mxu0
          %v2346 = vadd.f32 0.0, %v2345
          %v2347 = vpop.f32.mrf.mxu0
          %2348 = vdwg.mxu0
          %2350 = vrot.lane.b32.xlu0 %v2346, 121
          %v2351 = vpop.permute.xlu0 %2350
          %v2353 = vadd.f32 %v2273, %v2351
          %v2354 = vmul.f32 %v2353, %v1696
          %v2355 = vadd.f32 %v2354, %v1703
          %s2356 = sadd.s32 %s1705, 5
          %s2357 = smul.u32 %s2356, 8
          %s2358 = scalar_lea.vmem [#allocation5], %s2357
          %2359 = vst [vmem:[%s2358] sm:$0xff] %v2355
        $region103: #{net_forward.1} parent=71 // loop_footer
          %s1709 = sadd.s32 1, %s1705
        $region104: #{net_forward.1} parent=71 // loop_footer_branch
          %1704 = sbr.rel target = $region100
        $region105: #{net_forward.1} parent=71 // loop_exit
          _
        %vm2360 = vcmp.ge.s32.totalorder %v1003, 0
        %vm2361 = vcmp.lt.s32.totalorder %v1003, 49
        %vm2362 = vmand %vm2360, %vm2361
        %v2363 = vsel %vm2362, 1, 0
        %v2364 = vcvt.s32.f32 %v2363
        %v2365 = vld [vmem:[%s8] sm:$0xff]
        %v2366 = vld [vmem:[%s8 + $0x8] sm:$0xff]
        %2368 = vset.pattern.permute.xlu0 0
        %2369 = vperm.xlu0 %2368, %v2365
        %v2370 = vpop.permute.xlu0 %2369
        %2373 = vset.pattern.permute.xlu0 0
        %2374 = vperm.xlu0 %2373, %v2366
        %v2375 = vpop.permute.xlu0 %2374
        %v2377 = vmul.f32 %v2370, %v2364
        %v2378 = vmul.f32 %v2375, %v2364
        loop: start=0, step=1, limit=18
        $region106: #{net_forward.1} parent=71 // loop_pre_header
          _
        $region107: #{net_forward.1} parent=71 // loop_header
          %s2380 = sphi 0, %s2384
          %p2381 = scmp.ge.s32.totalorder %s2380, 18
        $region108: #{net_forward.1} parent=71 // loop_header_branch
          %2383 = sbr.rel (%p2381) target = $region112
        $region109: #{net_forward.1} parent=71 // loop_body
          %s2385 = smul.u32 %s2380, 8
          %s2386 = scalar_lea.vmem [#allocation5], %s2385
          %v2387 = vld [vmem:[%s2386] sm:$0xff]
          %v2388 = vld [vmem:[%s2386 + $0x8] sm:$0xff]
          %v2389 = vld [vmem:[%s2386 + $0x10] sm:$0xff]
          %v2390 = vld [vmem:[%s2386 + $0x18] sm:$0xff]
          %v2391 = vld [vmem:[%s2386 + $0x20] sm:$0xff]
          %v2392 = vld [vmem:[%s2386 + $0x28] sm:$0xff]
          %v2393 = vld [vmem:[%s2386 + $0x30] sm:$0xff]
          %v2394 = vld [vmem:[%s2386 + $0x38] sm:$0xff]
          %v2395 = vld [vmem:[%s2386 + $0x40] sm:$0xff]
          %v2396 = vld [vmem:[%s2386 + $0x48] sm:$0xff]
          %v2397 = vld [vmem:[%s7] sm:$0xff]
          %v2398 = vld [vmem:[%s7 + $0x8] sm:$0xff]
          %s2399 = scalar_lea.vmem %s7, 16
          %v2400 = vld [vmem:[%s2399] sm:$0xff]
          %v2401 = vld [vmem:[%s2399 + $0x8] sm:$0xff]
          %vm2402 = vcmask 654336
          %v2404 = vsel %vm2402, %v2400, 0
          %v2407 = vsel %vm2402, %v2401, 0
          %2409 = vmatprep.subr.mxu0 0.0
          %2410 = vmatpush1.msra.mxu0 0.0
          %2411 = vmatprep.subr.mxu0 0.0
          %2412 = vmatpush1.msra.mxu0 0.0
          %2413 = vmatprep.subr.mxu0 0.0
          %2414 = vmatpush1.msra.mxu0 0.0
          %2415 = vmatprep.subr.mxu0 0.0
          %2416 = vmatpush1.msra.mxu0 0.0
          %2417 = vmatprep.subr.mxu0 0.0
          %2418 = vmatpush1.msra.mxu0 0.0
          %2419 = vmatprep.subr.mxu0 0.0
          %2420 = vmatpush1.msra.mxu0 0.0
          %2421 = vmatprep.subr.mxu0 0.0
          %2422 = vmatpush1.msra.mxu0 %v2396
          %2423 = vmatprep.subr.mxu0 0.0
          %2424 = vmatpush1.msra.mxu0 %v2395
          %2425 = vmatprep.subr.mxu0 0.0
          %2426 = vmatpush1.msra.mxu0 %v2394
          %2427 = vmatprep.subr.mxu0 0.0
          %2428 = vmatpush1.msra.mxu0 %v2393
          %2429 = vmatprep.subr.mxu0 0.0
          %2430 = vmatpush1.msra.mxu0 %v2392
          %2431 = vmatprep.subr.mxu0 0.0
          %2432 = vmatpush1.msra.mxu0 %v2391
          %2433 = vmatprep.subr.mxu0 0.0
          %2434 = vmatpush1.msra.mxu0 %v2390
          %2435 = vmatprep.subr.mxu0 0.0
          %2436 = vmatpush1.msra.mxu0 %v2389
          %2437 = vmatprep.subr.mxu0 0.0
          %2438 = vmatpush1.msra.mxu0 %v2388
          %2439 = vmatprep.subr.mxu0 0.0
          %2440 = vmatpush1.msra.mxu0 %v2387
          %2441 = vmatprep.subr.mxu0 0.0
          %2442 = vmatpush2.msra.mxu0 0.0
          %2443 = vmatprep.subr.mxu0 0.0
          %2444 = vmatpush2.msra.mxu0 0.0
          %2445 = vmatprep.subr.mxu0 0.0
          %2446 = vmatpush2.msra.mxu0 0.0
          %2447 = vmatprep.subr.mxu0 0.0
          %2448 = vmatpush2.msra.mxu0 0.0
          %2449 = vmatprep.subr.mxu0 0.0
          %2450 = vmatpush2.msra.mxu0 0.0
          %2451 = vmatprep.subr.mxu0 0.0
          %2452 = vmatpush2.msra.mxu0 0.0
          %2453 = vmatprep.subr.mxu0 0.0
          %2454 = vmatpush2.msra.mxu0 0.0
          %2455 = vmatprep.subr.mxu0 0.0
          %2456 = vmatpush2.msra.mxu0 0.0
          %2457 = vmatprep.subr.mxu0 0.0
          %2458 = vmatpush2.msra.mxu0 0.0
          %2459 = vmatprep.subr.mxu0 0.0
          %2460 = vmatpush2.msra.mxu0 0.0
          %2461 = vmatprep.subr.mxu0 0.0
          %2462 = vmatpush2.msra.mxu0 0.0
          %2463 = vmatprep.subr.mxu0 0.0
          %2464 = vmatpush2.msra.mxu0 0.0
          %2465 = vmatprep.subr.mxu0 0.0
          %2466 = vmatpush2.msra.mxu0 0.0
          %2467 = vmatprep.subr.mxu0 0.0
          %2468 = vmatpush2.msra.mxu0 0.0
          %2469 = vmatprep.subr.mxu0 0.0
          %2470 = vmatpush2.msra.mxu0 0.0
          %2471 = vmatprep.subr.mxu0 0.0
          %2472 = vmatpush2.msra.mxu0 0.0
          %2473 = vmatprep.mubr.f32.mxu0 0.0
          %2474 = vmatmul.mubr.f32.gmra.mxu0 %v2404
          %v2475 = vpop.f32.mrf.mxu0
          %v2476 = vadd.f32 0.0, %v2475
          %v2477 = vpop.f32.mrf.mxu0
          %2478 = vmatprep.mubr.f32.mxu0 0.0
          %2479 = vmatmul.mubr.f32.gmra.mxu0 %v2407
          %v2480 = vpop.f32.mrf.mxu0
          %v2481 = vadd.f32 0.0, %v2480
          %v2482 = vpop.f32.mrf.mxu0
          %2483 = vdwg.mxu0
          %2486 = vrot.lane.b32.xlu0 %v2476, 127
          %v2487 = vpop.permute.xlu0 %2486
          %2488 = vrot.lane.b32.xlu0 %v2481, 127
          %v2489 = vpop.permute.xlu0 %2488
          %v2493 = vsel %vm2402, %v2397, 0
          %v2496 = vsel %vm2402, %v2398, 0
          %2498 = vmatprep.subr.mxu0 0.0
          %2499 = vmatpush1.msra.mxu0 0.0
          %2500 = vmatprep.subr.mxu0 0.0
          %2501 = vmatpush1.msra.mxu0 0.0
          %2502 = vmatprep.subr.mxu0 0.0
          %2503 = vmatpush1.msra.mxu0 0.0
          %2504 = vmatprep.subr.mxu0 0.0
          %2505 = vmatpush1.msra.mxu0 0.0
          %2506 = vmatprep.subr.mxu0 0.0
          %2507 = vmatpush1.msra.mxu0 0.0
          %2508 = vmatprep.subr.mxu0 0.0
          %2509 = vmatpush1.msra.mxu0 0.0
          %2510 = vmatprep.subr.mxu0 0.0
          %2511 = vmatpush1.msra.mxu0 %v2396
          %2512 = vmatprep.subr.mxu0 0.0
          %2513 = vmatpush1.msra.mxu0 %v2395
          %2514 = vmatprep.subr.mxu0 0.0
          %2515 = vmatpush1.msra.mxu0 %v2394
          %2516 = vmatprep.subr.mxu0 0.0
          %2517 = vmatpush1.msra.mxu0 %v2393
          %2518 = vmatprep.subr.mxu0 0.0
          %2519 = vmatpush1.msra.mxu0 %v2392
          %2520 = vmatprep.subr.mxu0 0.0
          %2521 = vmatpush1.msra.mxu0 %v2391
          %2522 = vmatprep.subr.mxu0 0.0
          %2523 = vmatpush1.msra.mxu0 %v2390
          %2524 = vmatprep.subr.mxu0 0.0
          %2525 = vmatpush1.msra.mxu0 %v2389
          %2526 = vmatprep.subr.mxu0 0.0
          %2527 = vmatpush1.msra.mxu0 %v2388
          %2528 = vmatprep.subr.mxu0 0.0
          %2529 = vmatpush1.msra.mxu0 %v2387
          %2530 = vmatprep.subr.mxu0 0.0
          %2531 = vmatpush2.msra.mxu0 0.0
          %2532 = vmatprep.subr.mxu0 0.0
          %2533 = vmatpush2.msra.mxu0 0.0
          %2534 = vmatprep.subr.mxu0 0.0
          %2535 = vmatpush2.msra.mxu0 0.0
          %2536 = vmatprep.subr.mxu0 0.0
          %2537 = vmatpush2.msra.mxu0 0.0
          %2538 = vmatprep.subr.mxu0 0.0
          %2539 = vmatpush2.msra.mxu0 0.0
          %2540 = vmatprep.subr.mxu0 0.0
          %2541 = vmatpush2.msra.mxu0 0.0
          %2542 = vmatprep.subr.mxu0 0.0
          %2543 = vmatpush2.msra.mxu0 0.0
          %2544 = vmatprep.subr.mxu0 0.0
          %2545 = vmatpush2.msra.mxu0 0.0
          %2546 = vmatprep.subr.mxu0 0.0
          %2547 = vmatpush2.msra.mxu0 0.0
          %2548 = vmatprep.subr.mxu0 0.0
          %2549 = vmatpush2.msra.mxu0 0.0
          %2550 = vmatprep.subr.mxu0 0.0
          %2551 = vmatpush2.msra.mxu0 0.0
          %2552 = vmatprep.subr.mxu0 0.0
          %2553 = vmatpush2.msra.mxu0 0.0
          %2554 = vmatprep.subr.mxu0 0.0
          %2555 = vmatpush2.msra.mxu0 0.0
          %2556 = vmatprep.subr.mxu0 0.0
          %2557 = vmatpush2.msra.mxu0 0.0
          %2558 = vmatprep.subr.mxu0 0.0
          %2559 = vmatpush2.msra.mxu0 0.0
          %2560 = vmatprep.subr.mxu0 0.0
          %2561 = vmatpush2.msra.mxu0 0.0
          %2562 = vmatprep.mubr.f32.mxu0 0.0
          %2563 = vmatmul.mubr.f32.gmra.mxu0 %v2493
          %v2564 = vpop.f32.mrf.mxu0
          %v2565 = vadd.f32 %v2487, %v2564
          %v2566 = vpop.f32.mrf.mxu0
          %2567 = vmatprep.mubr.f32.mxu0 0.0
          %2568 = vmatmul.mubr.f32.gmra.mxu0 %v2496
          %v2569 = vpop.f32.mrf.mxu0
          %v2570 = vadd.f32 %v2489, %v2569
          %v2571 = vpop.f32.mrf.mxu0
          %2572 = vdwg.mxu0
          %s2573 = scalar_lea.vmem %s7, 32
          %v2574 = vld [vmem:[%s2573] sm:$0xff]
          %v2575 = vld [vmem:[%s2573 + $0x8] sm:$0xff]
          %v2577 = vsel %vm2402, %v2574, 0
          %v2580 = vsel %vm2402, %v2575, 0
          %2582 = vmatprep.subr.mxu0 0.0
          %2583 = vmatpush1.msra.mxu0 0.0
          %2584 = vmatprep.subr.mxu0 0.0
          %2585 = vmatpush1.msra.mxu0 0.0
          %2586 = vmatprep.subr.mxu0 0.0
          %2587 = vmatpush1.msra.mxu0 0.0
          %2588 = vmatprep.subr.mxu0 0.0
          %2589 = vmatpush1.msra.mxu0 0.0
          %2590 = vmatprep.subr.mxu0 0.0
          %2591 = vmatpush1.msra.mxu0 0.0
          %2592 = vmatprep.subr.mxu0 0.0
          %2593 = vmatpush1.msra.mxu0 0.0
          %2594 = vmatprep.subr.mxu0 0.0
          %2595 = vmatpush1.msra.mxu0 %v2396
          %2596 = vmatprep.subr.mxu0 0.0
          %2597 = vmatpush1.msra.mxu0 %v2395
          %2598 = vmatprep.subr.mxu0 0.0
          %2599 = vmatpush1.msra.mxu0 %v2394
          %2600 = vmatprep.subr.mxu0 0.0
          %2601 = vmatpush1.msra.mxu0 %v2393
          %2602 = vmatprep.subr.mxu0 0.0
          %2603 = vmatpush1.msra.mxu0 %v2392
          %2604 = vmatprep.subr.mxu0 0.0
          %2605 = vmatpush1.msra.mxu0 %v2391
          %2606 = vmatprep.subr.mxu0 0.0
          %2607 = vmatpush1.msra.mxu0 %v2390
          %2608 = vmatprep.subr.mxu0 0.0
          %2609 = vmatpush1.msra.mxu0 %v2389
          %2610 = vmatprep.subr.mxu0 0.0
          %2611 = vmatpush1.msra.mxu0 %v2388
          %2612 = vmatprep.subr.mxu0 0.0
          %2613 = vmatpush1.msra.mxu0 %v2387
          %2614 = vmatprep.subr.mxu0 0.0
          %2615 = vmatpush2.msra.mxu0 0.0
          %2616 = vmatprep.subr.mxu0 0.0
          %2617 = vmatpush2.msra.mxu0 0.0
          %2618 = vmatprep.subr.mxu0 0.0
          %2619 = vmatpush2.msra.mxu0 0.0
          %2620 = vmatprep.subr.mxu0 0.0
          %2621 = vmatpush2.msra.mxu0 0.0
          %2622 = vmatprep.subr.mxu0 0.0
          %2623 = vmatpush2.msra.mxu0 0.0
          %2624 = vmatprep.subr.mxu0 0.0
          %2625 = vmatpush2.msra.mxu0 0.0
          %2626 = vmatprep.subr.mxu0 0.0
          %2627 = vmatpush2.msra.mxu0 0.0
          %2628 = vmatprep.subr.mxu0 0.0
          %2629 = vmatpush2.msra.mxu0 0.0
          %2630 = vmatprep.subr.mxu0 0.0
          %2631 = vmatpush2.msra.mxu0 0.0
          %2632 = vmatprep.subr.mxu0 0.0
          %2633 = vmatpush2.msra.mxu0 0.0
          %2634 = vmatprep.subr.mxu0 0.0
          %2635 = vmatpush2.msra.mxu0 0.0
          %2636 = vmatprep.subr.mxu0 0.0
          %2637 = vmatpush2.msra.mxu0 0.0
          %2638 = vmatprep.subr.mxu0 0.0
          %2639 = vmatpush2.msra.mxu0 0.0
          %2640 = vmatprep.subr.mxu0 0.0
          %2641 = vmatpush2.msra.mxu0 0.0
          %2642 = vmatprep.subr.mxu0 0.0
          %2643 = vmatpush2.msra.mxu0 0.0
          %2644 = vmatprep.subr.mxu0 0.0
          %2645 = vmatpush2.msra.mxu0 0.0
          %2646 = vmatprep.mubr.f32.mxu0 0.0
          %2647 = vmatmul.mubr.f32.gmra.mxu0 %v2577
          %v2648 = vpop.f32.mrf.mxu0
          %v2649 = vadd.f32 0.0, %v2648
          %v2650 = vpop.f32.mrf.mxu0
          %2651 = vmatprep.mubr.f32.mxu0 0.0
          %2652 = vmatmul.mubr.f32.gmra.mxu0 %v2580
          %v2653 = vpop.f32.mrf.mxu0
          %v2654 = vadd.f32 0.0, %v2653
          %v2655 = vpop.f32.mrf.mxu0
          %2656 = vdwg.mxu0
          %2659 = vrot.lane.b32.xlu0 %v2649, 126
          %v2660 = vpop.permute.xlu0 %2659
          %2661 = vrot.lane.b32.xlu0 %v2654, 126
          %v2662 = vpop.permute.xlu0 %2661
          %v2665 = vadd.f32 %v2565, %v2660
          %v2666 = vadd.f32 %v2570, %v2662
          %s2667 = scalar_lea.vmem %s7, 48
          %v2668 = vld [vmem:[%s2667] sm:$0xff]
          %v2669 = vld [vmem:[%s2667 + $0x8] sm:$0xff]
          %v2671 = vsel %vm2402, %v2668, 0
          %v2674 = vsel %vm2402, %v2669, 0
          %2676 = vmatprep.subr.mxu0 0.0
          %2677 = vmatpush1.msra.mxu0 0.0
          %2678 = vmatprep.subr.mxu0 0.0
          %2679 = vmatpush1.msra.mxu0 0.0
          %2680 = vmatprep.subr.mxu0 0.0
          %2681 = vmatpush1.msra.mxu0 0.0
          %2682 = vmatprep.subr.mxu0 0.0
          %2683 = vmatpush1.msra.mxu0 0.0
          %2684 = vmatprep.subr.mxu0 0.0
          %2685 = vmatpush1.msra.mxu0 0.0
          %2686 = vmatprep.subr.mxu0 0.0
          %2687 = vmatpush1.msra.mxu0 0.0
          %2688 = vmatprep.subr.mxu0 0.0
          %2689 = vmatpush1.msra.mxu0 %v2396
          %2690 = vmatprep.subr.mxu0 0.0
          %2691 = vmatpush1.msra.mxu0 %v2395
          %2692 = vmatprep.subr.mxu0 0.0
          %2693 = vmatpush1.msra.mxu0 %v2394
          %2694 = vmatprep.subr.mxu0 0.0
          %2695 = vmatpush1.msra.mxu0 %v2393
          %2696 = vmatprep.subr.mxu0 0.0
          %2697 = vmatpush1.msra.mxu0 %v2392
          %2698 = vmatprep.subr.mxu0 0.0
          %2699 = vmatpush1.msra.mxu0 %v2391
          %2700 = vmatprep.subr.mxu0 0.0
          %2701 = vmatpush1.msra.mxu0 %v2390
          %2702 = vmatprep.subr.mxu0 0.0
          %2703 = vmatpush1.msra.mxu0 %v2389
          %2704 = vmatprep.subr.mxu0 0.0
          %2705 = vmatpush1.msra.mxu0 %v2388
          %2706 = vmatprep.subr.mxu0 0.0
          %2707 = vmatpush1.msra.mxu0 %v2387
          %2708 = vmatprep.subr.mxu0 0.0
          %2709 = vmatpush2.msra.mxu0 0.0
          %2710 = vmatprep.subr.mxu0 0.0
          %2711 = vmatpush2.msra.mxu0 0.0
          %2712 = vmatprep.subr.mxu0 0.0
          %2713 = vmatpush2.msra.mxu0 0.0
          %2714 = vmatprep.subr.mxu0 0.0
          %2715 = vmatpush2.msra.mxu0 0.0
          %2716 = vmatprep.subr.mxu0 0.0
          %2717 = vmatpush2.msra.mxu0 0.0
          %2718 = vmatprep.subr.mxu0 0.0
          %2719 = vmatpush2.msra.mxu0 0.0
          %2720 = vmatprep.subr.mxu0 0.0
          %2721 = vmatpush2.msra.mxu0 0.0
          %2722 = vmatprep.subr.mxu0 0.0
          %2723 = vmatpush2.msra.mxu0 0.0
          %2724 = vmatprep.subr.mxu0 0.0
          %2725 = vmatpush2.msra.mxu0 0.0
          %2726 = vmatprep.subr.mxu0 0.0
          %2727 = vmatpush2.msra.mxu0 0.0
          %2728 = vmatprep.subr.mxu0 0.0
          %2729 = vmatpush2.msra.mxu0 0.0
          %2730 = vmatprep.subr.mxu0 0.0
          %2731 = vmatpush2.msra.mxu0 0.0
          %2732 = vmatprep.subr.mxu0 0.0
          %2733 = vmatpush2.msra.mxu0 0.0
          %2734 = vmatprep.subr.mxu0 0.0
          %2735 = vmatpush2.msra.mxu0 0.0
          %2736 = vmatprep.subr.mxu0 0.0
          %2737 = vmatpush2.msra.mxu0 0.0
          %2738 = vmatprep.subr.mxu0 0.0
          %2739 = vmatpush2.msra.mxu0 0.0
          %2740 = vmatprep.mubr.f32.mxu0 0.0
          %2741 = vmatmul.mubr.f32.gmra.mxu0 %v2671
          %v2742 = vpop.f32.mrf.mxu0
          %v2743 = vadd.f32 0.0, %v2742
          %v2744 = vpop.f32.mrf.mxu0
          %2745 = vmatprep.mubr.f32.mxu0 0.0
          %2746 = vmatmul.mubr.f32.gmra.mxu0 %v2674
          %v2747 = vpop.f32.mrf.mxu0
          %v2748 = vadd.f32 0.0, %v2747
          %v2749 = vpop.f32.mrf.mxu0
          %2750 = vdwg.mxu0
          %2753 = vrot.lane.b32.xlu0 %v2743, 125
          %v2754 = vpop.permute.xlu0 %2753
          %2755 = vrot.lane.b32.xlu0 %v2748, 125
          %v2756 = vpop.permute.xlu0 %2755
          %v2759 = vadd.f32 %v2665, %v2754
          %v2760 = vadd.f32 %v2666, %v2756
          %s2761 = scalar_lea.vmem %s7, 64
          %v2762 = vld [vmem:[%s2761] sm:$0xff]
          %v2763 = vld [vmem:[%s2761 + $0x8] sm:$0xff]
          %v2765 = vsel %vm2402, %v2762, 0
          %v2768 = vsel %vm2402, %v2763, 0
          %2770 = vmatprep.subr.mxu0 0.0
          %2771 = vmatpush1.msra.mxu0 0.0
          %2772 = vmatprep.subr.mxu0 0.0
          %2773 = vmatpush1.msra.mxu0 0.0
          %2774 = vmatprep.subr.mxu0 0.0
          %2775 = vmatpush1.msra.mxu0 0.0
          %2776 = vmatprep.subr.mxu0 0.0
          %2777 = vmatpush1.msra.mxu0 0.0
          %2778 = vmatprep.subr.mxu0 0.0
          %2779 = vmatpush1.msra.mxu0 0.0
          %2780 = vmatprep.subr.mxu0 0.0
          %2781 = vmatpush1.msra.mxu0 0.0
          %2782 = vmatprep.subr.mxu0 0.0
          %2783 = vmatpush1.msra.mxu0 %v2396
          %2784 = vmatprep.subr.mxu0 0.0
          %2785 = vmatpush1.msra.mxu0 %v2395
          %2786 = vmatprep.subr.mxu0 0.0
          %2787 = vmatpush1.msra.mxu0 %v2394
          %2788 = vmatprep.subr.mxu0 0.0
          %2789 = vmatpush1.msra.mxu0 %v2393
          %2790 = vmatprep.subr.mxu0 0.0
          %2791 = vmatpush1.msra.mxu0 %v2392
          %2792 = vmatprep.subr.mxu0 0.0
          %2793 = vmatpush1.msra.mxu0 %v2391
          %2794 = vmatprep.subr.mxu0 0.0
          %2795 = vmatpush1.msra.mxu0 %v2390
          %2796 = vmatprep.subr.mxu0 0.0
          %2797 = vmatpush1.msra.mxu0 %v2389
          %2798 = vmatprep.subr.mxu0 0.0
          %2799 = vmatpush1.msra.mxu0 %v2388
          %2800 = vmatprep.subr.mxu0 0.0
          %2801 = vmatpush1.msra.mxu0 %v2387
          %2802 = vmatprep.subr.mxu0 0.0
          %2803 = vmatpush2.msra.mxu0 0.0
          %2804 = vmatprep.subr.mxu0 0.0
          %2805 = vmatpush2.msra.mxu0 0.0
          %2806 = vmatprep.subr.mxu0 0.0
          %2807 = vmatpush2.msra.mxu0 0.0
          %2808 = vmatprep.subr.mxu0 0.0
          %2809 = vmatpush2.msra.mxu0 0.0
          %2810 = vmatprep.subr.mxu0 0.0
          %2811 = vmatpush2.msra.mxu0 0.0
          %2812 = vmatprep.subr.mxu0 0.0
          %2813 = vmatpush2.msra.mxu0 0.0
          %2814 = vmatprep.subr.mxu0 0.0
          %2815 = vmatpush2.msra.mxu0 0.0
          %2816 = vmatprep.subr.mxu0 0.0
          %2817 = vmatpush2.msra.mxu0 0.0
          %2818 = vmatprep.subr.mxu0 0.0
          %2819 = vmatpush2.msra.mxu0 0.0
          %2820 = vmatprep.subr.mxu0 0.0
          %2821 = vmatpush2.msra.mxu0 0.0
          %2822 = vmatprep.subr.mxu0 0.0
          %2823 = vmatpush2.msra.mxu0 0.0
          %2824 = vmatprep.subr.mxu0 0.0
          %2825 = vmatpush2.msra.mxu0 0.0
          %2826 = vmatprep.subr.mxu0 0.0
          %2827 = vmatpush2.msra.mxu0 0.0
          %2828 = vmatprep.subr.mxu0 0.0
          %2829 = vmatpush2.msra.mxu0 0.0
          %2830 = vmatprep.subr.mxu0 0.0
          %2831 = vmatpush2.msra.mxu0 0.0
          %2832 = vmatprep.subr.mxu0 0.0
          %2833 = vmatpush2.msra.mxu0 0.0
          %2834 = vmatprep.mubr.f32.mxu0 0.0
          %2835 = vmatmul.mubr.f32.gmra.mxu0 %v2765
          %v2836 = vpop.f32.mrf.mxu0
          %v2837 = vadd.f32 0.0, %v2836
          %v2838 = vpop.f32.mrf.mxu0
          %2839 = vmatprep.mubr.f32.mxu0 0.0
          %2840 = vmatmul.mubr.f32.gmra.mxu0 %v2768
          %v2841 = vpop.f32.mrf.mxu0
          %v2842 = vadd.f32 0.0, %v2841
          %v2843 = vpop.f32.mrf.mxu0
          %2844 = vdwg.mxu0
          %2847 = vrot.lane.b32.xlu0 %v2837, 124
          %v2848 = vpop.permute.xlu0 %2847
          %2849 = vrot.lane.b32.xlu0 %v2842, 124
          %v2850 = vpop.permute.xlu0 %2849
          %v2853 = vadd.f32 %v2759, %v2848
          %v2854 = vadd.f32 %v2760, %v2850
          %s2855 = scalar_lea.vmem %s7, 80
          %v2856 = vld [vmem:[%s2855] sm:$0xff]
          %v2857 = vld [vmem:[%s2855 + $0x8] sm:$0xff]
          %v2859 = vsel %vm2402, %v2856, 0
          %v2862 = vsel %vm2402, %v2857, 0
          %2864 = vmatprep.subr.mxu0 0.0
          %2865 = vmatpush1.msra.mxu0 0.0
          %2866 = vmatprep.subr.mxu0 0.0
          %2867 = vmatpush1.msra.mxu0 0.0
          %2868 = vmatprep.subr.mxu0 0.0
          %2869 = vmatpush1.msra.mxu0 0.0
          %2870 = vmatprep.subr.mxu0 0.0
          %2871 = vmatpush1.msra.mxu0 0.0
          %2872 = vmatprep.subr.mxu0 0.0
          %2873 = vmatpush1.msra.mxu0 0.0
          %2874 = vmatprep.subr.mxu0 0.0
          %2875 = vmatpush1.msra.mxu0 0.0
          %2876 = vmatprep.subr.mxu0 0.0
          %2877 = vmatpush1.msra.mxu0 %v2396
          %2878 = vmatprep.subr.mxu0 0.0
          %2879 = vmatpush1.msra.mxu0 %v2395
          %2880 = vmatprep.subr.mxu0 0.0
          %2881 = vmatpush1.msra.mxu0 %v2394
          %2882 = vmatprep.subr.mxu0 0.0
          %2883 = vmatpush1.msra.mxu0 %v2393
          %2884 = vmatprep.subr.mxu0 0.0
          %2885 = vmatpush1.msra.mxu0 %v2392
          %2886 = vmatprep.subr.mxu0 0.0
          %2887 = vmatpush1.msra.mxu0 %v2391
          %2888 = vmatprep.subr.mxu0 0.0
          %2889 = vmatpush1.msra.mxu0 %v2390
          %2890 = vmatprep.subr.mxu0 0.0
          %2891 = vmatpush1.msra.mxu0 %v2389
          %2892 = vmatprep.subr.mxu0 0.0
          %2893 = vmatpush1.msra.mxu0 %v2388
          %2894 = vmatprep.subr.mxu0 0.0
          %2895 = vmatpush1.msra.mxu0 %v2387
          %2896 = vmatprep.subr.mxu0 0.0
          %2897 = vmatpush2.msra.mxu0 0.0
          %2898 = vmatprep.subr.mxu0 0.0
          %2899 = vmatpush2.msra.mxu0 0.0
          %2900 = vmatprep.subr.mxu0 0.0
          %2901 = vmatpush2.msra.mxu0 0.0
          %2902 = vmatprep.subr.mxu0 0.0
          %2903 = vmatpush2.msra.mxu0 0.0
          %2904 = vmatprep.subr.mxu0 0.0
          %2905 = vmatpush2.msra.mxu0 0.0
          %2906 = vmatprep.subr.mxu0 0.0
          %2907 = vmatpush2.msra.mxu0 0.0
          %2908 = vmatprep.subr.mxu0 0.0
          %2909 = vmatpush2.msra.mxu0 0.0
          %2910 = vmatprep.subr.mxu0 0.0
          %2911 = vmatpush2.msra.mxu0 0.0
          %2912 = vmatprep.subr.mxu0 0.0
          %2913 = vmatpush2.msra.mxu0 0.0
          %2914 = vmatprep.subr.mxu0 0.0
          %2915 = vmatpush2.msra.mxu0 0.0
          %2916 = vmatprep.subr.mxu0 0.0
          %2917 = vmatpush2.msra.mxu0 0.0
          %2918 = vmatprep.subr.mxu0 0.0
          %2919 = vmatpush2.msra.mxu0 0.0
          %2920 = vmatprep.subr.mxu0 0.0
          %2921 = vmatpush2.msra.mxu0 0.0
          %2922 = vmatprep.subr.mxu0 0.0
          %2923 = vmatpush2.msra.mxu0 0.0
          %2924 = vmatprep.subr.mxu0 0.0
          %2925 = vmatpush2.msra.mxu0 0.0
          %2926 = vmatprep.subr.mxu0 0.0
          %2927 = vmatpush2.msra.mxu0 0.0
          %2928 = vmatprep.mubr.f32.mxu0 0.0
          %2929 = vmatmul.mubr.f32.gmra.mxu0 %v2859
          %v2930 = vpop.f32.mrf.mxu0
          %v2931 = vadd.f32 0.0, %v2930
          %v2932 = vpop.f32.mrf.mxu0
          %2933 = vmatprep.mubr.f32.mxu0 0.0
          %2934 = vmatmul.mubr.f32.gmra.mxu0 %v2862
          %v2935 = vpop.f32.mrf.mxu0
          %v2936 = vadd.f32 0.0, %v2935
          %v2937 = vpop.f32.mrf.mxu0
          %2938 = vdwg.mxu0
          %2941 = vrot.lane.b32.xlu0 %v2931, 123
          %v2942 = vpop.permute.xlu0 %2941
          %2943 = vrot.lane.b32.xlu0 %v2936, 123
          %v2944 = vpop.permute.xlu0 %2943
          %v2947 = vadd.f32 %v2853, %v2942
          %v2948 = vadd.f32 %v2854, %v2944
          %s2949 = scalar_lea.vmem %s7, 96
          %v2950 = vld [vmem:[%s2949] sm:$0xff]
          %v2951 = vld [vmem:[%s2949 + $0x8] sm:$0xff]
          %v2953 = vsel %vm2402, %v2950, 0
          %v2956 = vsel %vm2402, %v2951, 0
          %2958 = vmatprep.subr.mxu0 0.0
          %2959 = vmatpush1.msra.mxu0 0.0
          %2960 = vmatprep.subr.mxu0 0.0
          %2961 = vmatpush1.msra.mxu0 0.0
          %2962 = vmatprep.subr.mxu0 0.0
          %2963 = vmatpush1.msra.mxu0 0.0
          %2964 = vmatprep.subr.mxu0 0.0
          %2965 = vmatpush1.msra.mxu0 0.0
          %2966 = vmatprep.subr.mxu0 0.0
          %2967 = vmatpush1.msra.mxu0 0.0
          %2968 = vmatprep.subr.mxu0 0.0
          %2969 = vmatpush1.msra.mxu0 0.0
          %2970 = vmatprep.subr.mxu0 0.0
          %2971 = vmatpush1.msra.mxu0 %v2396
          %2972 = vmatprep.subr.mxu0 0.0
          %2973 = vmatpush1.msra.mxu0 %v2395
          %2974 = vmatprep.subr.mxu0 0.0
          %2975 = vmatpush1.msra.mxu0 %v2394
          %2976 = vmatprep.subr.mxu0 0.0
          %2977 = vmatpush1.msra.mxu0 %v2393
          %2978 = vmatprep.subr.mxu0 0.0
          %2979 = vmatpush1.msra.mxu0 %v2392
          %2980 = vmatprep.subr.mxu0 0.0
          %2981 = vmatpush1.msra.mxu0 %v2391
          %2982 = vmatprep.subr.mxu0 0.0
          %2983 = vmatpush1.msra.mxu0 %v2390
          %2984 = vmatprep.subr.mxu0 0.0
          %2985 = vmatpush1.msra.mxu0 %v2389
          %2986 = vmatprep.subr.mxu0 0.0
          %2987 = vmatpush1.msra.mxu0 %v2388
          %2988 = vmatprep.subr.mxu0 0.0
          %2989 = vmatpush1.msra.mxu0 %v2387
          %2990 = vmatprep.subr.mxu0 0.0
          %2991 = vmatpush2.msra.mxu0 0.0
          %2992 = vmatprep.subr.mxu0 0.0
          %2993 = vmatpush2.msra.mxu0 0.0
          %2994 = vmatprep.subr.mxu0 0.0
          %2995 = vmatpush2.msra.mxu0 0.0
          %2996 = vmatprep.subr.mxu0 0.0
          %2997 = vmatpush2.msra.mxu0 0.0
          %2998 = vmatprep.subr.mxu0 0.0
          %2999 = vmatpush2.msra.mxu0 0.0
          %3000 = vmatprep.subr.mxu0 0.0
          %3001 = vmatpush2.msra.mxu0 0.0
          %3002 = vmatprep.subr.mxu0 0.0
          %3003 = vmatpush2.msra.mxu0 0.0
          %3004 = vmatprep.subr.mxu0 0.0
          %3005 = vmatpush2.msra.mxu0 0.0
          %3006 = vmatprep.subr.mxu0 0.0
          %3007 = vmatpush2.msra.mxu0 0.0
          %3008 = vmatprep.subr.mxu0 0.0
          %3009 = vmatpush2.msra.mxu0 0.0
          %3010 = vmatprep.subr.mxu0 0.0
          %3011 = vmatpush2.msra.mxu0 0.0
          %3012 = vmatprep.subr.mxu0 0.0
          %3013 = vmatpush2.msra.mxu0 0.0
          %3014 = vmatprep.subr.mxu0 0.0
          %3015 = vmatpush2.msra.mxu0 0.0
          %3016 = vmatprep.subr.mxu0 0.0
          %3017 = vmatpush2.msra.mxu0 0.0
          %3018 = vmatprep.subr.mxu0 0.0
          %3019 = vmatpush2.msra.mxu0 0.0
          %3020 = vmatprep.subr.mxu0 0.0
          %3021 = vmatpush2.msra.mxu0 0.0
          %3022 = vmatprep.mubr.f32.mxu0 0.0
          %3023 = vmatmul.mubr.f32.gmra.mxu0 %v2953
          %v3024 = vpop.f32.mrf.mxu0
          %v3025 = vadd.f32 0.0, %v3024
          %v3026 = vpop.f32.mrf.mxu0
          %3027 = vmatprep.mubr.f32.mxu0 0.0
          %3028 = vmatmul.mubr.f32.gmra.mxu0 %v2956
          %v3029 = vpop.f32.mrf.mxu0
          %v3030 = vadd.f32 0.0, %v3029
          %v3031 = vpop.f32.mrf.mxu0
          %3032 = vdwg.mxu0
          %3035 = vrot.lane.b32.xlu0 %v3025, 122
          %v3036 = vpop.permute.xlu0 %3035
          %3037 = vrot.lane.b32.xlu0 %v3030, 122
          %v3038 = vpop.permute.xlu0 %3037
          %v3041 = vadd.f32 %v2947, %v3036
          %v3042 = vadd.f32 %v2948, %v3038
          %s3043 = scalar_lea.vmem %s7, 112
          %v3044 = vld [vmem:[%s3043] sm:$0xff]
          %v3045 = vld [vmem:[%s3043 + $0x8] sm:$0xff]
          %v3047 = vsel %vm2402, %v3044, 0
          %v3050 = vsel %vm2402, %v3045, 0
          %3052 = vmatprep.subr.mxu0 0.0
          %3053 = vmatpush1.msra.mxu0 0.0
          %3054 = vmatprep.subr.mxu0 0.0
          %3055 = vmatpush1.msra.mxu0 0.0
          %3056 = vmatprep.subr.mxu0 0.0
          %3057 = vmatpush1.msra.mxu0 0.0
          %3058 = vmatprep.subr.mxu0 0.0
          %3059 = vmatpush1.msra.mxu0 0.0
          %3060 = vmatprep.subr.mxu0 0.0
          %3061 = vmatpush1.msra.mxu0 0.0
          %3062 = vmatprep.subr.mxu0 0.0
          %3063 = vmatpush1.msra.mxu0 0.0
          %3064 = vmatprep.subr.mxu0 0.0
          %3065 = vmatpush1.msra.mxu0 %v2396
          %3066 = vmatprep.subr.mxu0 0.0
          %3067 = vmatpush1.msra.mxu0 %v2395
          %3068 = vmatprep.subr.mxu0 0.0
          %3069 = vmatpush1.msra.mxu0 %v2394
          %3070 = vmatprep.subr.mxu0 0.0
          %3071 = vmatpush1.msra.mxu0 %v2393
          %3072 = vmatprep.subr.mxu0 0.0
          %3073 = vmatpush1.msra.mxu0 %v2392
          %3074 = vmatprep.subr.mxu0 0.0
          %3075 = vmatpush1.msra.mxu0 %v2391
          %3076 = vmatprep.subr.mxu0 0.0
          %3077 = vmatpush1.msra.mxu0 %v2390
          %3078 = vmatprep.subr.mxu0 0.0
          %3079 = vmatpush1.msra.mxu0 %v2389
          %3080 = vmatprep.subr.mxu0 0.0
          %3081 = vmatpush1.msra.mxu0 %v2388
          %3082 = vmatprep.subr.mxu0 0.0
          %3083 = vmatpush1.msra.mxu0 %v2387
          %3084 = vmatprep.subr.mxu0 0.0
          %3085 = vmatpush2.msra.mxu0 0.0
          %3086 = vmatprep.subr.mxu0 0.0
          %3087 = vmatpush2.msra.mxu0 0.0
          %3088 = vmatprep.subr.mxu0 0.0
          %3089 = vmatpush2.msra.mxu0 0.0
          %3090 = vmatprep.subr.mxu0 0.0
          %3091 = vmatpush2.msra.mxu0 0.0
          %3092 = vmatprep.subr.mxu0 0.0
          %3093 = vmatpush2.msra.mxu0 0.0
          %3094 = vmatprep.subr.mxu0 0.0
          %3095 = vmatpush2.msra.mxu0 0.0
          %3096 = vmatprep.subr.mxu0 0.0
          %3097 = vmatpush2.msra.mxu0 0.0
          %3098 = vmatprep.subr.mxu0 0.0
          %3099 = vmatpush2.msra.mxu0 0.0
          %3100 = vmatprep.subr.mxu0 0.0
          %3101 = vmatpush2.msra.mxu0 0.0
          %3102 = vmatprep.subr.mxu0 0.0
          %3103 = vmatpush2.msra.mxu0 0.0
          %3104 = vmatprep.subr.mxu0 0.0
          %3105 = vmatpush2.msra.mxu0 0.0
          %3106 = vmatprep.subr.mxu0 0.0
          %3107 = vmatpush2.msra.mxu0 0.0
          %3108 = vmatprep.subr.mxu0 0.0
          %3109 = vmatpush2.msra.mxu0 0.0
          %3110 = vmatprep.subr.mxu0 0.0
          %3111 = vmatpush2.msra.mxu0 0.0
          %3112 = vmatprep.subr.mxu0 0.0
          %3113 = vmatpush2.msra.mxu0 0.0
          %3114 = vmatprep.subr.mxu0 0.0
          %3115 = vmatpush2.msra.mxu0 0.0
          %3116 = vmatprep.mubr.f32.mxu0 0.0
          %3117 = vmatmul.mubr.f32.gmra.mxu0 %v3047
          %v3118 = vpop.f32.mrf.mxu0
          %v3119 = vadd.f32 0.0, %v3118
          %v3120 = vpop.f32.mrf.mxu0
          %3121 = vmatprep.mubr.f32.mxu0 0.0
          %3122 = vmatmul.mubr.f32.gmra.mxu0 %v3050
          %v3123 = vpop.f32.mrf.mxu0
          %v3124 = vadd.f32 0.0, %v3123
          %v3125 = vpop.f32.mrf.mxu0
          %3126 = vdwg.mxu0
          %3129 = vrot.lane.b32.xlu0 %v3119, 121
          %v3130 = vpop.permute.xlu0 %3129
          %3131 = vrot.lane.b32.xlu0 %v3124, 121
          %v3132 = vpop.permute.xlu0 %3131
          %v3135 = vadd.f32 %v3041, %v3130
          %v3136 = vadd.f32 %v3042, %v3132
          %s3137 = scalar_lea.vmem %s7, 128
          %v3138 = vld [vmem:[%s3137] sm:$0xff]
          %v3139 = vld [vmem:[%s3137 + $0x8] sm:$0xff]
          %v3141 = vsel %vm2402, %v3138, 0
          %v3144 = vsel %vm2402, %v3139, 0
          %3146 = vmatprep.subr.mxu0 0.0
          %3147 = vmatpush1.msra.mxu0 0.0
          %3148 = vmatprep.subr.mxu0 0.0
          %3149 = vmatpush1.msra.mxu0 0.0
          %3150 = vmatprep.subr.mxu0 0.0
          %3151 = vmatpush1.msra.mxu0 0.0
          %3152 = vmatprep.subr.mxu0 0.0
          %3153 = vmatpush1.msra.mxu0 0.0
          %3154 = vmatprep.subr.mxu0 0.0
          %3155 = vmatpush1.msra.mxu0 0.0
          %3156 = vmatprep.subr.mxu0 0.0
          %3157 = vmatpush1.msra.mxu0 0.0
          %3158 = vmatprep.subr.mxu0 0.0
          %3159 = vmatpush1.msra.mxu0 %v2396
          %3160 = vmatprep.subr.mxu0 0.0
          %3161 = vmatpush1.msra.mxu0 %v2395
          %3162 = vmatprep.subr.mxu0 0.0
          %3163 = vmatpush1.msra.mxu0 %v2394
          %3164 = vmatprep.subr.mxu0 0.0
          %3165 = vmatpush1.msra.mxu0 %v2393
          %3166 = vmatprep.subr.mxu0 0.0
          %3167 = vmatpush1.msra.mxu0 %v2392
          %3168 = vmatprep.subr.mxu0 0.0
          %3169 = vmatpush1.msra.mxu0 %v2391
          %3170 = vmatprep.subr.mxu0 0.0
          %3171 = vmatpush1.msra.mxu0 %v2390
          %3172 = vmatprep.subr.mxu0 0.0
          %3173 = vmatpush1.msra.mxu0 %v2389
          %3174 = vmatprep.subr.mxu0 0.0
          %3175 = vmatpush1.msra.mxu0 %v2388
          %3176 = vmatprep.subr.mxu0 0.0
          %3177 = vmatpush1.msra.mxu0 %v2387
          %3178 = vmatprep.subr.mxu0 0.0
          %3179 = vmatpush2.msra.mxu0 0.0
          %3180 = vmatprep.subr.mxu0 0.0
          %3181 = vmatpush2.msra.mxu0 0.0
          %3182 = vmatprep.subr.mxu0 0.0
          %3183 = vmatpush2.msra.mxu0 0.0
          %3184 = vmatprep.subr.mxu0 0.0
          %3185 = vmatpush2.msra.mxu0 0.0
          %3186 = vmatprep.subr.mxu0 0.0
          %3187 = vmatpush2.msra.mxu0 0.0
          %3188 = vmatprep.subr.mxu0 0.0
          %3189 = vmatpush2.msra.mxu0 0.0
          %3190 = vmatprep.subr.mxu0 0.0
          %3191 = vmatpush2.msra.mxu0 0.0
          %3192 = vmatprep.subr.mxu0 0.0
          %3193 = vmatpush2.msra.mxu0 0.0
          %3194 = vmatprep.subr.mxu0 0.0
          %3195 = vmatpush2.msra.mxu0 0.0
          %3196 = vmatprep.subr.mxu0 0.0
          %3197 = vmatpush2.msra.mxu0 0.0
          %3198 = vmatprep.subr.mxu0 0.0
          %3199 = vmatpush2.msra.mxu0 0.0
          %3200 = vmatprep.subr.mxu0 0.0
          %3201 = vmatpush2.msra.mxu0 0.0
          %3202 = vmatprep.subr.mxu0 0.0
          %3203 = vmatpush2.msra.mxu0 0.0
          %3204 = vmatprep.subr.mxu0 0.0
          %3205 = vmatpush2.msra.mxu0 0.0
          %3206 = vmatprep.subr.mxu0 0.0
          %3207 = vmatpush2.msra.mxu0 0.0
          %3208 = vmatprep.subr.mxu0 0.0
          %3209 = vmatpush2.msra.mxu0 0.0
          %3210 = vmatprep.mubr.f32.mxu0 0.0
          %3211 = vmatmul.mubr.f32.gmra.mxu0 %v3141
          %v3212 = vpop.f32.mrf.mxu0
          %v3213 = vadd.f32 0.0, %v3212
          %v3214 = vpop.f32.mrf.mxu0
          %3215 = vmatprep.mubr.f32.mxu0 0.0
          %3216 = vmatmul.mubr.f32.gmra.mxu0 %v3144
          %v3217 = vpop.f32.mrf.mxu0
          %v3218 = vadd.f32 0.0, %v3217
          %v3219 = vpop.f32.mrf.mxu0
          %3220 = vdwg.mxu0
          %3223 = vrot.lane.b32.xlu0 %v3213, 120
          %v3224 = vpop.permute.xlu0 %3223
          %3225 = vrot.lane.b32.xlu0 %v3218, 120
          %v3226 = vpop.permute.xlu0 %3225
          %v3229 = vadd.f32 %v3135, %v3224
          %v3230 = vadd.f32 %v3136, %v3226
          %s3231 = scalar_lea.vmem %s7, 144
          %v3232 = vld [vmem:[%s3231] sm:$0xff]
          %v3233 = vld [vmem:[%s3231 + $0x8] sm:$0xff]
          %v3235 = vsel %vm2402, %v3232, 0
          %v3238 = vsel %vm2402, %v3233, 0
          %3240 = vmatprep.subr.mxu0 0.0
          %3241 = vmatpush1.msra.mxu0 0.0
          %3242 = vmatprep.subr.mxu0 0.0
          %3243 = vmatpush1.msra.mxu0 0.0
          %3244 = vmatprep.subr.mxu0 0.0
          %3245 = vmatpush1.msra.mxu0 0.0
          %3246 = vmatprep.subr.mxu0 0.0
          %3247 = vmatpush1.msra.mxu0 0.0
          %3248 = vmatprep.subr.mxu0 0.0
          %3249 = vmatpush1.msra.mxu0 0.0
          %3250 = vmatprep.subr.mxu0 0.0
          %3251 = vmatpush1.msra.mxu0 0.0
          %3252 = vmatprep.subr.mxu0 0.0
          %3253 = vmatpush1.msra.mxu0 %v2396
          %3254 = vmatprep.subr.mxu0 0.0
          %3255 = vmatpush1.msra.mxu0 %v2395
          %3256 = vmatprep.subr.mxu0 0.0
          %3257 = vmatpush1.msra.mxu0 %v2394
          %3258 = vmatprep.subr.mxu0 0.0
          %3259 = vmatpush1.msra.mxu0 %v2393
          %3260 = vmatprep.subr.mxu0 0.0
          %3261 = vmatpush1.msra.mxu0 %v2392
          %3262 = vmatprep.subr.mxu0 0.0
          %3263 = vmatpush1.msra.mxu0 %v2391
          %3264 = vmatprep.subr.mxu0 0.0
          %3265 = vmatpush1.msra.mxu0 %v2390
          %3266 = vmatprep.subr.mxu0 0.0
          %3267 = vmatpush1.msra.mxu0 %v2389
          %3268 = vmatprep.subr.mxu0 0.0
          %3269 = vmatpush1.msra.mxu0 %v2388
          %3270 = vmatprep.subr.mxu0 0.0
          %3271 = vmatpush1.msra.mxu0 %v2387
          %3272 = vmatprep.subr.mxu0 0.0
          %3273 = vmatpush2.msra.mxu0 0.0
          %3274 = vmatprep.subr.mxu0 0.0
          %3275 = vmatpush2.msra.mxu0 0.0
          %3276 = vmatprep.subr.mxu0 0.0
          %3277 = vmatpush2.msra.mxu0 0.0
          %3278 = vmatprep.subr.mxu0 0.0
          %3279 = vmatpush2.msra.mxu0 0.0
          %3280 = vmatprep.subr.mxu0 0.0
          %3281 = vmatpush2.msra.mxu0 0.0
          %3282 = vmatprep.subr.mxu0 0.0
          %3283 = vmatpush2.msra.mxu0 0.0
          %3284 = vmatprep.subr.mxu0 0.0
          %3285 = vmatpush2.msra.mxu0 0.0
          %3286 = vmatprep.subr.mxu0 0.0
          %3287 = vmatpush2.msra.mxu0 0.0
          %3288 = vmatprep.subr.mxu0 0.0
          %3289 = vmatpush2.msra.mxu0 0.0
          %3290 = vmatprep.subr.mxu0 0.0
          %3291 = vmatpush2.msra.mxu0 0.0
          %3292 = vmatprep.subr.mxu0 0.0
          %3293 = vmatpush2.msra.mxu0 0.0
          %3294 = vmatprep.subr.mxu0 0.0
          %3295 = vmatpush2.msra.mxu0 0.0
          %3296 = vmatprep.subr.mxu0 0.0
          %3297 = vmatpush2.msra.mxu0 0.0
          %3298 = vmatprep.subr.mxu0 0.0
          %3299 = vmatpush2.msra.mxu0 0.0
          %3300 = vmatprep.subr.mxu0 0.0
          %3301 = vmatpush2.msra.mxu0 0.0
          %3302 = vmatprep.subr.mxu0 0.0
          %3303 = vmatpush2.msra.mxu0 0.0
          %3304 = vmatprep.mubr.f32.mxu0 0.0
          %3305 = vmatmul.mubr.f32.gmra.mxu0 %v3235
          %v3306 = vpop.f32.mrf.mxu0
          %v3307 = vadd.f32 0.0, %v3306
          %v3308 = vpop.f32.mrf.mxu0
          %3309 = vmatprep.mubr.f32.mxu0 0.0
          %3310 = vmatmul.mubr.f32.gmra.mxu0 %v3238
          %v3311 = vpop.f32.mrf.mxu0
          %v3312 = vadd.f32 0.0, %v3311
          %v3313 = vpop.f32.mrf.mxu0
          %3314 = vdwg.mxu0
          %3317 = vrot.lane.b32.xlu0 %v3307, 119
          %v3318 = vpop.permute.xlu0 %3317
          %3319 = vrot.lane.b32.xlu0 %v3312, 119
          %v3320 = vpop.permute.xlu0 %3319
          %v3323 = vadd.f32 %v3229, %v3318
          %v3324 = vadd.f32 %v3230, %v3320
          %v3325 = vmul.f32 %v3323, %v2364
          %v3326 = vmul.f32 %v3324, %v2364
          %v3327 = vadd.f32 %v3325, %v2377
          %v3328 = vadd.f32 %v3326, %v2378
          %s3329 = smul.u32 %s2380, 16
          %s3330 = scalar_lea.vmem [#allocation6], %s3329
          %3331 = vst [vmem:[%s3330] sm:$0xff] %v3327
          %3332 = vst [vmem:[%s3330 + $0x8] sm:$0xff] %v3328
        $region110: #{net_forward.1} parent=71 // loop_footer
          %s2384 = sadd.s32 1, %s2380
        $region111: #{net_forward.1} parent=71 // loop_footer_branch
          %2379 = sbr.rel target = $region107
        $region112: #{net_forward.1} parent=71 // loop_exit
          _
        %v3333 = vld [vmem:[%s10] sm:$0x3]
        %v3335 = vlaneseq
        %v3336 = vshrl.u32 %v3335, 7
        %v3337 = vsub.s32 0, %v3336
        %v3338 = vrot.slane %v3333, %v3337
        %v3339 = vlaneseq
        %v3340 = vshrl.u32 %v3339, 7
        %v3341 = vsub.s32 1, %v3340
        %v3342 = vrot.slane %v3333, %v3341
        %v3345 = vld [vmem:[#allocation6] sm:$0xff]
        %v3346 = vld [vmem:[#allocation6 + $0x8] sm:$0xff]
        %v3347 = vld [vmem:[#allocation6 + $0x10] sm:$0xff]
        %v3348 = vld [vmem:[#allocation6 + $0x18] sm:$0xff]
        %v3349 = vld [vmem:[#allocation6 + $0x20] sm:$0xff]
        %v3350 = vld [vmem:[#allocation6 + $0x28] sm:$0xff]
        %v3351 = vadd.f32 %v3345, %v3346
        %v3352 = vadd.f32 %v3351, %v3347
        %v3353 = vadd.f32 %v3352, %v3348
        %v3354 = vadd.f32 %v3353, %v3349
        %v3355 = vadd.f32 %v3354, %v3350
        %v3356 = vrot.slane %v3355, 4
        %v3357 = vadd.f32 %v3355, %v3356
        %v3358 = vrot.slane %v3357, 2
        %v3359 = vadd.f32 %v3357, %v3358
        %v3360 = vrot.slane %v3359, 1
        %v3361 = vadd.f32 %v3359, %v3360
        %v3362 = vmul.f32 %v3361, 0.020833334
        %3364 = vrot.lane.b32.xlu0 %v3362, 64
        %v3365 = vpop.permute.xlu0 %3364
        %vm3367 = vcmask 1040384
        %v3368 = vsel %vm3367, %v3362, %v3365
        %v3369 = vld [vmem:[#allocation11] sm:$0xff]
        %v3370 = vld [vmem:[#allocation11 + $0x8] sm:$0xff]
        %v3371 = vld [vmem:[#allocation11 + $0x10] sm:$0xff]
        %v3372 = vld [vmem:[#allocation11 + $0x18] sm:$0xff]
        %v3373 = vld [vmem:[#allocation11 + $0x20] sm:$0xff]
        %v3374 = vld [vmem:[#allocation11 + $0x28] sm:$0xff]
        %v3375 = vld [vmem:[#allocation11 + $0x30] sm:$0xff]
        %v3376 = vld [vmem:[#allocation11 + $0x38] sm:$0xff]
        %v3377 = vld [vmem:[#allocation11 + $0x40] sm:$0xff]
        %v3378 = vld [vmem:[#allocation11 + $0x48] sm:$0xff]
        %v3379 = vld [vmem:[#allocation11 + $0x50] sm:$0xff]
        %v3380 = vld [vmem:[#allocation11 + $0x58] sm:$0xff]
        %v3381 = vld [vmem:[#allocation11 + $0x60] sm:$0x1]
        %v3382 = vld [vmem:[#allocation11 + $0x68] sm:$0x1]
        %vm3383 = vcmask 400384
        %v3385 = vsel %vm3383, %v3368, 0
        %v3388 = vsel %vm3367, %v3381, 0
        %v3391 = vsel %vm3367, %v3382, 0
        %3393 = vmatprep.subr.mxu0 0.0
        %3394 = vmatpush1.msra.mxu0 0.0
        %3395 = vmatprep.subr.mxu0 0.0
        %3396 = vmatpush1.msra.mxu0 0.0
        %3397 = vmatprep.subr.mxu0 0.0
        %3398 = vmatpush1.msra.mxu0 0.0
        %3399 = vmatprep.subr.mxu0 0.0
        %3400 = vmatpush1.msra.mxu0 0.0
        %3401 = vmatprep.subr.mxu0 0.0
        %3402 = vmatpush1.msra.mxu0 0.0
        %3403 = vmatprep.subr.mxu0 0.0
        %3404 = vmatpush1.msra.mxu0 0.0
        %3405 = vmatprep.subr.mxu0 0.0
        %3406 = vmatpush1.msra.mxu0 0.0
        %3407 = vmatprep.subr.mxu0 0.0
        %3408 = vmatpush1.msra.mxu0 0.0
        %3409 = vmatprep.subr.mxu0 0.0
        %3410 = vmatpush1.msra.mxu0 0.0
        %3411 = vmatprep.subr.mxu0 %v3391
        %3412 = vmatpush1.msra.mxu0 %v3388
        %3413 = vmatprep.subr.mxu0 %v3380
        %3414 = vmatpush1.msra.mxu0 %v3379
        %3415 = vmatprep.subr.mxu0 %v3378
        %3416 = vmatpush1.msra.mxu0 %v3377
        %3417 = vmatprep.subr.mxu0 %v3376
        %3418 = vmatpush1.msra.mxu0 %v3375
        %3419 = vmatprep.subr.mxu0 %v3374
        %3420 = vmatpush1.msra.mxu0 %v3373
        %3421 = vmatprep.subr.mxu0 %v3372
        %3422 = vmatpush1.msra.mxu0 %v3371
        %3423 = vmatprep.subr.mxu0 %v3370
        %3424 = vmatpush1.msra.mxu0 %v3369
        %3425 = vmatprep.subr.mxu0 0.0
        %3426 = vmatpush2.msra.mxu0 0.0
        %3427 = vmatprep.subr.mxu0 0.0
        %3428 = vmatpush2.msra.mxu0 0.0
        %3429 = vmatprep.subr.mxu0 0.0
        %3430 = vmatpush2.msra.mxu0 0.0
        %3431 = vmatprep.subr.mxu0 0.0
        %3432 = vmatpush2.msra.mxu0 0.0
        %3433 = vmatprep.subr.mxu0 0.0
        %3434 = vmatpush2.msra.mxu0 0.0
        %3435 = vmatprep.subr.mxu0 0.0
        %3436 = vmatpush2.msra.mxu0 0.0
        %3437 = vmatprep.subr.mxu0 0.0
        %3438 = vmatpush2.msra.mxu0 0.0
        %3439 = vmatprep.subr.mxu0 0.0
        %3440 = vmatpush2.msra.mxu0 0.0
        %3441 = vmatprep.subr.mxu0 0.0
        %3442 = vmatpush2.msra.mxu0 0.0
        %3443 = vmatprep.subr.mxu0 0.0
        %3444 = vmatpush2.msra.mxu0 0.0
        %3445 = vmatprep.subr.mxu0 0.0
        %3446 = vmatpush2.msra.mxu0 0.0
        %3447 = vmatprep.subr.mxu0 0.0
        %3448 = vmatpush2.msra.mxu0 0.0
        %3449 = vmatprep.subr.mxu0 0.0
        %3450 = vmatpush2.msra.mxu0 0.0
        %3451 = vmatprep.subr.mxu0 0.0
        %3452 = vmatpush2.msra.mxu0 0.0
        %3453 = vmatprep.subr.mxu0 0.0
        %3454 = vmatpush2.msra.mxu0 0.0
        %3455 = vmatprep.subr.mxu0 0.0
        %3456 = vmatpush2.msra.mxu0 0.0
        %3457 = vmatprep.mubr.f32.mxu0 0.0
        %3458 = vmatmul.mubr.f32.gmra.mxu0 %v3385
        %v3459 = vpop.f32.mrf.mxu0
        %v3460 = vadd.f32 0.0, %v3459
        %v3461 = vpop.f32.mrf.mxu0
        %v3462 = vadd.f32 0.0, %v3461
        %3463 = vdwg.mxu0
        %v3464 = vadd.f32 %v3338, %v3460
        %v3465 = vadd.f32 %v3342, %v3462
        %s3466 = scalar_lea.vmem [#allocation6], 48
        %v3467 = vld [vmem:[%s3466] sm:$0xff]
        %v3468 = vld [vmem:[%s3466 + $0x8] sm:$0xff]
        %v3469 = vld [vmem:[%s3466 + $0x10] sm:$0xff]
        %v3470 = vld [vmem:[%s3466 + $0x18] sm:$0xff]
        %v3471 = vld [vmem:[%s3466 + $0x20] sm:$0xff]
        %v3472 = vld [vmem:[%s3466 + $0x28] sm:$0xff]
        %v3473 = vadd.f32 %v3467, %v3468
        %v3474 = vadd.f32 %v3473, %v3469
        %v3475 = vadd.f32 %v3474, %v3470
        %v3476 = vadd.f32 %v3475, %v3471
        %v3477 = vadd.f32 %v3476, %v3472
        %v3478 = vrot.slane %v3477, 4
        %v3479 = vadd.f32 %v3477, %v3478
        %v3480 = vrot.slane %v3479, 2
        %v3481 = vadd.f32 %v3479, %v3480
        %v3482 = vrot.slane %v3481, 1
        %v3483 = vadd.f32 %v3481, %v3482
        %v3484 = vmul.f32 %v3483, 0.020833334
        %3486 = vrot.lane.b32.xlu0 %v3484, 64
        %v3487 = vpop.permute.xlu0 %3486
        %v3489 = vsel %vm3367, %v3484, %v3487
        %s3490 = scalar_lea.vmem [#allocation11], 112
        %v3491 = vld [vmem:[%s3490] sm:$0xff]
        %v3492 = vld [vmem:[%s3490 + $0x8] sm:$0xff]
        %v3493 = vld [vmem:[%s3490 + $0x10] sm:$0xff]
        %v3494 = vld [vmem:[%s3490 + $0x18] sm:$0xff]
        %v3495 = vld [vmem:[%s3490 + $0x20] sm:$0xff]
        %v3496 = vld [vmem:[%s3490 + $0x28] sm:$0xff]
        %v3497 = vld [vmem:[%s3490 + $0x30] sm:$0xff]
        %v3498 = vld [vmem:[%s3490 + $0x38] sm:$0xff]
        %v3499 = vld [vmem:[%s3490 + $0x40] sm:$0xff]
        %v3500 = vld [vmem:[%s3490 + $0x48] sm:$0xff]
        %v3501 = vld [vmem:[%s3490 + $0x50] sm:$0xff]
        %v3502 = vld [vmem:[%s3490 + $0x58] sm:$0xff]
        %v3503 = vld [vmem:[%s3490 + $0x60] sm:$0x1]
        %v3504 = vld [vmem:[%s3490 + $0x68] sm:$0x1]
        %v3506 = vsel %vm3383, %v3489, 0
        %v3509 = vsel %vm3367, %v3503, 0
        %v3512 = vsel %vm3367, %v3504, 0
        %3514 = vmatprep.subr.mxu0 0.0
        %3515 = vmatpush1.msra.mxu0 0.0
        %3516 = vmatprep.subr.mxu0 0.0
        %3517 = vmatpush1.msra.mxu0 0.0
        %3518 = vmatprep.subr.mxu0 0.0
        %3519 = vmatpush1.msra.mxu0 0.0
        %3520 = vmatprep.subr.mxu0 0.0
        %3521 = vmatpush1.msra.mxu0 0.0
        %3522 = vmatprep.subr.mxu0 0.0
        %3523 = vmatpush1.msra.mxu0 0.0
        %3524 = vmatprep.subr.mxu0 0.0
        %3525 = vmatpush1.msra.mxu0 0.0
        %3526 = vmatprep.subr.mxu0 0.0
        %3527 = vmatpush1.msra.mxu0 0.0
        %3528 = vmatprep.subr.mxu0 0.0
        %3529 = vmatpush1.msra.mxu0 0.0
        %3530 = vmatprep.subr.mxu0 0.0
        %3531 = vmatpush1.msra.mxu0 0.0
        %3532 = vmatprep.subr.mxu0 %v3512
        %3533 = vmatpush1.msra.mxu0 %v3509
        %3534 = vmatprep.subr.mxu0 %v3502
        %3535 = vmatpush1.msra.mxu0 %v3501
        %3536 = vmatprep.subr.mxu0 %v3500
        %3537 = vmatpush1.msra.mxu0 %v3499
        %3538 = vmatprep.subr.mxu0 %v3498
        %3539 = vmatpush1.msra.mxu0 %v3497
        %3540 = vmatprep.subr.mxu0 %v3496
        %3541 = vmatpush1.msra.mxu0 %v3495
        %3542 = vmatprep.subr.mxu0 %v3494
        %3543 = vmatpush1.msra.mxu0 %v3493
        %3544 = vmatprep.subr.mxu0 %v3492
        %3545 = vmatpush1.msra.mxu0 %v3491
        %3546 = vmatprep.subr.mxu0 0.0
        %3547 = vmatpush2.msra.mxu0 0.0
        %3548 = vmatprep.subr.mxu0 0.0
        %3549 = vmatpush2.msra.mxu0 0.0
        %3550 = vmatprep.subr.mxu0 0.0
        %3551 = vmatpush2.msra.mxu0 0.0
        %3552 = vmatprep.subr.mxu0 0.0
        %3553 = vmatpush2.msra.mxu0 0.0
        %3554 = vmatprep.subr.mxu0 0.0
        %3555 = vmatpush2.msra.mxu0 0.0
        %3556 = vmatprep.subr.mxu0 0.0
        %3557 = vmatpush2.msra.mxu0 0.0
        %3558 = vmatprep.subr.mxu0 0.0
        %3559 = vmatpush2.msra.mxu0 0.0
        %3560 = vmatprep.subr.mxu0 0.0
        %3561 = vmatpush2.msra.mxu0 0.0
        %3562 = vmatprep.subr.mxu0 0.0
        %3563 = vmatpush2.msra.mxu0 0.0
        %3564 = vmatprep.subr.mxu0 0.0
        %3565 = vmatpush2.msra.mxu0 0.0
        %3566 = vmatprep.subr.mxu0 0.0
        %3567 = vmatpush2.msra.mxu0 0.0
        %3568 = vmatprep.subr.mxu0 0.0
        %3569 = vmatpush2.msra.mxu0 0.0
        %3570 = vmatprep.subr.mxu0 0.0
        %3571 = vmatpush2.msra.mxu0 0.0
        %3572 = vmatprep.subr.mxu0 0.0
        %3573 = vmatpush2.msra.mxu0 0.0
        %3574 = vmatprep.subr.mxu0 0.0
        %3575 = vmatpush2.msra.mxu0 0.0
        %3576 = vmatprep.subr.mxu0 0.0
        %3577 = vmatpush2.msra.mxu0 0.0
        %3578 = vmatprep.mubr.f32.mxu0 0.0
        %3579 = vmatmul.mubr.f32.gmra.mxu0 %v3506
        %v3580 = vpop.f32.mrf.mxu0
        %v3581 = vadd.f32 0.0, %v3580
        %v3582 = vpop.f32.mrf.mxu0
        %v3583 = vadd.f32 0.0, %v3582
        %3584 = vdwg.mxu0
        %v3585 = vadd.f32 %v3464, %v3581
        %v3586 = vadd.f32 %v3465, %v3583
        %s3587 = scalar_lea.vmem [#allocation6], 96
        %v3588 = vld [vmem:[%s3587] sm:$0xff]
        %v3589 = vld [vmem:[%s3587 + $0x8] sm:$0xff]
        %v3590 = vld [vmem:[%s3587 + $0x10] sm:$0xff]
        %v3591 = vld [vmem:[%s3587 + $0x18] sm:$0xff]
        %v3592 = vld [vmem:[%s3587 + $0x20] sm:$0xff]
        %v3593 = vld [vmem:[%s3587 + $0x28] sm:$0xff]
        %v3594 = vadd.f32 %v3588, %v3589
        %v3595 = vadd.f32 %v3594, %v3590
        %v3596 = vadd.f32 %v3595, %v3591
        %v3597 = vadd.f32 %v3596, %v3592
        %v3598 = vadd.f32 %v3597, %v3593
        %v3599 = vrot.slane %v3598, 4
        %v3600 = vadd.f32 %v3598, %v3599
        %v3601 = vrot.slane %v3600, 2
        %v3602 = vadd.f32 %v3600, %v3601
        %v3603 = vrot.slane %v3602, 1
        %v3604 = vadd.f32 %v3602, %v3603
        %v3605 = vmul.f32 %v3604, 0.020833334
        %3607 = vrot.lane.b32.xlu0 %v3605, 64
        %v3608 = vpop.permute.xlu0 %3607
        %v3610 = vsel %vm3367, %v3605, %v3608
        %s3611 = scalar_lea.vmem [#allocation11], 224
        %v3612 = vld [vmem:[%s3611] sm:$0xff]
        %v3613 = vld [vmem:[%s3611 + $0x8] sm:$0xff]
        %v3614 = vld [vmem:[%s3611 + $0x10] sm:$0xff]
        %v3615 = vld [vmem:[%s3611 + $0x18] sm:$0xff]
        %v3616 = vld [vmem:[%s3611 + $0x20] sm:$0xff]
        %v3617 = vld [vmem:[%s3611 + $0x28] sm:$0xff]
        %v3618 = vld [vmem:[%s3611 + $0x30] sm:$0xff]
        %v3619 = vld [vmem:[%s3611 + $0x38] sm:$0xff]
        %v3620 = vld [vmem:[%s3611 + $0x40] sm:$0xff]
        %v3621 = vld [vmem:[%s3611 + $0x48] sm:$0xff]
        %v3622 = vld [vmem:[%s3611 + $0x50] sm:$0xff]
        %v3623 = vld [vmem:[%s3611 + $0x58] sm:$0xff]
        %v3624 = vld [vmem:[%s3611 + $0x60] sm:$0x1]
        %v3625 = vld [vmem:[%s3611 + $0x68] sm:$0x1]
        %v3627 = vsel %vm3383, %v3610, 0
        %v3630 = vsel %vm3367, %v3624, 0
        %v3633 = vsel %vm3367, %v3625, 0
        %3635 = vmatprep.subr.mxu0 0.0
        %3636 = vmatpush1.msra.mxu0 0.0
        %3637 = vmatprep.subr.mxu0 0.0
        %3638 = vmatpush1.msra.mxu0 0.0
        %3639 = vmatprep.subr.mxu0 0.0
        %3640 = vmatpush1.msra.mxu0 0.0
        %3641 = vmatprep.subr.mxu0 0.0
        %3642 = vmatpush1.msra.mxu0 0.0
        %3643 = vmatprep.subr.mxu0 0.0
        %3644 = vmatpush1.msra.mxu0 0.0
        %3645 = vmatprep.subr.mxu0 0.0
        %3646 = vmatpush1.msra.mxu0 0.0
        %3647 = vmatprep.subr.mxu0 0.0
        %3648 = vmatpush1.msra.mxu0 0.0
        %3649 = vmatprep.subr.mxu0 0.0
        %3650 = vmatpush1.msra.mxu0 0.0
        %3651 = vmatprep.subr.mxu0 0.0
        %3652 = vmatpush1.msra.mxu0 0.0
        %3653 = vmatprep.subr.mxu0 %v3633
        %3654 = vmatpush1.msra.mxu0 %v3630
        %3655 = vmatprep.subr.mxu0 %v3623
        %3656 = vmatpush1.msra.mxu0 %v3622
        %3657 = vmatprep.subr.mxu0 %v3621
        %3658 = vmatpush1.msra.mxu0 %v3620
        %3659 = vmatprep.subr.mxu0 %v3619
        %3660 = vmatpush1.msra.mxu0 %v3618
        %3661 = vmatprep.subr.mxu0 %v3617
        %3662 = vmatpush1.msra.mxu0 %v3616
        %3663 = vmatprep.subr.mxu0 %v3615
        %3664 = vmatpush1.msra.mxu0 %v3614
        %3665 = vmatprep.subr.mxu0 %v3613
        %3666 = vmatpush1.msra.mxu0 %v3612
        %3667 = vmatprep.subr.mxu0 0.0
        %3668 = vmatpush2.msra.mxu0 0.0
        %3669 = vmatprep.subr.mxu0 0.0
        %3670 = vmatpush2.msra.mxu0 0.0
        %3671 = vmatprep.subr.mxu0 0.0
        %3672 = vmatpush2.msra.mxu0 0.0
        %3673 = vmatprep.subr.mxu0 0.0
        %3674 = vmatpush2.msra.mxu0 0.0
        %3675 = vmatprep.subr.mxu0 0.0
        %3676 = vmatpush2.msra.mxu0 0.0
        %3677 = vmatprep.subr.mxu0 0.0
        %3678 = vmatpush2.msra.mxu0 0.0
        %3679 = vmatprep.subr.mxu0 0.0
        %3680 = vmatpush2.msra.mxu0 0.0
        %3681 = vmatprep.subr.mxu0 0.0
        %3682 = vmatpush2.msra.mxu0 0.0
        %3683 = vmatprep.subr.mxu0 0.0
        %3684 = vmatpush2.msra.mxu0 0.0
        %3685 = vmatprep.subr.mxu0 0.0
        %3686 = vmatpush2.msra.mxu0 0.0
        %3687 = vmatprep.subr.mxu0 0.0
        %3688 = vmatpush2.msra.mxu0 0.0
        %3689 = vmatprep.subr.mxu0 0.0
        %3690 = vmatpush2.msra.mxu0 0.0
        %3691 = vmatprep.subr.mxu0 0.0
        %3692 = vmatpush2.msra.mxu0 0.0
        %3693 = vmatprep.subr.mxu0 0.0
        %3694 = vmatpush2.msra.mxu0 0.0
        %3695 = vmatprep.subr.mxu0 0.0
        %3696 = vmatpush2.msra.mxu0 0.0
        %3697 = vmatprep.subr.mxu0 0.0
        %3698 = vmatpush2.msra.mxu0 0.0
        %3699 = vmatprep.mubr.f32.mxu0 0.0
        %3700 = vmatmul.mubr.f32.gmra.mxu0 %v3627
        %v3701 = vpop.f32.mrf.mxu0
        %v3702 = vadd.f32 0.0, %v3701
        %v3703 = vpop.f32.mrf.mxu0
        %v3704 = vadd.f32 0.0, %v3703
        %3705 = vdwg.mxu0
        %v3706 = vadd.f32 %v3585, %v3702
        %v3707 = vadd.f32 %v3586, %v3704
        %s3708 = scalar_lea.vmem [#allocation6], 144
        %v3709 = vld [vmem:[%s3708] sm:$0xff]
        %v3710 = vld [vmem:[%s3708 + $0x8] sm:$0xff]
        %v3711 = vld [vmem:[%s3708 + $0x10] sm:$0xff]
        %v3712 = vld [vmem:[%s3708 + $0x18] sm:$0xff]
        %v3713 = vld [vmem:[%s3708 + $0x20] sm:$0xff]
        %v3714 = vld [vmem:[%s3708 + $0x28] sm:$0xff]
        %v3715 = vadd.f32 %v3709, %v3710
        %v3716 = vadd.f32 %v3715, %v3711
        %v3717 = vadd.f32 %v3716, %v3712
        %v3718 = vadd.f32 %v3717, %v3713
        %v3719 = vadd.f32 %v3718, %v3714
        %v3720 = vrot.slane %v3719, 4
        %v3721 = vadd.f32 %v3719, %v3720
        %v3722 = vrot.slane %v3721, 2
        %v3723 = vadd.f32 %v3721, %v3722
        %v3724 = vrot.slane %v3723, 1
        %v3725 = vadd.f32 %v3723, %v3724
        %v3726 = vmul.f32 %v3725, 0.020833334
        %3728 = vrot.lane.b32.xlu0 %v3726, 64
        %v3729 = vpop.permute.xlu0 %3728
        %v3731 = vsel %vm3367, %v3726, %v3729
        %s3732 = scalar_lea.vmem [#allocation11], 336
        %v3733 = vld [vmem:[%s3732] sm:$0xff]
        %v3734 = vld [vmem:[%s3732 + $0x8] sm:$0xff]
        %v3735 = vld [vmem:[%s3732 + $0x10] sm:$0xff]
        %v3736 = vld [vmem:[%s3732 + $0x18] sm:$0xff]
        %v3737 = vld [vmem:[%s3732 + $0x20] sm:$0xff]
        %v3738 = vld [vmem:[%s3732 + $0x28] sm:$0xff]
        %v3739 = vld [vmem:[%s3732 + $0x30] sm:$0xff]
        %v3740 = vld [vmem:[%s3732 + $0x38] sm:$0xff]
        %v3741 = vld [vmem:[%s3732 + $0x40] sm:$0xff]
        %v3742 = vld [vmem:[%s3732 + $0x48] sm:$0xff]
        %v3743 = vld [vmem:[%s3732 + $0x50] sm:$0xff]
        %v3744 = vld [vmem:[%s3732 + $0x58] sm:$0xff]
        %v3745 = vld [vmem:[%s3732 + $0x60] sm:$0x1]
        %v3746 = vld [vmem:[%s3732 + $0x68] sm:$0x1]
        %v3748 = vsel %vm3383, %v3731, 0
        %v3751 = vsel %vm3367, %v3745, 0
        %v3754 = vsel %vm3367, %v3746, 0
        %3756 = vmatprep.subr.mxu0 0.0
        %3757 = vmatpush1.msra.mxu0 0.0
        %3758 = vmatprep.subr.mxu0 0.0
        %3759 = vmatpush1.msra.mxu0 0.0
        %3760 = vmatprep.subr.mxu0 0.0
        %3761 = vmatpush1.msra.mxu0 0.0
        %3762 = vmatprep.subr.mxu0 0.0
        %3763 = vmatpush1.msra.mxu0 0.0
        %3764 = vmatprep.subr.mxu0 0.0
        %3765 = vmatpush1.msra.mxu0 0.0
        %3766 = vmatprep.subr.mxu0 0.0
        %3767 = vmatpush1.msra.mxu0 0.0
        %3768 = vmatprep.subr.mxu0 0.0
        %3769 = vmatpush1.msra.mxu0 0.0
        %3770 = vmatprep.subr.mxu0 0.0
        %3771 = vmatpush1.msra.mxu0 0.0
        %3772 = vmatprep.subr.mxu0 0.0
        %3773 = vmatpush1.msra.mxu0 0.0
        %3774 = vmatprep.subr.mxu0 %v3754
        %3775 = vmatpush1.msra.mxu0 %v3751
        %3776 = vmatprep.subr.mxu0 %v3744
        %3777 = vmatpush1.msra.mxu0 %v3743
        %3778 = vmatprep.subr.mxu0 %v3742
        %3779 = vmatpush1.msra.mxu0 %v3741
        %3780 = vmatprep.subr.mxu0 %v3740
        %3781 = vmatpush1.msra.mxu0 %v3739
        %3782 = vmatprep.subr.mxu0 %v3738
        %3783 = vmatpush1.msra.mxu0 %v3737
        %3784 = vmatprep.subr.mxu0 %v3736
        %3785 = vmatpush1.msra.mxu0 %v3735
        %3786 = vmatprep.subr.mxu0 %v3734
        %3787 = vmatpush1.msra.mxu0 %v3733
        %3788 = vmatprep.subr.mxu0 0.0
        %3789 = vmatpush2.msra.mxu0 0.0
        %3790 = vmatprep.subr.mxu0 0.0
        %3791 = vmatpush2.msra.mxu0 0.0
        %3792 = vmatprep.subr.mxu0 0.0
        %3793 = vmatpush2.msra.mxu0 0.0
        %3794 = vmatprep.subr.mxu0 0.0
        %3795 = vmatpush2.msra.mxu0 0.0
        %3796 = vmatprep.subr.mxu0 0.0
        %3797 = vmatpush2.msra.mxu0 0.0
        %3798 = vmatprep.subr.mxu0 0.0
        %3799 = vmatpush2.msra.mxu0 0.0
        %3800 = vmatprep.subr.mxu0 0.0
        %3801 = vmatpush2.msra.mxu0 0.0
        %3802 = vmatprep.subr.mxu0 0.0
        %3803 = vmatpush2.msra.mxu0 0.0
        %3804 = vmatprep.subr.mxu0 0.0
        %3805 = vmatpush2.msra.mxu0 0.0
        %3806 = vmatprep.subr.mxu0 0.0
        %3807 = vmatpush2.msra.mxu0 0.0
        %3808 = vmatprep.subr.mxu0 0.0
        %3809 = vmatpush2.msra.mxu0 0.0
        %3810 = vmatprep.subr.mxu0 0.0
        %3811 = vmatpush2.msra.mxu0 0.0
        %3812 = vmatprep.subr.mxu0 0.0
        %3813 = vmatpush2.msra.mxu0 0.0
        %3814 = vmatprep.subr.mxu0 0.0
        %3815 = vmatpush2.msra.mxu0 0.0
        %3816 = vmatprep.subr.mxu0 0.0
        %3817 = vmatpush2.msra.mxu0 0.0
        %3818 = vmatprep.subr.mxu0 0.0
        %3819 = vmatpush2.msra.mxu0 0.0
        %3820 = vmatprep.mubr.f32.mxu0 0.0
        %3821 = vmatmul.mubr.f32.gmra.mxu0 %v3748
        %v3822 = vpop.f32.mrf.mxu0
        %v3823 = vadd.f32 0.0, %v3822
        %v3824 = vpop.f32.mrf.mxu0
        %v3825 = vadd.f32 0.0, %v3824
        %3826 = vdwg.mxu0
        %v3827 = vadd.f32 %v3706, %v3823
        %v3828 = vadd.f32 %v3707, %v3825
        %s3829 = scalar_lea.vmem [#allocation6], 192
        %v3830 = vld [vmem:[%s3829] sm:$0xff]
        %v3831 = vld [vmem:[%s3829 + $0x8] sm:$0xff]
        %v3832 = vld [vmem:[%s3829 + $0x10] sm:$0xff]
        %v3833 = vld [vmem:[%s3829 + $0x18] sm:$0xff]
        %v3834 = vld [vmem:[%s3829 + $0x20] sm:$0xff]
        %v3835 = vld [vmem:[%s3829 + $0x28] sm:$0xff]
        %v3836 = vadd.f32 %v3830, %v3831
        %v3837 = vadd.f32 %v3836, %v3832
        %v3838 = vadd.f32 %v3837, %v3833
        %v3839 = vadd.f32 %v3838, %v3834
        %v3840 = vadd.f32 %v3839, %v3835
        %v3841 = vrot.slane %v3840, 4
        %v3842 = vadd.f32 %v3840, %v3841
        %v3843 = vrot.slane %v3842, 2
        %v3844 = vadd.f32 %v3842, %v3843
        %v3845 = vrot.slane %v3844, 1
        %v3846 = vadd.f32 %v3844, %v3845
        %v3847 = vmul.f32 %v3846, 0.020833334
        %3849 = vrot.lane.b32.xlu0 %v3847, 64
        %v3850 = vpop.permute.xlu0 %3849
        %v3852 = vsel %vm3367, %v3847, %v3850
        %s3853 = scalar_lea.vmem [#allocation11], 448
        %v3854 = vld [vmem:[%s3853] sm:$0xff]
        %v3855 = vld [vmem:[%s3853 + $0x8] sm:$0xff]
        %v3856 = vld [vmem:[%s3853 + $0x10] sm:$0xff]
        %v3857 = vld [vmem:[%s3853 + $0x18] sm:$0xff]
        %v3858 = vld [vmem:[%s3853 + $0x20] sm:$0xff]
        %v3859 = vld [vmem:[%s3853 + $0x28] sm:$0xff]
        %v3860 = vld [vmem:[%s3853 + $0x30] sm:$0xff]
        %v3861 = vld [vmem:[%s3853 + $0x38] sm:$0xff]
        %v3862 = vld [vmem:[%s3853 + $0x40] sm:$0xff]
        %v3863 = vld [vmem:[%s3853 + $0x48] sm:$0xff]
        %v3864 = vld [vmem:[%s3853 + $0x50] sm:$0xff]
        %v3865 = vld [vmem:[%s3853 + $0x58] sm:$0xff]
        %v3866 = vld [vmem:[%s3853 + $0x60] sm:$0x1]
        %v3867 = vld [vmem:[%s3853 + $0x68] sm:$0x1]
        %v3869 = vsel %vm3383, %v3852, 0
        %v3872 = vsel %vm3367, %v3866, 0
        %v3875 = vsel %vm3367, %v3867, 0
        %3877 = vmatprep.subr.mxu0 0.0
        %3878 = vmatpush1.msra.mxu0 0.0
        %3879 = vmatprep.subr.mxu0 0.0
        %3880 = vmatpush1.msra.mxu0 0.0
        %3881 = vmatprep.subr.mxu0 0.0
        %3882 = vmatpush1.msra.mxu0 0.0
        %3883 = vmatprep.subr.mxu0 0.0
        %3884 = vmatpush1.msra.mxu0 0.0
        %3885 = vmatprep.subr.mxu0 0.0
        %3886 = vmatpush1.msra.mxu0 0.0
        %3887 = vmatprep.subr.mxu0 0.0
        %3888 = vmatpush1.msra.mxu0 0.0
        %3889 = vmatprep.subr.mxu0 0.0
        %3890 = vmatpush1.msra.mxu0 0.0
        %3891 = vmatprep.subr.mxu0 0.0
        %3892 = vmatpush1.msra.mxu0 0.0
        %3893 = vmatprep.subr.mxu0 0.0
        %3894 = vmatpush1.msra.mxu0 0.0
        %3895 = vmatprep.subr.mxu0 %v3875
        %3896 = vmatpush1.msra.mxu0 %v3872
        %3897 = vmatprep.subr.mxu0 %v3865
        %3898 = vmatpush1.msra.mxu0 %v3864
        %3899 = vmatprep.subr.mxu0 %v3863
        %3900 = vmatpush1.msra.mxu0 %v3862
        %3901 = vmatprep.subr.mxu0 %v3861
        %3902 = vmatpush1.msra.mxu0 %v3860
        %3903 = vmatprep.subr.mxu0 %v3859
        %3904 = vmatpush1.msra.mxu0 %v3858
        %3905 = vmatprep.subr.mxu0 %v3857
        %3906 = vmatpush1.msra.mxu0 %v3856
        %3907 = vmatprep.subr.mxu0 %v3855
        %3908 = vmatpush1.msra.mxu0 %v3854
        %3909 = vmatprep.subr.mxu0 0.0
        %3910 = vmatpush2.msra.mxu0 0.0
        %3911 = vmatprep.subr.mxu0 0.0
        %3912 = vmatpush2.msra.mxu0 0.0
        %3913 = vmatprep.subr.mxu0 0.0
        %3914 = vmatpush2.msra.mxu0 0.0
        %3915 = vmatprep.subr.mxu0 0.0
        %3916 = vmatpush2.msra.mxu0 0.0
        %3917 = vmatprep.subr.mxu0 0.0
        %3918 = vmatpush2.msra.mxu0 0.0
        %3919 = vmatprep.subr.mxu0 0.0
        %3920 = vmatpush2.msra.mxu0 0.0
        %3921 = vmatprep.subr.mxu0 0.0
        %3922 = vmatpush2.msra.mxu0 0.0
        %3923 = vmatprep.subr.mxu0 0.0
        %3924 = vmatpush2.msra.mxu0 0.0
        %3925 = vmatprep.subr.mxu0 0.0
        %3926 = vmatpush2.msra.mxu0 0.0
        %3927 = vmatprep.subr.mxu0 0.0
        %3928 = vmatpush2.msra.mxu0 0.0
        %3929 = vmatprep.subr.mxu0 0.0
        %3930 = vmatpush2.msra.mxu0 0.0
        %3931 = vmatprep.subr.mxu0 0.0
        %3932 = vmatpush2.msra.mxu0 0.0
        %3933 = vmatprep.subr.mxu0 0.0
        %3934 = vmatpush2.msra.mxu0 0.0
        %3935 = vmatprep.subr.mxu0 0.0
        %3936 = vmatpush2.msra.mxu0 0.0
        %3937 = vmatprep.subr.mxu0 0.0
        %3938 = vmatpush2.msra.mxu0 0.0
        %3939 = vmatprep.subr.mxu0 0.0
        %3940 = vmatpush2.msra.mxu0 0.0
        %3941 = vmatprep.mubr.f32.mxu0 0.0
        %3942 = vmatmul.mubr.f32.gmra.mxu0 %v3869
        %v3943 = vpop.f32.mrf.mxu0
        %v3944 = vadd.f32 0.0, %v3943
        %v3945 = vpop.f32.mrf.mxu0
        %v3946 = vadd.f32 0.0, %v3945
        %3947 = vdwg.mxu0
        %v3948 = vadd.f32 %v3827, %v3944
        %v3949 = vadd.f32 %v3828, %v3946
        %s3950 = scalar_lea.vmem [#allocation6], 240
        %v3951 = vld [vmem:[%s3950] sm:$0xff]
        %v3952 = vld [vmem:[%s3950 + $0x8] sm:$0xff]
        %v3953 = vld [vmem:[%s3950 + $0x10] sm:$0xff]
        %v3954 = vld [vmem:[%s3950 + $0x18] sm:$0xff]
        %v3955 = vld [vmem:[%s3950 + $0x20] sm:$0xff]
        %v3956 = vld [vmem:[%s3950 + $0x28] sm:$0xff]
        %v3957 = vadd.f32 %v3951, %v3952
        %v3958 = vadd.f32 %v3957, %v3953
        %v3959 = vadd.f32 %v3958, %v3954
        %v3960 = vadd.f32 %v3959, %v3955
        %v3961 = vadd.f32 %v3960, %v3956
        %v3962 = vrot.slane %v3961, 4
        %v3963 = vadd.f32 %v3961, %v3962
        %v3964 = vrot.slane %v3963, 2
        %v3965 = vadd.f32 %v3963, %v3964
        %v3966 = vrot.slane %v3965, 1
        %v3967 = vadd.f32 %v3965, %v3966
        %v3968 = vmul.f32 %v3967, 0.020833334
        %3970 = vrot.lane.b32.xlu0 %v3968, 64
        %v3971 = vpop.permute.xlu0 %3970
        %v3973 = vsel %vm3367, %v3968, %v3971
        %s3974 = scalar_lea.vmem [#allocation11], 560
        %v3975 = vld [vmem:[%s3974] sm:$0xff]
        %v3976 = vld [vmem:[%s3974 + $0x8] sm:$0xff]
        %v3977 = vld [vmem:[%s3974 + $0x10] sm:$0xff]
        %v3978 = vld [vmem:[%s3974 + $0x18] sm:$0xff]
        %v3979 = vld [vmem:[%s3974 + $0x20] sm:$0xff]
        %v3980 = vld [vmem:[%s3974 + $0x28] sm:$0xff]
        %v3981 = vld [vmem:[%s3974 + $0x30] sm:$0xff]
        %v3982 = vld [vmem:[%s3974 + $0x38] sm:$0xff]
        %v3983 = vld [vmem:[%s3974 + $0x40] sm:$0xff]
        %v3984 = vld [vmem:[%s3974 + $0x48] sm:$0xff]
        %v3985 = vld [vmem:[%s3974 + $0x50] sm:$0xff]
        %v3986 = vld [vmem:[%s3974 + $0x58] sm:$0xff]
        %v3987 = vld [vmem:[%s3974 + $0x60] sm:$0x1]
        %v3988 = vld [vmem:[%s3974 + $0x68] sm:$0x1]
        %v3990 = vsel %vm3383, %v3973, 0
        %v3993 = vsel %vm3367, %v3987, 0
        %v3996 = vsel %vm3367, %v3988, 0
        %3998 = vmatprep.subr.mxu0 0.0
        %3999 = vmatpush1.msra.mxu0 0.0
        %4000 = vmatprep.subr.mxu0 0.0
        %4001 = vmatpush1.msra.mxu0 0.0
        %4002 = vmatprep.subr.mxu0 0.0
        %4003 = vmatpush1.msra.mxu0 0.0
        %4004 = vmatprep.subr.mxu0 0.0
        %4005 = vmatpush1.msra.mxu0 0.0
        %4006 = vmatprep.subr.mxu0 0.0
        %4007 = vmatpush1.msra.mxu0 0.0
        %4008 = vmatprep.subr.mxu0 0.0
        %4009 = vmatpush1.msra.mxu0 0.0
        %4010 = vmatprep.subr.mxu0 0.0
        %4011 = vmatpush1.msra.mxu0 0.0
        %4012 = vmatprep.subr.mxu0 0.0
        %4013 = vmatpush1.msra.mxu0 0.0
        %4014 = vmatprep.subr.mxu0 0.0
        %4015 = vmatpush1.msra.mxu0 0.0
        %4016 = vmatprep.subr.mxu0 %v3996
        %4017 = vmatpush1.msra.mxu0 %v3993
        %4018 = vmatprep.subr.mxu0 %v3986
        %4019 = vmatpush1.msra.mxu0 %v3985
        %4020 = vmatprep.subr.mxu0 %v3984
        %4021 = vmatpush1.msra.mxu0 %v3983
        %4022 = vmatprep.subr.mxu0 %v3982
        %4023 = vmatpush1.msra.mxu0 %v3981
        %4024 = vmatprep.subr.mxu0 %v3980
        %4025 = vmatpush1.msra.mxu0 %v3979
        %4026 = vmatprep.subr.mxu0 %v3978
        %4027 = vmatpush1.msra.mxu0 %v3977
        %4028 = vmatprep.subr.mxu0 %v3976
        %4029 = vmatpush1.msra.mxu0 %v3975
        %4030 = vmatprep.subr.mxu0 0.0
        %4031 = vmatpush2.msra.mxu0 0.0
        %4032 = vmatprep.subr.mxu0 0.0
        %4033 = vmatpush2.msra.mxu0 0.0
        %4034 = vmatprep.subr.mxu0 0.0
        %4035 = vmatpush2.msra.mxu0 0.0
        %4036 = vmatprep.subr.mxu0 0.0
        %4037 = vmatpush2.msra.mxu0 0.0
        %4038 = vmatprep.subr.mxu0 0.0
        %4039 = vmatpush2.msra.mxu0 0.0
        %4040 = vmatprep.subr.mxu0 0.0
        %4041 = vmatpush2.msra.mxu0 0.0
        %4042 = vmatprep.subr.mxu0 0.0
        %4043 = vmatpush2.msra.mxu0 0.0
        %4044 = vmatprep.subr.mxu0 0.0
        %4045 = vmatpush2.msra.mxu0 0.0
        %4046 = vmatprep.subr.mxu0 0.0
        %4047 = vmatpush2.msra.mxu0 0.0
        %4048 = vmatprep.subr.mxu0 0.0
        %4049 = vmatpush2.msra.mxu0 0.0
        %4050 = vmatprep.subr.mxu0 0.0
        %4051 = vmatpush2.msra.mxu0 0.0
        %4052 = vmatprep.subr.mxu0 0.0
        %4053 = vmatpush2.msra.mxu0 0.0
        %4054 = vmatprep.subr.mxu0 0.0
        %4055 = vmatpush2.msra.mxu0 0.0
        %4056 = vmatprep.subr.mxu0 0.0
        %4057 = vmatpush2.msra.mxu0 0.0
        %4058 = vmatprep.subr.mxu0 0.0
        %4059 = vmatpush2.msra.mxu0 0.0
        %4060 = vmatprep.subr.mxu0 0.0
        %4061 = vmatpush2.msra.mxu0 0.0
        %4062 = vmatprep.mubr.f32.mxu0 0.0
        %4063 = vmatmul.mubr.f32.gmra.mxu0 %v3990
        %v4064 = vpop.f32.mrf.mxu0
        %v4065 = vadd.f32 0.0, %v4064
        %v4066 = vpop.f32.mrf.mxu0
        %v4067 = vadd.f32 0.0, %v4066
        %4068 = vdwg.mxu0
        %v4069 = vadd.f32 %v3948, %v4065
        %v4070 = vadd.f32 %v3949, %v4067
        %v4071 = vmax.f32 %v4069, 0.0
        %v4072 = vmax.f32 %v4070, 0.0
        %v4073 = vld [vmem:[%s11] sm:$0xff]
        %v4074 = vld [vmem:[%s11 + $0x8] sm:$0xff]
        %v4075 = vld [vmem:[%s11 + $0x10] sm:$0xff]
        %v4076 = vld [vmem:[%s11 + $0x18] sm:$0xff]
        %v4077 = vld [vmem:[%s11 + $0x20] sm:$0xff]
        %v4078 = vld [vmem:[%s11 + $0x28] sm:$0xff]
        %v4079 = vld [vmem:[%s11 + $0x30] sm:$0xff]
        %v4080 = vld [vmem:[%s11 + $0x38] sm:$0xff]
        %v4081 = vld [vmem:[%s11 + $0x40] sm:$0xff]
        %v4082 = vld [vmem:[%s11 + $0x48] sm:$0xff]
        %v4083 = vld [vmem:[%s11 + $0x50] sm:$0xff]
        %v4084 = vld [vmem:[%s11 + $0x58] sm:$0xff]
        %v4085 = vld [vmem:[%s11 + $0x60] sm:$0xff]
        %v4086 = vld [vmem:[%s11 + $0x68] sm:$0xff]
        %v4087 = vld [vmem:[%s11 + $0x70] sm:$0xff]
        %v4088 = vld [vmem:[%s11 + $0x78] sm:$0xff]
        %v4089 = vld [vmem:[%s11 + $0x80] sm:$0xff]
        %v4090 = vld [vmem:[%s11 + $0x88] sm:$0xff]
        %v4091 = vld [vmem:[%s11 + $0x90] sm:$0xff]
        %v4092 = vld [vmem:[%s11 + $0x98] sm:$0xff]
        %v4093 = vld [vmem:[%s11 + $0xa0] sm:$0xff]
        %v4094 = vld [vmem:[%s11 + $0xa8] sm:$0xff]
        %v4095 = vld [vmem:[%s11 + $0xb0] sm:$0xff]
        %v4096 = vld [vmem:[%s11 + $0xb8] sm:$0xff]
        %v4097 = vld [vmem:[%s11 + $0xc0] sm:$0xff]
        %v4098 = vld [vmem:[%s12] sm:$0x1]
        %v4100 = vlaneseq
        %v4101 = vshrl.u32 %v4100, 7
        %v4102 = vsub.s32 0, %v4101
        %v4103 = vrot.slane %v4098, %v4102
        %vm4105 = vcmask 588800
        %v4107 = vsel %vm4105, %v4072, 0
        %4109 = vmatprep.subr.mxu0 0.0
        %4110 = vmatpush1.msra.mxu0 %v4088
        %4111 = vmatprep.subr.mxu0 0.0
        %4112 = vmatpush1.msra.mxu0 %v4087
        %4113 = vmatprep.subr.mxu0 0.0
        %4114 = vmatpush1.msra.mxu0 %v4086
        %4115 = vmatprep.subr.mxu0 0.0
        %4116 = vmatpush1.msra.mxu0 %v4085
        %4117 = vmatprep.subr.mxu0 0.0
        %4118 = vmatpush1.msra.mxu0 %v4084
        %4119 = vmatprep.subr.mxu0 0.0
        %4120 = vmatpush1.msra.mxu0 %v4083
        %4121 = vmatprep.subr.mxu0 0.0
        %4122 = vmatpush1.msra.mxu0 %v4082
        %4123 = vmatprep.subr.mxu0 0.0
        %4124 = vmatpush1.msra.mxu0 %v4081
        %4125 = vmatprep.subr.mxu0 0.0
        %4126 = vmatpush1.msra.mxu0 %v4080
        %4127 = vmatprep.subr.mxu0 0.0
        %4128 = vmatpush1.msra.mxu0 %v4079
        %4129 = vmatprep.subr.mxu0 0.0
        %4130 = vmatpush1.msra.mxu0 %v4078
        %4131 = vmatprep.subr.mxu0 0.0
        %4132 = vmatpush1.msra.mxu0 %v4077
        %4133 = vmatprep.subr.mxu0 0.0
        %4134 = vmatpush1.msra.mxu0 %v4076
        %4135 = vmatprep.subr.mxu0 0.0
        %4136 = vmatpush1.msra.mxu0 %v4075
        %4137 = vmatprep.subr.mxu0 0.0
        %4138 = vmatpush1.msra.mxu0 %v4074
        %4139 = vmatprep.subr.mxu0 0.0
        %4140 = vmatpush1.msra.mxu0 %v4073
        %4141 = vmatprep.subr.mxu0 0.0
        %4142 = vmatpush2.msra.mxu0 0.0
        %4143 = vmatprep.subr.mxu0 0.0
        %4144 = vmatpush2.msra.mxu0 0.0
        %4145 = vmatprep.subr.mxu0 0.0
        %4146 = vmatpush2.msra.mxu0 0.0
        %4147 = vmatprep.subr.mxu0 0.0
        %4148 = vmatpush2.msra.mxu0 0.0
        %4149 = vmatprep.subr.mxu0 0.0
        %4150 = vmatpush2.msra.mxu0 0.0
        %4151 = vmatprep.subr.mxu0 0.0
        %4152 = vmatpush2.msra.mxu0 0.0
        %4153 = vmatprep.subr.mxu0 0.0
        %4154 = vmatpush2.msra.mxu0 0.0
        %4155 = vmatprep.subr.mxu0 0.0
        %4156 = vmatpush2.msra.mxu0 %v4097
        %4157 = vmatprep.subr.mxu0 0.0
        %4158 = vmatpush2.msra.mxu0 %v4096
        %4159 = vmatprep.subr.mxu0 0.0
        %4160 = vmatpush2.msra.mxu0 %v4095
        %4161 = vmatprep.subr.mxu0 0.0
        %4162 = vmatpush2.msra.mxu0 %v4094
        %4163 = vmatprep.subr.mxu0 0.0
        %4164 = vmatpush2.msra.mxu0 %v4093
        %4165 = vmatprep.subr.mxu0 0.0
        %4166 = vmatpush2.msra.mxu0 %v4092
        %4167 = vmatprep.subr.mxu0 0.0
        %4168 = vmatpush2.msra.mxu0 %v4091
        %4169 = vmatprep.subr.mxu0 0.0
        %4170 = vmatpush2.msra.mxu0 %v4090
        %4171 = vmatprep.subr.mxu0 0.0
        %4172 = vmatpush2.msra.mxu0 %v4089
        %4173 = vmatprep.mubr.f32.mxu0 %v4107
        %4174 = vmatmul.mubr.f32.gmra.mxu0 %v4071
        %v4175 = vpop.f32.mrf.mxu0
        %v4176 = vadd.f32 %v4103, %v4175
        %v4177 = vpop.f32.mrf.mxu0
        %4178 = vdwg.mxu0
        %vm4179 = vcmask 9216
        %4180 = vst.msk [vmem:[%s482] sm:$0x3] %vm4179, %v4176
        %p4181 = scmp.lt.s32.totalorder %s26, 1
        %s4182 = scalar_select %p4181, %s26, 1
        %s4183 = smul.addr %s4182, 2
        %s4184 = scalar_lea.vmem %s13, %s4183
        // Predicated region
        $region113: #{net_forward.1} parent=71 // pred_check
          %p4185 = pneg %p322
        $region114: #{net_forward.1} parent=71 // pred_check_branch
          %4187 = sbr.rel (%p4185) target = $region116
        $region115: #{net_forward.1} parent=71 // pred_region
          _
        $region116: #{net_forward.1} parent=71 // pred_fallthru
          _
      $region72: #{net_forward.1} parent=5 // pred_fallthru
        _
      %p4188 = scmp.le.s32.totalorder 2, %s21
      // Predicated region
      $region117: #{net_forward.1} parent=5 // pred_check
        %p4189 = pneg %p4188
      $region118: #{net_forward.1} parent=5 // pred_check_branch
        %4191 = sbr.rel (%p4189) target = $region120
      $region119: #{net_forward.1} parent=5 // pred_region
        %s4192 = ssub.s32 %s21, 2
        // Predicated region
        $region121: #{net_forward.1} parent=119 // pred_check
          %p4193 = pneg %p328
        $region122: #{net_forward.1} parent=119 // pred_check_branch
          %4195 = sbr.rel (%p4193) target = $region124
        $region123: #{net_forward.1} parent=119 // pred_region
          %p4196 = scmp.lt.s32.totalorder %s27, 1
          %s4197 = scalar_select %p4196, %s27, 1
          %s4198 = smul.addr %s4197, 2
          %s4199 = scalar_lea.vmem %s13, %s4198
        $region124: #{net_forward.1} parent=119 // pred_fallthru
          _
      $region120: #{net_forward.1} parent=5 // pred_fallthru
        _
    $region6: #{net_forward.1} parent=1 // loop_footer
      %s25 = sadd.s32 1, %s21
    $region7: #{net_forward.1} parent=1 // loop_footer_branch
      %20 = sbr.rel target = $region3
    $region8: #{net_forward.1} parent=1 // loop_exit
      _
    %4200 = vsyncpa [#allocation8], 1
    %s4201 = scalar_lea.sflag [#allocation8], 1
    %4202 = vsyncpa %s4201, 1
    %4203 = vsyncpa [#allocation10], 1

</llo_original>
